<compile_context>
chip_gen: v7x
topology: tpu7x:2x2x1
jax: 0.10.0
libtpu: 0.0.40
codegen_flags: <defaults>
</compile_context>

<pallas_src>
import jax
import jax.numpy as jnp
from jax.experimental import pallas as pl
from jax.experimental.pallas import tpu as pltpu

FEAT_PAD = 1024   # backbone output width 1000, zero-padded to a lane multiple
HID = 256         # fc hidden width
OUT_PAD = 128     # final Linear(256, 1) padded to 128 lanes for a dense store


def resnet_fc_kernel(x_ref, wb_ref, w1_ref, b1_ref,
                     gamma_ref, beta_ref, w2_ref, b2_ref, out_ref):
    # ---- backbone stub: [B, Din](bf16) @ [Din, 1024](bf16) -> f32 [B, 1024] ----
    feat = jnp.dot(x_ref[...], wb_ref[...], preferred_element_type=jnp.float32)

    # ---- Linear(1000, 256); bb already folded into b1 in the wrapper ----
    h = jnp.dot(feat.astype(jnp.bfloat16), w1_ref[...],
                preferred_element_type=jnp.float32) + b1_ref[...]

    # ---- LeakyReLU(0.1) in f32 ----
    h = jnp.where(h > 0, h, 0.1 * h)

    # ---- BatchNorm1d(256), training-mode batch stats, single pass ----
    inv_b = 1.0 / h.shape[0]
    s = jnp.sum(h, axis=0, keepdims=True)            # [1, 256]
    ss = jnp.sum(h * h, axis=0, keepdims=True)       # [1, 256]
    mean = s * inv_b
    var = ss * inv_b - mean * mean                   # biased variance
    hn = (h - mean) * jax.lax.rsqrt(var + 1e-5)
    hb = hn * gamma_ref[...] + beta_ref[...]

    # ---- Linear(256, 1) padded to 128 lanes (cols 1..127 of w2/b2 are zero) ----
    out = jnp.dot(hb, w2_ref[...], preferred_element_type=jnp.float32) + b2_ref[...]
    out_ref[...] = out.astype(out_ref.dtype)


def resnet_forward(x, params):
    B = x.shape[0]
    x_flat = x.reshape(B, -1).astype(jnp.bfloat16)   # matches torch.flatten(x, 1)
    din = x_flat.shape[1]

    vmem = pl.BlockSpec(memory_space=pltpu.MemorySpace.VMEM)
    operands = (
        x_flat,
        params["wb"], params["w1"], params["b1"],
        params["gamma"], params["beta"],
        params["w2"], params["b2"],
    )

    flops = 2 * B * (din * FEAT_PAD + FEAT_PAD * HID + HID * OUT_PAD)
    bytes_accessed = sum(int(o.size) * o.dtype.itemsize for o in operands) \
        + B * OUT_PAD * 4
    cost = pl.CostEstimate(flops=flops, transcendentals=HID,
                           bytes_accessed=bytes_accessed)

    out_pad = pl.pallas_call(
        resnet_fc_kernel,
        out_shape=jax.ShapeDtypeStruct((B, OUT_PAD), jnp.float32),
        in_specs=[vmem] * len(operands),
        out_specs=vmem,
        cost_estimate=cost,
    )(*operands)
    return out_pad[:, :1]                            # [B, 1]


def init_params(key, in_features):
    ks = jax.random.split(key, 6)
    scale = 0.02
    # f32 master weights (same distributions as the original version)
    wb = scale * jax.random.normal(ks[0], (in_features, 1000), jnp.float32)
    bb = scale * jax.random.normal(ks[1], (1, 1000), jnp.float32)
    w1 = scale * jax.random.normal(ks[2], (1000, 256), jnp.float32)
    b1 = scale * jax.random.normal(ks[3], (1, 256), jnp.float32)
    gamma = jnp.ones((1, 256), jnp.float32)          # BatchNorm1d weight init
    beta = jnp.zeros((1, 256), jnp.float32)          # BatchNorm1d bias init
    w2 = scale * jax.random.normal(ks[4], (256, 1), jnp.float32)
    b2 = scale * jax.random.normal(ks[5], (1, 1), jnp.float32)

    # Fold constant backbone bias: bb only shifts the Linear(1000,256) input.
    b1_folded = b1 + bb @ w1                         # [1, 256], f32

    # Pad the 1000-wide feature axis to 1024 (zero columns/rows contribute 0).
    wb_p = jnp.pad(wb, ((0, 0), (0, FEAT_PAD - 1000)))
    w1_p = jnp.pad(w1, ((0, FEAT_PAD - 1000), (0, 0)))

    # Pad final Linear(256,1) to 128 output lanes for a lane-dense store.
    w2_p = jnp.pad(w2, ((0, 0), (0, OUT_PAD - 1)))
    b2_p = jnp.pad(b2, ((0, 0), (0, OUT_PAD - 1)))

    return {
        "wb": wb_p.astype(jnp.bfloat16),   # bf16 weights; f32 MXU accumulation
        "w1": w1_p.astype(jnp.bfloat16),
        "b1": b1_folded,                   # f32
        "gamma": gamma,
        "beta": beta,
        "w2": w2_p,                        # tiny; kept f32 for the final projection
        "b2": b2_p,
    }


if __name__ == "__main__":
    key = jax.random.PRNGKey(0)
    kx, kp = jax.random.split(key)

    B, C, H, W = 2, 3, 16, 16
    x = jax.random.normal(kx, (B, C, H, W), jnp.float32)   # NCHW, like PyTorch
    params = init_params(kp, C * H * W)

    out = resnet_forward(x, params)
    jax.block_until_ready(out)
    assert out.shape == (B, 1) and out.dtype == jnp.float32
    print("KERNEL_OK")
</pallas_src>

<mosaic_0001>
module attributes {stable_mosaic.version = 11 : i64} {
  func.func @resnet_fc_kernel(%arg0: memref<2x768xbf16, #tpu.memory_space<vmem>>, %arg1: memref<768x1024xbf16, #tpu.memory_space<vmem>>, %arg2: memref<1024x256xbf16, #tpu.memory_space<vmem>>, %arg3: memref<1x256xf32, #tpu.memory_space<vmem>>, %arg4: memref<1x256xf32, #tpu.memory_space<vmem>>, %arg5: memref<1x256xf32, #tpu.memory_space<vmem>>, %arg6: memref<256x128xf32, #tpu.memory_space<vmem>>, %arg7: memref<1x128xf32, #tpu.memory_space<vmem>>, %arg8: memref<2x128xf32, #tpu.memory_space<vmem>>) attributes {dimension_semantics = [], scalar_prefetch = 0 : i64, scratch_operands = 0 : i64, tpu.core_type = #tpu.core_type<tc>} {
    %c0 = arith.constant 0 : index
    %c0_0 = arith.constant 0 : index
    %0 = vector.load %arg0[%c0, %c0_0] : memref<2x768xbf16, #tpu.memory_space<vmem>>, vector<2x768xbf16>
    %c0_1 = arith.constant 0 : index
    %c0_2 = arith.constant 0 : index
    %1 = vector.load %arg1[%c0_1, %c0_2] : memref<768x1024xbf16, #tpu.memory_space<vmem>>, vector<768x1024xbf16>
    %cst = arith.constant dense<0.000000e+00> : vector<2x1024xf32>
    %2 = tpu.matmul %0, %1, %cst {dimension_numbers = #tpu.dot_dimension_numbers<[1], [0], [0], [1], [0, 0, 1, 1], [], []>} : vector<2x768xbf16>, vector<768x1024xbf16>, vector<2x1024xf32> -> vector<2x1024xf32>
    %3 = arith.truncf %2 : vector<2x1024xf32> to vector<2x1024xbf16>
    %c0_3 = arith.constant 0 : index
    %c0_4 = arith.constant 0 : index
    %4 = vector.load %arg2[%c0_3, %c0_4] : memref<1024x256xbf16, #tpu.memory_space<vmem>>, vector<1024x256xbf16>
    %cst_5 = arith.constant dense<0.000000e+00> : vector<2x256xf32>
    %5 = tpu.matmul %3, %4, %cst_5 {dimension_numbers = #tpu.dot_dimension_numbers<[1], [0], [0], [1], [0, 0, 1, 1], [], []>} : vector<2x1024xbf16>, vector<1024x256xbf16>, vector<2x256xf32> -> vector<2x256xf32>
    %c0_6 = arith.constant 0 : index
    %c0_7 = arith.constant 0 : index
    %6 = vector.load %arg3[%c0_6, %c0_7] : memref<1x256xf32, #tpu.memory_space<vmem>>, vector<1x256xf32>
    %7 = vector.broadcast %6 : vector<1x256xf32> to vector<2x256xf32>
    %8 = arith.addf %5, %7 : vector<2x256xf32>
    %cst_8 = arith.constant 0.000000e+00 : f32
    %9 = vector.broadcast %cst_8 : f32 to vector<2x256xf32>
    %10 = arith.cmpf ogt, %8, %9 : vector<2x256xf32>
    %cst_9 = arith.constant 1.000000e-01 : f32
    %11 = vector.broadcast %cst_9 : f32 to vector<2x256xf32>
    %12 = arith.mulf %11, %8 : vector<2x256xf32>
    %13 = arith.select %10, %8, %12 : vector<2x256xi1>, vector<2x256xf32>
    %cst_10 = arith.constant dense<0.000000e+00> : vector<256xf32>
    %14 = vector.multi_reduction <add>, %13, %cst_10 [0] : vector<2x256xf32> to vector<256xf32>
    %15 = vector.shape_cast %14 : vector<256xf32> to vector<1x256xf32>
    %16 = arith.mulf %13, %13 : vector<2x256xf32>
    %cst_11 = arith.constant dense<0.000000e+00> : vector<256xf32>
    %17 = vector.multi_reduction <add>, %16, %cst_11 [0] : vector<2x256xf32> to vector<256xf32>
    %18 = vector.shape_cast %17 : vector<256xf32> to vector<1x256xf32>
    %cst_12 = arith.constant 5.000000e-01 : f32
    %19 = vector.broadcast %cst_12 : f32 to vector<1x256xf32>
    %20 = arith.mulf %15, %19 : vector<1x256xf32>
    %cst_13 = arith.constant 5.000000e-01 : f32
    %21 = vector.broadcast %cst_13 : f32 to vector<1x256xf32>
    %22 = arith.mulf %18, %21 : vector<1x256xf32>
    %23 = arith.mulf %20, %20 : vector<1x256xf32>
    %24 = arith.subf %22, %23 : vector<1x256xf32>
    %25 = vector.broadcast %20 : vector<1x256xf32> to vector<2x256xf32>
    %26 = arith.subf %13, %25 : vector<2x256xf32>
    %cst_14 = arith.constant 9.99999974E-6 : f32
    %27 = vector.broadcast %cst_14 : f32 to vector<1x256xf32>
    %28 = arith.addf %24, %27 : vector<1x256xf32>
    %29 = math.rsqrt %28 : vector<1x256xf32>
    %30 = vector.broadcast %29 : vector<1x256xf32> to vector<2x256xf32>
    %31 = arith.mulf %26, %30 : vector<2x256xf32>
    %c0_15 = arith.constant 0 : index
    %c0_16 = arith.constant 0 : index
    %32 = vector.load %arg4[%c0_15, %c0_16] : memref<1x256xf32, #tpu.memory_space<vmem>>, vector<1x256xf32>
    %33 = vector.broadcast %32 : vector<1x256xf32> to vector<2x256xf32>
    %34 = arith.mulf %31, %33 : vector<2x256xf32>
    %c0_17 = arith.constant 0 : index
    %c0_18 = arith.constant 0 : index
    %35 = vector.load %arg5[%c0_17, %c0_18] : memref<1x256xf32, #tpu.memory_space<vmem>>, vector<1x256xf32>
    %36 = vector.broadcast %35 : vector<1x256xf32> to vector<2x256xf32>
    %37 = arith.addf %34, %36 : vector<2x256xf32>
    %c0_19 = arith.constant 0 : index
    %c0_20 = arith.constant 0 : index
    %38 = vector.load %arg6[%c0_19, %c0_20] : memref<256x128xf32, #tpu.memory_space<vmem>>, vector<256x128xf32>
    %cst_21 = arith.constant dense<0.000000e+00> : vector<2x128xf32>
    %39 = tpu.matmul %37, %38, %cst_21 {dimension_numbers = #tpu.dot_dimension_numbers<[1], [0], [0], [1], [0, 0, 1, 1], [], []>} : vector<2x256xf32>, vector<256x128xf32>, vector<2x128xf32> -> vector<2x128xf32>
    %c0_22 = arith.constant 0 : index
    %c0_23 = arith.constant 0 : index
    %40 = vector.load %arg7[%c0_22, %c0_23] : memref<1x128xf32, #tpu.memory_space<vmem>>, vector<1x128xf32>
    %41 = vector.broadcast %40 : vector<1x128xf32> to vector<2x128xf32>
    %42 = arith.addf %39, %41 : vector<2x128xf32>
    %c0_24 = arith.constant 0 : index
    %c0_25 = arith.constant 0 : index
    %43 = vector.load %arg8[%c0_24, %c0_25] : memref<2x128xf32, #tpu.memory_space<vmem>>, vector<2x128xf32>
    tpu.vector_store %arg8[%c0_24, %c0_25], %42 {strides = array<i32>} : memref<2x128xf32, #tpu.memory_space<vmem>>, vector<2x128xf32>,
    return
  }
}

</mosaic_0001>

<llo_original>
// kernel: tpu_custom_call.1
$region0: #{tpu_custom_call.1}
  #allocation0 [shape = 'u32[]', space=smem, size = 0x4, offset = 0x4, fixed_abs, tag = 'smem constant byte address 0x4 - core index']
  #allocation1 [shape = 'u32[144,128]{1,0:T(1,128)}', space=vmem, size = 0x12000, scoped, tag = 'internal scratch']
  %s0 = inlined_call_operand.hbm [shape: bf16[2,768], index: 0, kind: input, shape index: {}]
  %s1 = inlined_call_operand.hbm [shape: bf16[768,1024], index: 1, kind: input, shape index: {}]
  %s2 = inlined_call_operand.hbm [shape: bf16[1024,256], index: 2, kind: input, shape index: {}]
  %s3 = inlined_call_operand.hbm [shape: f32[1,256], index: 3, kind: input, shape index: {}]
  %s4 = inlined_call_operand.hbm [shape: f32[1,256], index: 4, kind: input, shape index: {}]
  %s5 = inlined_call_operand.hbm [shape: f32[1,256], index: 5, kind: input, shape index: {}]
  %s6 = inlined_call_operand.hbm [shape: f32[256,128], index: 6, kind: input, shape index: {}]
  %s7 = inlined_call_operand.hbm [shape: f32[1,128], index: 7, kind: input, shape index: {}]
  %s8 = inlined_call_operand.hbm [shape: f32[2,128], index: 8, kind: output, shape index: {}]
  %s9 = sld [smem:[#allocation0]]
  $region74: #{tpu_custom_call.1} parent=0
    _
  %s11 = ssub.s32 1, %s9
  %s12 = scalar_select 0, %s11, %s9
  $region1: #{tpu_custom_call.1} parent=0
    #allocation2 [shape = 'u8[3072]{0}', space=vmem, size = 0xc00, scoped, tag = 'input window, operand 0, single buffered']
    #allocation3 [shape = 's32[1]{0}', space=sflag, size = 0x4, scoped, tag = 'scoped memory for tpu_custom_call.1']
    #allocation4 [shape = 's32[1]{0}', space=sflag, size = 0x4, scoped, tag = 'scoped memory for tpu_custom_call.1']
    #allocation5 [shape = 'u8[1572864]{0}', space=vmem, size = 0x180000, scoped, tag = 'input window, operand 1, single buffered']
    #allocation6 [shape = 's32[1]{0}', space=sflag, size = 0x4, scoped, tag = 'scoped memory for tpu_custom_call.1']
    #allocation7 [shape = 'u8[524288]{0}', space=vmem, size = 0x80000, scoped, tag = 'input window, operand 2, single buffered']
    #allocation8 [shape = 'u8[1024]{0}', space=vmem, size = 0x400, scoped, tag = 'input window, operand 3, single buffered']
    #allocation9 [shape = 's32[1]{0}', space=sflag, size = 0x4, scoped, tag = 'scoped memory for tpu_custom_call.1']
    #allocation10 [shape = 'u8[1024]{0}', space=vmem, size = 0x400, scoped, tag = 'input window, operand 4, single buffered']
    #allocation11 [shape = 'u8[1024]{0}', space=vmem, size = 0x400, scoped, tag = 'input window, operand 5, single buffered']
    #allocation12 [shape = 's32[1]{0}', space=sflag, size = 0x4, scoped, tag = 'scoped memory for tpu_custom_call.1']
    #allocation13 [shape = 'u8[131072]{0}', space=vmem, size = 0x20000, scoped, tag = 'input window, operand 6, single buffered']
    #allocation14 [shape = 'u8[512]{0}', space=vmem, size = 0x400, scoped, tag = 'input window, operand 7, single buffered']
    #allocation15 [shape = 's32[1]{0}', space=sflag, size = 0x4, scoped, tag = 'scoped memory for tpu_custom_call.1']
    #allocation16 [shape = 'u8[1024]{0}', space=vmem, size = 0x400, scoped, tag = 'output window, operand 0, single buffered']
    %13 = vsyncpa [#allocation3], 0
    %14 = vsyncpa [#allocation6], 0
    %15 = vsyncpa [#allocation9], 0
    %16 = vsyncpa [#allocation12], 0
    %17 = vsyncpa [#allocation15], 0
    %18 = vsyncpa [#allocation4], 0
    // Predicated region
    $region2: #{tpu_custom_call.1} parent=1 // pred_check
      _
    $region3: #{tpu_custom_call.1} parent=1 // pred_check_branch
      %20 = sbr.rel (0) target = $region5
    $region4: #{tpu_custom_call.1} parent=1 // pred_region
      %s22 = ssub.s32 96, 96
      %23 = vsyncadd [#allocation3], %s22
      %s25 = sshll.u32 [#allocation2], 4
      %s26 = int_to_ptr.vmem [resolvable:$true] %s25
      %28 = dma.hbm_to_vmem [thread:$0]  %s0, 96, %s26, [#allocation3]
    $region5: #{tpu_custom_call.1} parent=1 // pred_fallthru
      _
    // Predicated region
    $region6: #{tpu_custom_call.1} parent=1 // pred_check
      _
    $region7: #{tpu_custom_call.1} parent=1 // pred_check_branch
      %30 = sbr.rel (0) target = $region9
    $region8: #{tpu_custom_call.1} parent=1 // pred_region
      %s32 = ssub.s32 49152, 49152
      %33 = vsyncadd [#allocation6], %s32
      %s34 = sshll.u32 [#allocation5], 4
      %s35 = int_to_ptr.vmem [resolvable:$true] %s34
      %40 = dma.hbm_to_vmem [thread:$0]  %s1, 49152, %s35, [#allocation6], 512, 512, 32
    $region9: #{tpu_custom_call.1} parent=1 // pred_fallthru
      _
    // Predicated region
    $region10: #{tpu_custom_call.1} parent=1 // pred_check
      _
    $region11: #{tpu_custom_call.1} parent=1 // pred_check_branch
      %42 = sbr.rel (0) target = $region13
    $region12: #{tpu_custom_call.1} parent=1 // pred_region
      %s44 = ssub.s32 16384, 16384
      %45 = vsyncadd [#allocation6], %s44
      %s46 = sshll.u32 [#allocation7], 4
      %s47 = int_to_ptr.vmem [resolvable:$true] %s46
      %52 = dma.hbm_to_vmem [thread:$0]  %s2, 16384, %s47, [#allocation6], 128, 128, 8
    $region13: #{tpu_custom_call.1} parent=1 // pred_fallthru
      _
    // Predicated region
    $region14: #{tpu_custom_call.1} parent=1 // pred_check
      _
    $region15: #{tpu_custom_call.1} parent=1 // pred_check_branch
      %54 = sbr.rel (0) target = $region17
    $region16: #{tpu_custom_call.1} parent=1 // pred_region
      %s56 = ssub.s32 32, 32
      %57 = vsyncadd [#allocation9], %s56
      %s59 = sshll.u32 [#allocation8], 4
      %s60 = int_to_ptr.vmem [resolvable:$true] %s59
      %62 = dma.hbm_to_vmem [thread:$0]  %s3, 32, %s60, [#allocation9]
    $region17: #{tpu_custom_call.1} parent=1 // pred_fallthru
      _
    // Predicated region
    $region18: #{tpu_custom_call.1} parent=1 // pred_check
      _
    $region19: #{tpu_custom_call.1} parent=1 // pred_check_branch
      %64 = sbr.rel (0) target = $region21
    $region20: #{tpu_custom_call.1} parent=1 // pred_region
      %s66 = ssub.s32 32, 32
      %67 = vsyncadd [#allocation9], %s66
      %s69 = sshll.u32 [#allocation10], 4
      %s70 = int_to_ptr.vmem [resolvable:$true] %s69
      %72 = dma.hbm_to_vmem [thread:$0]  %s4, 32, %s70, [#allocation9]
    $region21: #{tpu_custom_call.1} parent=1 // pred_fallthru
      _
    // Predicated region
    $region22: #{tpu_custom_call.1} parent=1 // pred_check
      _
    $region23: #{tpu_custom_call.1} parent=1 // pred_check_branch
      %74 = sbr.rel (0) target = $region25
    $region24: #{tpu_custom_call.1} parent=1 // pred_region
      %s76 = ssub.s32 32, 32
      %77 = vsyncadd [#allocation12], %s76
      %s79 = sshll.u32 [#allocation11], 4
      %s80 = int_to_ptr.vmem [resolvable:$true] %s79
      %82 = dma.hbm_to_vmem [thread:$0]  %s5, 32, %s80, [#allocation12]
    $region25: #{tpu_custom_call.1} parent=1 // pred_fallthru
      _
    // Predicated region
    $region26: #{tpu_custom_call.1} parent=1 // pred_check
      _
    $region27: #{tpu_custom_call.1} parent=1 // pred_check_branch
      %84 = sbr.rel (0) target = $region29
    $region28: #{tpu_custom_call.1} parent=1 // pred_region
      %s86 = ssub.s32 4096, 4096
      %87 = vsyncadd [#allocation12], %s86
      %s88 = sshll.u32 [#allocation13], 4
      %s89 = int_to_ptr.vmem [resolvable:$true] %s88
      %94 = dma.hbm_to_vmem [thread:$0]  %s6, 4096, %s89, [#allocation12], 128, 128, 8
    $region29: #{tpu_custom_call.1} parent=1 // pred_fallthru
      _
    // Predicated region
    $region30: #{tpu_custom_call.1} parent=1 // pred_check
      _
    $region31: #{tpu_custom_call.1} parent=1 // pred_check_branch
      %96 = sbr.rel (0) target = $region33
    $region32: #{tpu_custom_call.1} parent=1 // pred_region
      %s98 = ssub.s32 16, 16
      %99 = vsyncadd [#allocation15], %s98
      %s101 = sshll.u32 [#allocation14], 4
      %s102 = int_to_ptr.vmem [resolvable:$true] %s101
      %104 = dma.hbm_to_vmem [thread:$0]  %s7, 16, %s102, [#allocation15]
    $region33: #{tpu_custom_call.1} parent=1 // pred_fallthru
      _
    // Predicated region
    $region34: #{tpu_custom_call.1} parent=1 // pred_check
      _
    $region35: #{tpu_custom_call.1} parent=1 // pred_check_branch
      %106 = sbr.rel (0) target = $region37
    $region36: #{tpu_custom_call.1} parent=1 // pred_region
      %107 = dma.done [#allocation3], 96
    $region37: #{tpu_custom_call.1} parent=1 // pred_fallthru
      _
    // Predicated region
    $region38: #{tpu_custom_call.1} parent=1 // pred_check
      _
    $region39: #{tpu_custom_call.1} parent=1 // pred_check_branch
      %109 = sbr.rel (0) target = $region41
    $region40: #{tpu_custom_call.1} parent=1 // pred_region
      %110 = dma.done [#allocation6], 49152
    $region41: #{tpu_custom_call.1} parent=1 // pred_fallthru
      _
    // Predicated region
    $region42: #{tpu_custom_call.1} parent=1 // pred_check
      _
    $region43: #{tpu_custom_call.1} parent=1 // pred_check_branch
      %112 = sbr.rel (0) target = $region45
    $region44: #{tpu_custom_call.1} parent=1 // pred_region
      %113 = dma.done [#allocation6], 16384
    $region45: #{tpu_custom_call.1} parent=1 // pred_fallthru
      _
    // Predicated region
    $region46: #{tpu_custom_call.1} parent=1 // pred_check
      _
    $region47: #{tpu_custom_call.1} parent=1 // pred_check_branch
      %115 = sbr.rel (0) target = $region49
    $region48: #{tpu_custom_call.1} parent=1 // pred_region
      %116 = dma.done [#allocation9], 32
    $region49: #{tpu_custom_call.1} parent=1 // pred_fallthru
      _
    // Predicated region
    $region50: #{tpu_custom_call.1} parent=1 // pred_check
      _
    $region51: #{tpu_custom_call.1} parent=1 // pred_check_branch
      %118 = sbr.rel (0) target = $region53
    $region52: #{tpu_custom_call.1} parent=1 // pred_region
      %119 = dma.done [#allocation9], 32
    $region53: #{tpu_custom_call.1} parent=1 // pred_fallthru
      _
    // Predicated region
    $region54: #{tpu_custom_call.1} parent=1 // pred_check
      _
    $region55: #{tpu_custom_call.1} parent=1 // pred_check_branch
      %121 = sbr.rel (0) target = $region57
    $region56: #{tpu_custom_call.1} parent=1 // pred_region
      %122 = dma.done [#allocation12], 32
    $region57: #{tpu_custom_call.1} parent=1 // pred_fallthru
      _
    // Predicated region
    $region58: #{tpu_custom_call.1} parent=1 // pred_check
      _
    $region59: #{tpu_custom_call.1} parent=1 // pred_check_branch
      %124 = sbr.rel (0) target = $region61
    $region60: #{tpu_custom_call.1} parent=1 // pred_region
      %125 = dma.done [#allocation12], 4096
    $region61: #{tpu_custom_call.1} parent=1 // pred_fallthru
      _
    // Predicated region
    $region62: #{tpu_custom_call.1} parent=1 // pred_check
      _
    $region63: #{tpu_custom_call.1} parent=1 // pred_check_branch
      %127 = sbr.rel (0) target = $region65
    $region64: #{tpu_custom_call.1} parent=1 // pred_region
      %128 = dma.done [#allocation15], 16
    $region65: #{tpu_custom_call.1} parent=1 // pred_fallthru
      _
    %v129 = vld [vmem:[#allocation2] sm:$0x3f]
    %v130 = vld [vmem:[#allocation5] sm:$0xff]
    %v131 = vld [vmem:[#allocation5 + $0x8] sm:$0xff]
    %v132 = vld [vmem:[#allocation5 + $0x10] sm:$0xff]
    %v133 = vld [vmem:[#allocation5 + $0x18] sm:$0xff]
    %v134 = vld [vmem:[#allocation5 + $0x20] sm:$0xff]
    %v135 = vld [vmem:[#allocation5 + $0x28] sm:$0xff]
    %v136 = vld [vmem:[#allocation5 + $0x30] sm:$0xff]
    %v137 = vld [vmem:[#allocation5 + $0x38] sm:$0xff]
    %v138 = vld [vmem:[#allocation5 + $0x40] sm:$0xff]
    %v139 = vld [vmem:[#allocation5 + $0x48] sm:$0xff]
    %v140 = vld [vmem:[#allocation5 + $0x50] sm:$0xff]
    %v141 = vld [vmem:[#allocation5 + $0x58] sm:$0xff]
    %v142 = vld [vmem:[#allocation5 + $0x60] sm:$0xff]
    %v143 = vld [vmem:[#allocation5 + $0x68] sm:$0xff]
    %v144 = vld [vmem:[#allocation5 + $0x70] sm:$0xff]
    %v145 = vld [vmem:[#allocation5 + $0x78] sm:$0xff]
    %v146 = vld [vmem:[#allocation5 + $0x80] sm:$0xff]
    %v147 = vld [vmem:[#allocation5 + $0x88] sm:$0xff]
    %v148 = vld [vmem:[#allocation5 + $0x90] sm:$0xff]
    %v149 = vld [vmem:[#allocation5 + $0x98] sm:$0xff]
    %v150 = vld [vmem:[#allocation5 + $0xa0] sm:$0xff]
    %v151 = vld [vmem:[#allocation5 + $0xa8] sm:$0xff]
    %v152 = vld [vmem:[#allocation5 + $0xb0] sm:$0xff]
    %v153 = vld [vmem:[#allocation5 + $0xb8] sm:$0xff]
    %v154 = vld [vmem:[#allocation5 + $0xc0] sm:$0xff]
    %v155 = vld [vmem:[#allocation5 + $0xc8] sm:$0xff]
    %v156 = vld [vmem:[#allocation5 + $0xd0] sm:$0xff]
    %v157 = vld [vmem:[#allocation5 + $0xd8] sm:$0xff]
    %v158 = vld [vmem:[#allocation5 + $0xe0] sm:$0xff]
    %v159 = vld [vmem:[#allocation5 + $0xe8] sm:$0xff]
    %v160 = vld [vmem:[#allocation5 + $0xf0] sm:$0xff]
    %v161 = vld [vmem:[#allocation5 + $0xf8] sm:$0xff]
    %v162 = vld [vmem:[#allocation5 + $0x100] sm:$0xff]
    %v163 = vld [vmem:[#allocation5 + $0x108] sm:$0xff]
    %v164 = vld [vmem:[#allocation5 + $0x110] sm:$0xff]
    %v165 = vld [vmem:[#allocation5 + $0x118] sm:$0xff]
    %v166 = vld [vmem:[#allocation5 + $0x120] sm:$0xff]
    %v167 = vld [vmem:[#allocation5 + $0x128] sm:$0xff]
    %v168 = vld [vmem:[#allocation5 + $0x130] sm:$0xff]
    %v169 = vld [vmem:[#allocation5 + $0x138] sm:$0xff]
    %v170 = vld [vmem:[#allocation5 + $0x140] sm:$0xff]
    %v171 = vld [vmem:[#allocation5 + $0x148] sm:$0xff]
    %v172 = vld [vmem:[#allocation5 + $0x150] sm:$0xff]
    %v173 = vld [vmem:[#allocation5 + $0x158] sm:$0xff]
    %v174 = vld [vmem:[#allocation5 + $0x160] sm:$0xff]
    %v175 = vld [vmem:[#allocation5 + $0x168] sm:$0xff]
    %v176 = vld [vmem:[#allocation5 + $0x170] sm:$0xff]
    %v177 = vld [vmem:[#allocation5 + $0x178] sm:$0xff]
    %v178 = vld [vmem:[#allocation5 + $0x180] sm:$0xff]
    %v179 = vld [vmem:[#allocation5 + $0x188] sm:$0xff]
    %v180 = vld [vmem:[#allocation5 + $0x190] sm:$0xff]
    %v181 = vld [vmem:[#allocation5 + $0x198] sm:$0xff]
    %v182 = vld [vmem:[#allocation5 + $0x1a0] sm:$0xff]
    %v183 = vld [vmem:[#allocation5 + $0x1a8] sm:$0xff]
    %v184 = vld [vmem:[#allocation5 + $0x1b0] sm:$0xff]
    %v185 = vld [vmem:[#allocation5 + $0x1b8] sm:$0xff]
    %v186 = vld [vmem:[#allocation5 + $0x1c0] sm:$0xff]
    %v187 = vld [vmem:[#allocation5 + $0x1c8] sm:$0xff]
    %v188 = vld [vmem:[#allocation5 + $0x1d0] sm:$0xff]
    %v189 = vld [vmem:[#allocation5 + $0x1d8] sm:$0xff]
    %v190 = vld [vmem:[#allocation5 + $0x1e0] sm:$0xff]
    %v191 = vld [vmem:[#allocation5 + $0x1e8] sm:$0xff]
    %v192 = vld [vmem:[#allocation5 + $0x1f0] sm:$0xff]
    %v193 = vld [vmem:[#allocation5 + $0x1f8] sm:$0xff]
    %v194 = vld [vmem:[#allocation5 + $0x200] sm:$0xff]
    %v195 = vld [vmem:[#allocation5 + $0x208] sm:$0xff]
    %v196 = vld [vmem:[#allocation5 + $0x210] sm:$0xff]
    %v197 = vld [vmem:[#allocation5 + $0x218] sm:$0xff]
    %v198 = vld [vmem:[#allocation5 + $0x220] sm:$0xff]
    %v199 = vld [vmem:[#allocation5 + $0x228] sm:$0xff]
    %v200 = vld [vmem:[#allocation5 + $0x230] sm:$0xff]
    %v201 = vld [vmem:[#allocation5 + $0x238] sm:$0xff]
    %v202 = vld [vmem:[#allocation5 + $0x240] sm:$0xff]
    %v203 = vld [vmem:[#allocation5 + $0x248] sm:$0xff]
    %v204 = vld [vmem:[#allocation5 + $0x250] sm:$0xff]
    %v205 = vld [vmem:[#allocation5 + $0x258] sm:$0xff]
    %v206 = vld [vmem:[#allocation5 + $0x260] sm:$0xff]
    %v207 = vld [vmem:[#allocation5 + $0x268] sm:$0xff]
    %v208 = vld [vmem:[#allocation5 + $0x270] sm:$0xff]
    %v209 = vld [vmem:[#allocation5 + $0x278] sm:$0xff]
    %v210 = vld [vmem:[#allocation5 + $0x280] sm:$0xff]
    %v211 = vld [vmem:[#allocation5 + $0x288] sm:$0xff]
    %v212 = vld [vmem:[#allocation5 + $0x290] sm:$0xff]
    %v213 = vld [vmem:[#allocation5 + $0x298] sm:$0xff]
    %v214 = vld [vmem:[#allocation5 + $0x2a0] sm:$0xff]
    %v215 = vld [vmem:[#allocation5 + $0x2a8] sm:$0xff]
    %v216 = vld [vmem:[#allocation5 + $0x2b0] sm:$0xff]
    %v217 = vld [vmem:[#allocation5 + $0x2b8] sm:$0xff]
    %v218 = vld [vmem:[#allocation5 + $0x2c0] sm:$0xff]
    %v219 = vld [vmem:[#allocation5 + $0x2c8] sm:$0xff]
    %v220 = vld [vmem:[#allocation5 + $0x2d0] sm:$0xff]
    %v221 = vld [vmem:[#allocation5 + $0x2d8] sm:$0xff]
    %v222 = vld [vmem:[#allocation5 + $0x2e0] sm:$0xff]
    %v223 = vld [vmem:[#allocation5 + $0x2e8] sm:$0xff]
    %v224 = vld [vmem:[#allocation5 + $0x2f0] sm:$0xff]
    %v225 = vld [vmem:[#allocation5 + $0x2f8] sm:$0xff]
    %v226 = vld [vmem:[#allocation5 + $0x300] sm:$0xff]
    %v227 = vld [vmem:[#allocation5 + $0x308] sm:$0xff]
    %v228 = vld [vmem:[#allocation5 + $0x310] sm:$0xff]
    %v229 = vld [vmem:[#allocation5 + $0x318] sm:$0xff]
    %v230 = vld [vmem:[#allocation5 + $0x320] sm:$0xff]
    %v231 = vld [vmem:[#allocation5 + $0x328] sm:$0xff]
    %v232 = vld [vmem:[#allocation5 + $0x330] sm:$0xff]
    %v233 = vld [vmem:[#allocation5 + $0x338] sm:$0xff]
    %v234 = vld [vmem:[#allocation5 + $0x340] sm:$0xff]
    %v235 = vld [vmem:[#allocation5 + $0x348] sm:$0xff]
    %v236 = vld [vmem:[#allocation5 + $0x350] sm:$0xff]
    %v237 = vld [vmem:[#allocation5 + $0x358] sm:$0xff]
    %v238 = vld [vmem:[#allocation5 + $0x360] sm:$0xff]
    %v239 = vld [vmem:[#allocation5 + $0x368] sm:$0xff]
    %v240 = vld [vmem:[#allocation5 + $0x370] sm:$0xff]
    %v241 = vld [vmem:[#allocation5 + $0x378] sm:$0xff]
    %v242 = vld [vmem:[#allocation5 + $0x380] sm:$0xff]
    %v243 = vld [vmem:[#allocation5 + $0x388] sm:$0xff]
    %v244 = vld [vmem:[#allocation5 + $0x390] sm:$0xff]
    %v245 = vld [vmem:[#allocation5 + $0x398] sm:$0xff]
    %v246 = vld [vmem:[#allocation5 + $0x3a0] sm:$0xff]
    %v247 = vld [vmem:[#allocation5 + $0x3a8] sm:$0xff]
    %v248 = vld [vmem:[#allocation5 + $0x3b0] sm:$0xff]
    %v249 = vld [vmem:[#allocation5 + $0x3b8] sm:$0xff]
    %v250 = vld [vmem:[#allocation5 + $0x3c0] sm:$0xff]
    %v251 = vld [vmem:[#allocation5 + $0x3c8] sm:$0xff]
    %v252 = vld [vmem:[#allocation5 + $0x3d0] sm:$0xff]
    %v253 = vld [vmem:[#allocation5 + $0x3d8] sm:$0xff]
    %v254 = vld [vmem:[#allocation5 + $0x3e0] sm:$0xff]
    %v255 = vld [vmem:[#allocation5 + $0x3e8] sm:$0xff]
    %v256 = vld [vmem:[#allocation5 + $0x3f0] sm:$0xff]
    %v257 = vld [vmem:[#allocation5 + $0x3f8] sm:$0xff]
    %v258 = vld [vmem:[#allocation5 + $0x400] sm:$0xff]
    %v259 = vld [vmem:[#allocation5 + $0x408] sm:$0xff]
    %v260 = vld [vmem:[#allocation5 + $0x410] sm:$0xff]
    %v261 = vld [vmem:[#allocation5 + $0x418] sm:$0xff]
    %v262 = vld [vmem:[#allocation5 + $0x420] sm:$0xff]
    %v263 = vld [vmem:[#allocation5 + $0x428] sm:$0xff]
    %v264 = vld [vmem:[#allocation5 + $0x430] sm:$0xff]
    %v265 = vld [vmem:[#allocation5 + $0x438] sm:$0xff]
    %v266 = vld [vmem:[#allocation5 + $0x440] sm:$0xff]
    %v267 = vld [vmem:[#allocation5 + $0x448] sm:$0xff]
    %v268 = vld [vmem:[#allocation5 + $0x450] sm:$0xff]
    %v269 = vld [vmem:[#allocation5 + $0x458] sm:$0xff]
    %v270 = vld [vmem:[#allocation5 + $0x460] sm:$0xff]
    %v271 = vld [vmem:[#allocation5 + $0x468] sm:$0xff]
    %v272 = vld [vmem:[#allocation5 + $0x470] sm:$0xff]
    %v273 = vld [vmem:[#allocation5 + $0x478] sm:$0xff]
    %v274 = vld [vmem:[#allocation5 + $0x480] sm:$0xff]
    %v275 = vld [vmem:[#allocation5 + $0x488] sm:$0xff]
    %v276 = vld [vmem:[#allocation5 + $0x490] sm:$0xff]
    %v277 = vld [vmem:[#allocation5 + $0x498] sm:$0xff]
    %v278 = vld [vmem:[#allocation5 + $0x4a0] sm:$0xff]
    %v279 = vld [vmem:[#allocation5 + $0x4a8] sm:$0xff]
    %v280 = vld [vmem:[#allocation5 + $0x4b0] sm:$0xff]
    %v281 = vld [vmem:[#allocation5 + $0x4b8] sm:$0xff]
    %v282 = vld [vmem:[#allocation5 + $0x4c0] sm:$0xff]
    %v283 = vld [vmem:[#allocation5 + $0x4c8] sm:$0xff]
    %v284 = vld [vmem:[#allocation5 + $0x4d0] sm:$0xff]
    %v285 = vld [vmem:[#allocation5 + $0x4d8] sm:$0xff]
    %v286 = vld [vmem:[#allocation5 + $0x4e0] sm:$0xff]
    %v287 = vld [vmem:[#allocation5 + $0x4e8] sm:$0xff]
    %v288 = vld [vmem:[#allocation5 + $0x4f0] sm:$0xff]
    %v289 = vld [vmem:[#allocation5 + $0x4f8] sm:$0xff]
    %v290 = vld [vmem:[#allocation5 + $0x500] sm:$0xff]
    %v291 = vld [vmem:[#allocation5 + $0x508] sm:$0xff]
    %v292 = vld [vmem:[#allocation5 + $0x510] sm:$0xff]
    %v293 = vld [vmem:[#allocation5 + $0x518] sm:$0xff]
    %v294 = vld [vmem:[#allocation5 + $0x520] sm:$0xff]
    %v295 = vld [vmem:[#allocation5 + $0x528] sm:$0xff]
    %v296 = vld [vmem:[#allocation5 + $0x530] sm:$0xff]
    %v297 = vld [vmem:[#allocation5 + $0x538] sm:$0xff]
    %v298 = vld [vmem:[#allocation5 + $0x540] sm:$0xff]
    %v299 = vld [vmem:[#allocation5 + $0x548] sm:$0xff]
    %v300 = vld [vmem:[#allocation5 + $0x550] sm:$0xff]
    %v301 = vld [vmem:[#allocation5 + $0x558] sm:$0xff]
    %v302 = vld [vmem:[#allocation5 + $0x560] sm:$0xff]
    %v303 = vld [vmem:[#allocation5 + $0x568] sm:$0xff]
    %v304 = vld [vmem:[#allocation5 + $0x570] sm:$0xff]
    %v305 = vld [vmem:[#allocation5 + $0x578] sm:$0xff]
    %v306 = vld [vmem:[#allocation5 + $0x580] sm:$0xff]
    %v307 = vld [vmem:[#allocation5 + $0x588] sm:$0xff]
    %v308 = vld [vmem:[#allocation5 + $0x590] sm:$0xff]
    %v309 = vld [vmem:[#allocation5 + $0x598] sm:$0xff]
    %v310 = vld [vmem:[#allocation5 + $0x5a0] sm:$0xff]
    %v311 = vld [vmem:[#allocation5 + $0x5a8] sm:$0xff]
    %v312 = vld [vmem:[#allocation5 + $0x5b0] sm:$0xff]
    %v313 = vld [vmem:[#allocation5 + $0x5b8] sm:$0xff]
    %v314 = vld [vmem:[#allocation5 + $0x5c0] sm:$0xff]
    %v315 = vld [vmem:[#allocation5 + $0x5c8] sm:$0xff]
    %v316 = vld [vmem:[#allocation5 + $0x5d0] sm:$0xff]
    %v317 = vld [vmem:[#allocation5 + $0x5d8] sm:$0xff]
    %v318 = vld [vmem:[#allocation5 + $0x5e0] sm:$0xff]
    %v319 = vld [vmem:[#allocation5 + $0x5e8] sm:$0xff]
    %v320 = vld [vmem:[#allocation5 + $0x5f0] sm:$0xff]
    %v321 = vld [vmem:[#allocation5 + $0x5f8] sm:$0xff]
    %v322 = vld [vmem:[#allocation5 + $0x600] sm:$0xff]
    %v323 = vld [vmem:[#allocation5 + $0x608] sm:$0xff]
    %v324 = vld [vmem:[#allocation5 + $0x610] sm:$0xff]
    %v325 = vld [vmem:[#allocation5 + $0x618] sm:$0xff]
    %v326 = vld [vmem:[#allocation5 + $0x620] sm:$0xff]
    %v327 = vld [vmem:[#allocation5 + $0x628] sm:$0xff]
    %v328 = vld [vmem:[#allocation5 + $0x630] sm:$0xff]
    %v329 = vld [vmem:[#allocation5 + $0x638] sm:$0xff]
    %v330 = vld [vmem:[#allocation5 + $0x640] sm:$0xff]
    %v331 = vld [vmem:[#allocation5 + $0x648] sm:$0xff]
    %v332 = vld [vmem:[#allocation5 + $0x650] sm:$0xff]
    %v333 = vld [vmem:[#allocation5 + $0x658] sm:$0xff]
    %v334 = vld [vmem:[#allocation5 + $0x660] sm:$0xff]
    %v335 = vld [vmem:[#allocation5 + $0x668] sm:$0xff]
    %v336 = vld [vmem:[#allocation5 + $0x670] sm:$0xff]
    %v337 = vld [vmem:[#allocation5 + $0x678] sm:$0xff]
    %v338 = vld [vmem:[#allocation5 + $0x680] sm:$0xff]
    %v339 = vld [vmem:[#allocation5 + $0x688] sm:$0xff]
    %v340 = vld [vmem:[#allocation5 + $0x690] sm:$0xff]
    %v341 = vld [vmem:[#allocation5 + $0x698] sm:$0xff]
    %v342 = vld [vmem:[#allocation5 + $0x6a0] sm:$0xff]
    %v343 = vld [vmem:[#allocation5 + $0x6a8] sm:$0xff]
    %v344 = vld [vmem:[#allocation5 + $0x6b0] sm:$0xff]
    %v345 = vld [vmem:[#allocation5 + $0x6b8] sm:$0xff]
    %v346 = vld [vmem:[#allocation5 + $0x6c0] sm:$0xff]
    %v347 = vld [vmem:[#allocation5 + $0x6c8] sm:$0xff]
    %v348 = vld [vmem:[#allocation5 + $0x6d0] sm:$0xff]
    %v349 = vld [vmem:[#allocation5 + $0x6d8] sm:$0xff]
    %v350 = vld [vmem:[#allocation5 + $0x6e0] sm:$0xff]
    %v351 = vld [vmem:[#allocation5 + $0x6e8] sm:$0xff]
    %v352 = vld [vmem:[#allocation5 + $0x6f0] sm:$0xff]
    %v353 = vld [vmem:[#allocation5 + $0x6f8] sm:$0xff]
    %v354 = vld [vmem:[#allocation5 + $0x700] sm:$0xff]
    %v355 = vld [vmem:[#allocation5 + $0x708] sm:$0xff]
    %v356 = vld [vmem:[#allocation5 + $0x710] sm:$0xff]
    %v357 = vld [vmem:[#allocation5 + $0x718] sm:$0xff]
    %v358 = vld [vmem:[#allocation5 + $0x720] sm:$0xff]
    %v359 = vld [vmem:[#allocation5 + $0x728] sm:$0xff]
    %v360 = vld [vmem:[#allocation5 + $0x730] sm:$0xff]
    %v361 = vld [vmem:[#allocation5 + $0x738] sm:$0xff]
    %v362 = vld [vmem:[#allocation5 + $0x740] sm:$0xff]
    %v363 = vld [vmem:[#allocation5 + $0x748] sm:$0xff]
    %v364 = vld [vmem:[#allocation5 + $0x750] sm:$0xff]
    %v365 = vld [vmem:[#allocation5 + $0x758] sm:$0xff]
    %v366 = vld [vmem:[#allocation5 + $0x760] sm:$0xff]
    %v367 = vld [vmem:[#allocation5 + $0x768] sm:$0xff]
    %v368 = vld [vmem:[#allocation5 + $0x770] sm:$0xff]
    %v369 = vld [vmem:[#allocation5 + $0x778] sm:$0xff]
    %v370 = vld [vmem:[#allocation5 + $0x780] sm:$0xff]
    %v371 = vld [vmem:[#allocation5 + $0x788] sm:$0xff]
    %v372 = vld [vmem:[#allocation5 + $0x790] sm:$0xff]
    %v373 = vld [vmem:[#allocation5 + $0x798] sm:$0xff]
    %v374 = vld [vmem:[#allocation5 + $0x7a0] sm:$0xff]
    %v375 = vld [vmem:[#allocation5 + $0x7a8] sm:$0xff]
    %v376 = vld [vmem:[#allocation5 + $0x7b0] sm:$0xff]
    %v377 = vld [vmem:[#allocation5 + $0x7b8] sm:$0xff]
    %v378 = vld [vmem:[#allocation5 + $0x7c0] sm:$0xff]
    %v379 = vld [vmem:[#allocation5 + $0x7c8] sm:$0xff]
    %v380 = vld [vmem:[#allocation5 + $0x7d0] sm:$0xff]
    %v381 = vld [vmem:[#allocation5 + $0x7d8] sm:$0xff]
    %v382 = vld [vmem:[#allocation5 + $0x7e0] sm:$0xff]
    %v383 = vld [vmem:[#allocation5 + $0x7e8] sm:$0xff]
    %v384 = vld [vmem:[#allocation5 + $0x7f0] sm:$0xff]
    %v385 = vld [vmem:[#allocation5 + $0x7f8] sm:$0xff]
    %v386 = vld [vmem:[#allocation5 + $0x800] sm:$0xff]
    %v387 = vld [vmem:[#allocation5 + $0x808] sm:$0xff]
    %v388 = vld [vmem:[#allocation5 + $0x810] sm:$0xff]
    %v389 = vld [vmem:[#allocation5 + $0x818] sm:$0xff]
    %v390 = vld [vmem:[#allocation5 + $0x820] sm:$0xff]
    %v391 = vld [vmem:[#allocation5 + $0x828] sm:$0xff]
    %v392 = vld [vmem:[#allocation5 + $0x830] sm:$0xff]
    %v393 = vld [vmem:[#allocation5 + $0x838] sm:$0xff]
    %v394 = vld [vmem:[#allocation5 + $0x840] sm:$0xff]
    %v395 = vld [vmem:[#allocation5 + $0x848] sm:$0xff]
    %v396 = vld [vmem:[#allocation5 + $0x850] sm:$0xff]
    %v397 = vld [vmem:[#allocation5 + $0x858] sm:$0xff]
    %v398 = vld [vmem:[#allocation5 + $0x860] sm:$0xff]
    %v399 = vld [vmem:[#allocation5 + $0x868] sm:$0xff]
    %v400 = vld [vmem:[#allocation5 + $0x870] sm:$0xff]
    %v401 = vld [vmem:[#allocation5 + $0x878] sm:$0xff]
    %v402 = vld [vmem:[#allocation5 + $0x880] sm:$0xff]
    %v403 = vld [vmem:[#allocation5 + $0x888] sm:$0xff]
    %v404 = vld [vmem:[#allocation5 + $0x890] sm:$0xff]
    %v405 = vld [vmem:[#allocation5 + $0x898] sm:$0xff]
    %v406 = vld [vmem:[#allocation5 + $0x8a0] sm:$0xff]
    %v407 = vld [vmem:[#allocation5 + $0x8a8] sm:$0xff]
    %v408 = vld [vmem:[#allocation5 + $0x8b0] sm:$0xff]
    %v409 = vld [vmem:[#allocation5 + $0x8b8] sm:$0xff]
    %v410 = vld [vmem:[#allocation5 + $0x8c0] sm:$0xff]
    %v411 = vld [vmem:[#allocation5 + $0x8c8] sm:$0xff]
    %v412 = vld [vmem:[#allocation5 + $0x8d0] sm:$0xff]
    %v413 = vld [vmem:[#allocation5 + $0x8d8] sm:$0xff]
    %v414 = vld [vmem:[#allocation5 + $0x8e0] sm:$0xff]
    %v415 = vld [vmem:[#allocation5 + $0x8e8] sm:$0xff]
    %v416 = vld [vmem:[#allocation5 + $0x8f0] sm:$0xff]
    %v417 = vld [vmem:[#allocation5 + $0x8f8] sm:$0xff]
    %v418 = vld [vmem:[#allocation5 + $0x900] sm:$0xff]
    %v419 = vld [vmem:[#allocation5 + $0x908] sm:$0xff]
    %v420 = vld [vmem:[#allocation5 + $0x910] sm:$0xff]
    %v421 = vld [vmem:[#allocation5 + $0x918] sm:$0xff]
    %v422 = vld [vmem:[#allocation5 + $0x920] sm:$0xff]
    %v423 = vld [vmem:[#allocation5 + $0x928] sm:$0xff]
    %v424 = vld [vmem:[#allocation5 + $0x930] sm:$0xff]
    %v425 = vld [vmem:[#allocation5 + $0x938] sm:$0xff]
    %v426 = vld [vmem:[#allocation5 + $0x940] sm:$0xff]
    %v427 = vld [vmem:[#allocation5 + $0x948] sm:$0xff]
    %v428 = vld [vmem:[#allocation5 + $0x950] sm:$0xff]
    %v429 = vld [vmem:[#allocation5 + $0x958] sm:$0xff]
    %v430 = vld [vmem:[#allocation5 + $0x960] sm:$0xff]
    %v431 = vld [vmem:[#allocation5 + $0x968] sm:$0xff]
    %v432 = vld [vmem:[#allocation5 + $0x970] sm:$0xff]
    %v433 = vld [vmem:[#allocation5 + $0x978] sm:$0xff]
    %v434 = vld [vmem:[#allocation5 + $0x980] sm:$0xff]
    %v435 = vld [vmem:[#allocation5 + $0x988] sm:$0xff]
    %v436 = vld [vmem:[#allocation5 + $0x990] sm:$0xff]
    %v437 = vld [vmem:[#allocation5 + $0x998] sm:$0xff]
    %v438 = vld [vmem:[#allocation5 + $0x9a0] sm:$0xff]
    %v439 = vld [vmem:[#allocation5 + $0x9a8] sm:$0xff]
    %v440 = vld [vmem:[#allocation5 + $0x9b0] sm:$0xff]
    %v441 = vld [vmem:[#allocation5 + $0x9b8] sm:$0xff]
    %v442 = vld [vmem:[#allocation5 + $0x9c0] sm:$0xff]
    %v443 = vld [vmem:[#allocation5 + $0x9c8] sm:$0xff]
    %v444 = vld [vmem:[#allocation5 + $0x9d0] sm:$0xff]
    %v445 = vld [vmem:[#allocation5 + $0x9d8] sm:$0xff]
    %v446 = vld [vmem:[#allocation5 + $0x9e0] sm:$0xff]
    %v447 = vld [vmem:[#allocation5 + $0x9e8] sm:$0xff]
    %v448 = vld [vmem:[#allocation5 + $0x9f0] sm:$0xff]
    %v449 = vld [vmem:[#allocation5 + $0x9f8] sm:$0xff]
    %v450 = vld [vmem:[#allocation5 + $0xa00] sm:$0xff]
    %v451 = vld [vmem:[#allocation5 + $0xa08] sm:$0xff]
    %v452 = vld [vmem:[#allocation5 + $0xa10] sm:$0xff]
    %v453 = vld [vmem:[#allocation5 + $0xa18] sm:$0xff]
    %v454 = vld [vmem:[#allocation5 + $0xa20] sm:$0xff]
    %v455 = vld [vmem:[#allocation5 + $0xa28] sm:$0xff]
    %v456 = vld [vmem:[#allocation5 + $0xa30] sm:$0xff]
    %v457 = vld [vmem:[#allocation5 + $0xa38] sm:$0xff]
    %v458 = vld [vmem:[#allocation5 + $0xa40] sm:$0xff]
    %v459 = vld [vmem:[#allocation5 + $0xa48] sm:$0xff]
    %v460 = vld [vmem:[#allocation5 + $0xa50] sm:$0xff]
    %v461 = vld [vmem:[#allocation5 + $0xa58] sm:$0xff]
    %v462 = vld [vmem:[#allocation5 + $0xa60] sm:$0xff]
    %v463 = vld [vmem:[#allocation5 + $0xa68] sm:$0xff]
    %v464 = vld [vmem:[#allocation5 + $0xa70] sm:$0xff]
    %v465 = vld [vmem:[#allocation5 + $0xa78] sm:$0xff]
    %v466 = vld [vmem:[#allocation5 + $0xa80] sm:$0xff]
    %v467 = vld [vmem:[#allocation5 + $0xa88] sm:$0xff]
    %v468 = vld [vmem:[#allocation5 + $0xa90] sm:$0xff]
    %v469 = vld [vmem:[#allocation5 + $0xa98] sm:$0xff]
    %v470 = vld [vmem:[#allocation5 + $0xaa0] sm:$0xff]
    %v471 = vld [vmem:[#allocation5 + $0xaa8] sm:$0xff]
    %v472 = vld [vmem:[#allocation5 + $0xab0] sm:$0xff]
    %v473 = vld [vmem:[#allocation5 + $0xab8] sm:$0xff]
    %v474 = vld [vmem:[#allocation5 + $0xac0] sm:$0xff]
    %v475 = vld [vmem:[#allocation5 + $0xac8] sm:$0xff]
    %v476 = vld [vmem:[#allocation5 + $0xad0] sm:$0xff]
    %v477 = vld [vmem:[#allocation5 + $0xad8] sm:$0xff]
    %v478 = vld [vmem:[#allocation5 + $0xae0] sm:$0xff]
    %v479 = vld [vmem:[#allocation5 + $0xae8] sm:$0xff]
    %v480 = vld [vmem:[#allocation5 + $0xaf0] sm:$0xff]
    %v481 = vld [vmem:[#allocation5 + $0xaf8] sm:$0xff]
    %v482 = vld [vmem:[#allocation5 + $0xb00] sm:$0xff]
    %v483 = vld [vmem:[#allocation5 + $0xb08] sm:$0xff]
    %v484 = vld [vmem:[#allocation5 + $0xb10] sm:$0xff]
    %v485 = vld [vmem:[#allocation5 + $0xb18] sm:$0xff]
    %v486 = vld [vmem:[#allocation5 + $0xb20] sm:$0xff]
    %v487 = vld [vmem:[#allocation5 + $0xb28] sm:$0xff]
    %v488 = vld [vmem:[#allocation5 + $0xb30] sm:$0xff]
    %v489 = vld [vmem:[#allocation5 + $0xb38] sm:$0xff]
    %v490 = vld [vmem:[#allocation5 + $0xb40] sm:$0xff]
    %v491 = vld [vmem:[#allocation5 + $0xb48] sm:$0xff]
    %v492 = vld [vmem:[#allocation5 + $0xb50] sm:$0xff]
    %v493 = vld [vmem:[#allocation5 + $0xb58] sm:$0xff]
    %v494 = vld [vmem:[#allocation5 + $0xb60] sm:$0xff]
    %v495 = vld [vmem:[#allocation5 + $0xb68] sm:$0xff]
    %v496 = vld [vmem:[#allocation5 + $0xb70] sm:$0xff]
    %v497 = vld [vmem:[#allocation5 + $0xb78] sm:$0xff]
    %v498 = vld [vmem:[#allocation5 + $0xb80] sm:$0xff]
    %v499 = vld [vmem:[#allocation5 + $0xb88] sm:$0xff]
    %v500 = vld [vmem:[#allocation5 + $0xb90] sm:$0xff]
    %v501 = vld [vmem:[#allocation5 + $0xb98] sm:$0xff]
    %v502 = vld [vmem:[#allocation5 + $0xba0] sm:$0xff]
    %v503 = vld [vmem:[#allocation5 + $0xba8] sm:$0xff]
    %v504 = vld [vmem:[#allocation5 + $0xbb0] sm:$0xff]
    %v505 = vld [vmem:[#allocation5 + $0xbb8] sm:$0xff]
    %v506 = vld [vmem:[#allocation5 + $0xbc0] sm:$0xff]
    %v507 = vld [vmem:[#allocation5 + $0xbc8] sm:$0xff]
    %v508 = vld [vmem:[#allocation5 + $0xbd0] sm:$0xff]
    %v509 = vld [vmem:[#allocation5 + $0xbd8] sm:$0xff]
    %v510 = vld [vmem:[#allocation5 + $0xbe0] sm:$0xff]
    %v511 = vld [vmem:[#allocation5 + $0xbe8] sm:$0xff]
    %v512 = vld [vmem:[#allocation5 + $0xbf0] sm:$0xff]
    %v513 = vld [vmem:[#allocation5 + $0xbf8] sm:$0xff]
    %v515 = vcombine.high %v129, %v129
    %v517 = vunpack.c.l.s4 1966171168
    %v518 = vunpack.c.0.s8 %v517
    %v519 = vlaneseq
    %v520 = vshrl.u32 %v519, 7
    %v521 = vsub.s32 %v518, %v520
    %v522 = vrot.slane %v129, %v521
    %v524 = vunpack.c.l.s4 1966171168
    %v525 = vunpack.c.0.s8 %v524
    %v526 = vlaneseq
    %v527 = vshrl.u32 %v526, 7
    %v528 = vsub.s32 %v525, %v527
    %v529 = vrot.slane %v515, %v528
    %v530 = vcombine.high %v522, %v522
    %v531 = vcombine.high %v529, %v529
    %v533 = vunpack.c.l.s4 1966171168
    %v534 = vunpack.c.0.s8 %v533
    %v535 = vlaneseq
    %v536 = vshrl.u32 %v535, 7
    %v537 = vsub.s32 %v534, %v536
    %v538 = vrot.slane %v522, %v537
    %v540 = vunpack.c.l.s4 1966171168
    %v541 = vunpack.c.0.s8 %v540
    %v542 = vlaneseq
    %v543 = vshrl.u32 %v542, 7
    %v544 = vsub.s32 %v541, %v543
    %v545 = vrot.slane %v529, %v544
    %v547 = vunpack.c.l.s4 1966171168
    %v548 = vunpack.c.0.s8 %v547
    %v549 = vlaneseq
    %v550 = vshrl.u32 %v549, 7
    %v551 = vsub.s32 %v548, %v550
    %v552 = vrot.slane %v530, %v551
    %v554 = vunpack.c.l.s4 1966171168
    %v555 = vunpack.c.0.s8 %v554
    %v556 = vlaneseq
    %v557 = vshrl.u32 %v556, 7
    %v558 = vsub.s32 %v555, %v557
    %v559 = vrot.slane %v531, %v558
    %v560 = vcombine.high %v538, %v538
    %v561 = vcombine.high %v552, %v552
    %v952 = vunpack.c.l.b16 %v130
    %v953 = vunpack.c.h.b16 %v130
    %v954 = vunpack.c.l.b16 %v131
    %v955 = vunpack.c.h.b16 %v131
    %v956 = vunpack.c.l.b16 %v132
    %v957 = vunpack.c.h.b16 %v132
    %v958 = vunpack.c.l.b16 %v133
    %v959 = vunpack.c.h.b16 %v133
    %v960 = vunpack.c.l.b16 %v134
    %v961 = vunpack.c.h.b16 %v134
    %v962 = vunpack.c.l.b16 %v135
    %v963 = vunpack.c.h.b16 %v135
    %v964 = vunpack.c.l.b16 %v136
    %v965 = vunpack.c.h.b16 %v136
    %v966 = vunpack.c.l.b16 %v137
    %v967 = vunpack.c.h.b16 %v137
    %v968 = vunpack.c.l.b16 %v138
    %v969 = vunpack.c.h.b16 %v138
    %v970 = vunpack.c.l.b16 %v139
    %v971 = vunpack.c.h.b16 %v139
    %v972 = vunpack.c.l.b16 %v140
    %v973 = vunpack.c.h.b16 %v140
    %v974 = vunpack.c.l.b16 %v141
    %v975 = vunpack.c.h.b16 %v141
    %v976 = vunpack.c.l.b16 %v142
    %v977 = vunpack.c.h.b16 %v142
    %v978 = vunpack.c.l.b16 %v143
    %v979 = vunpack.c.h.b16 %v143
    %v980 = vunpack.c.l.b16 %v144
    %v981 = vunpack.c.h.b16 %v144
    %v982 = vunpack.c.l.b16 %v145
    %v983 = vunpack.c.h.b16 %v145
    %v984 = vunpack.c.l.b16 %v146
    %v985 = vunpack.c.h.b16 %v146
    %v986 = vunpack.c.l.b16 %v147
    %v987 = vunpack.c.h.b16 %v147
    %v988 = vunpack.c.l.b16 %v148
    %v989 = vunpack.c.h.b16 %v148
    %v990 = vunpack.c.l.b16 %v149
    %v991 = vunpack.c.h.b16 %v149
    %v992 = vunpack.c.l.b16 %v150
    %v993 = vunpack.c.h.b16 %v150
    %v994 = vunpack.c.l.b16 %v151
    %v995 = vunpack.c.h.b16 %v151
    %v996 = vunpack.c.l.b16 %v152
    %v997 = vunpack.c.h.b16 %v152
    %v998 = vunpack.c.l.b16 %v153
    %v999 = vunpack.c.h.b16 %v153
    %v1000 = vunpack.c.l.b16 %v154
    %v1001 = vunpack.c.h.b16 %v154
    %v1002 = vunpack.c.l.b16 %v155
    %v1003 = vunpack.c.h.b16 %v155
    %v1004 = vunpack.c.l.b16 %v156
    %v1005 = vunpack.c.h.b16 %v156
    %v1006 = vunpack.c.l.b16 %v157
    %v1007 = vunpack.c.h.b16 %v157
    %v1008 = vunpack.c.l.b16 %v158
    %v1009 = vunpack.c.h.b16 %v158
    %v1010 = vunpack.c.l.b16 %v159
    %v1011 = vunpack.c.h.b16 %v159
    %v1012 = vunpack.c.l.b16 %v160
    %v1013 = vunpack.c.h.b16 %v160
    %v1014 = vunpack.c.l.b16 %v161
    %v1015 = vunpack.c.h.b16 %v161
    %v1016 = vunpack.c.l.b16 %v162
    %v1017 = vunpack.c.h.b16 %v162
    %v1018 = vunpack.c.l.b16 %v163
    %v1019 = vunpack.c.h.b16 %v163
    %v1020 = vunpack.c.l.b16 %v164
    %v1021 = vunpack.c.h.b16 %v164
    %v1022 = vunpack.c.l.b16 %v165
    %v1023 = vunpack.c.h.b16 %v165
    %v1024 = vunpack.c.l.b16 %v166
    %v1025 = vunpack.c.h.b16 %v166
    %v1026 = vunpack.c.l.b16 %v167
    %v1027 = vunpack.c.h.b16 %v167
    %v1028 = vunpack.c.l.b16 %v168
    %v1029 = vunpack.c.h.b16 %v168
    %v1030 = vunpack.c.l.b16 %v169
    %v1031 = vunpack.c.h.b16 %v169
    %v1032 = vunpack.c.l.b16 %v170
    %v1033 = vunpack.c.h.b16 %v170
    %v1034 = vunpack.c.l.b16 %v171
    %v1035 = vunpack.c.h.b16 %v171
    %v1036 = vunpack.c.l.b16 %v172
    %v1037 = vunpack.c.h.b16 %v172
    %v1038 = vunpack.c.l.b16 %v173
    %v1039 = vunpack.c.h.b16 %v173
    %v1040 = vunpack.c.l.b16 %v174
    %v1041 = vunpack.c.h.b16 %v174
    %v1042 = vunpack.c.l.b16 %v175
    %v1043 = vunpack.c.h.b16 %v175
    %v1044 = vunpack.c.l.b16 %v176
    %v1045 = vunpack.c.h.b16 %v176
    %v1046 = vunpack.c.l.b16 %v177
    %v1047 = vunpack.c.h.b16 %v177
    %v1048 = vunpack.c.l.b16 %v178
    %v1049 = vunpack.c.h.b16 %v178
    %v1050 = vunpack.c.l.b16 %v179
    %v1051 = vunpack.c.h.b16 %v179
    %v1052 = vunpack.c.l.b16 %v180
    %v1053 = vunpack.c.h.b16 %v180
    %v1054 = vunpack.c.l.b16 %v181
    %v1055 = vunpack.c.h.b16 %v181
    %v1056 = vunpack.c.l.b16 %v182
    %v1057 = vunpack.c.h.b16 %v182
    %v1058 = vunpack.c.l.b16 %v183
    %v1059 = vunpack.c.h.b16 %v183
    %v1060 = vunpack.c.l.b16 %v184
    %v1061 = vunpack.c.h.b16 %v184
    %v1062 = vunpack.c.l.b16 %v185
    %v1063 = vunpack.c.h.b16 %v185
    %v1064 = vunpack.c.l.b16 %v186
    %v1065 = vunpack.c.h.b16 %v186
    %v1066 = vunpack.c.l.b16 %v187
    %v1067 = vunpack.c.h.b16 %v187
    %v1068 = vunpack.c.l.b16 %v188
    %v1069 = vunpack.c.h.b16 %v188
    %v1070 = vunpack.c.l.b16 %v189
    %v1071 = vunpack.c.h.b16 %v189
    %v1072 = vunpack.c.l.b16 %v190
    %v1073 = vunpack.c.h.b16 %v190
    %v1074 = vunpack.c.l.b16 %v191
    %v1075 = vunpack.c.h.b16 %v191
    %v1076 = vunpack.c.l.b16 %v192
    %v1077 = vunpack.c.h.b16 %v192
    %v1078 = vunpack.c.l.b16 %v193
    %v1079 = vunpack.c.h.b16 %v193
    %v1080 = vunpack.c.l.b16 %v194
    %v1081 = vunpack.c.h.b16 %v194
    %v1082 = vunpack.c.l.b16 %v195
    %v1083 = vunpack.c.h.b16 %v195
    %v1084 = vunpack.c.l.b16 %v196
    %v1085 = vunpack.c.h.b16 %v196
    %v1086 = vunpack.c.l.b16 %v197
    %v1087 = vunpack.c.h.b16 %v197
    %v1088 = vunpack.c.l.b16 %v198
    %v1089 = vunpack.c.h.b16 %v198
    %v1090 = vunpack.c.l.b16 %v199
    %v1091 = vunpack.c.h.b16 %v199
    %v1092 = vunpack.c.l.b16 %v200
    %v1093 = vunpack.c.h.b16 %v200
    %v1094 = vunpack.c.l.b16 %v201
    %v1095 = vunpack.c.h.b16 %v201
    %v1096 = vunpack.c.l.b16 %v202
    %v1097 = vunpack.c.h.b16 %v202
    %v1098 = vunpack.c.l.b16 %v203
    %v1099 = vunpack.c.h.b16 %v203
    %v1100 = vunpack.c.l.b16 %v204
    %v1101 = vunpack.c.h.b16 %v204
    %v1102 = vunpack.c.l.b16 %v205
    %v1103 = vunpack.c.h.b16 %v205
    %v1104 = vunpack.c.l.b16 %v206
    %v1105 = vunpack.c.h.b16 %v206
    %v1106 = vunpack.c.l.b16 %v207
    %v1107 = vunpack.c.h.b16 %v207
    %v1108 = vunpack.c.l.b16 %v208
    %v1109 = vunpack.c.h.b16 %v208
    %v1110 = vunpack.c.l.b16 %v209
    %v1111 = vunpack.c.h.b16 %v209
    %v1112 = vunpack.c.l.b16 %v210
    %v1113 = vunpack.c.h.b16 %v210
    %v1114 = vunpack.c.l.b16 %v211
    %v1115 = vunpack.c.h.b16 %v211
    %v1116 = vunpack.c.l.b16 %v212
    %v1117 = vunpack.c.h.b16 %v212
    %v1118 = vunpack.c.l.b16 %v213
    %v1119 = vunpack.c.h.b16 %v213
    %v1120 = vunpack.c.l.b16 %v214
    %v1121 = vunpack.c.h.b16 %v214
    %v1122 = vunpack.c.l.b16 %v215
    %v1123 = vunpack.c.h.b16 %v215
    %v1124 = vunpack.c.l.b16 %v216
    %v1125 = vunpack.c.h.b16 %v216
    %v1126 = vunpack.c.l.b16 %v217
    %v1127 = vunpack.c.h.b16 %v217
    %v1128 = vunpack.c.l.b16 %v218
    %v1129 = vunpack.c.h.b16 %v218
    %v1130 = vunpack.c.l.b16 %v219
    %v1131 = vunpack.c.h.b16 %v219
    %v1132 = vunpack.c.l.b16 %v220
    %v1133 = vunpack.c.h.b16 %v220
    %v1134 = vunpack.c.l.b16 %v221
    %v1135 = vunpack.c.h.b16 %v221
    %v1136 = vunpack.c.l.b16 %v222
    %v1137 = vunpack.c.h.b16 %v222
    %v1138 = vunpack.c.l.b16 %v223
    %v1139 = vunpack.c.h.b16 %v223
    %v1140 = vunpack.c.l.b16 %v224
    %v1141 = vunpack.c.h.b16 %v224
    %v1142 = vunpack.c.l.b16 %v225
    %v1143 = vunpack.c.h.b16 %v225
    %v1144 = vunpack.c.l.b16 %v226
    %v1145 = vunpack.c.h.b16 %v226
    %v1146 = vunpack.c.l.b16 %v227
    %v1147 = vunpack.c.h.b16 %v227
    %v1148 = vunpack.c.l.b16 %v228
    %v1149 = vunpack.c.h.b16 %v228
    %v1150 = vunpack.c.l.b16 %v229
    %v1151 = vunpack.c.h.b16 %v229
    %v1152 = vunpack.c.l.b16 %v230
    %v1153 = vunpack.c.h.b16 %v230
    %v1154 = vunpack.c.l.b16 %v231
    %v1155 = vunpack.c.h.b16 %v231
    %v1156 = vunpack.c.l.b16 %v232
    %v1157 = vunpack.c.h.b16 %v232
    %v1158 = vunpack.c.l.b16 %v233
    %v1159 = vunpack.c.h.b16 %v233
    %v1160 = vunpack.c.l.b16 %v234
    %v1161 = vunpack.c.h.b16 %v234
    %v1162 = vunpack.c.l.b16 %v235
    %v1163 = vunpack.c.h.b16 %v235
    %v1164 = vunpack.c.l.b16 %v236
    %v1165 = vunpack.c.h.b16 %v236
    %v1166 = vunpack.c.l.b16 %v237
    %v1167 = vunpack.c.h.b16 %v237
    %v1168 = vunpack.c.l.b16 %v238
    %v1169 = vunpack.c.h.b16 %v238
    %v1170 = vunpack.c.l.b16 %v239
    %v1171 = vunpack.c.h.b16 %v239
    %v1172 = vunpack.c.l.b16 %v240
    %v1173 = vunpack.c.h.b16 %v240
    %v1174 = vunpack.c.l.b16 %v241
    %v1175 = vunpack.c.h.b16 %v241
    %v1176 = vunpack.c.l.b16 %v242
    %v1177 = vunpack.c.h.b16 %v242
    %v1178 = vunpack.c.l.b16 %v243
    %v1179 = vunpack.c.h.b16 %v243
    %v1180 = vunpack.c.l.b16 %v244
    %v1181 = vunpack.c.h.b16 %v244
    %v1182 = vunpack.c.l.b16 %v245
    %v1183 = vunpack.c.h.b16 %v245
    %v1184 = vunpack.c.l.b16 %v246
    %v1185 = vunpack.c.h.b16 %v246
    %v1186 = vunpack.c.l.b16 %v247
    %v1187 = vunpack.c.h.b16 %v247
    %v1188 = vunpack.c.l.b16 %v248
    %v1189 = vunpack.c.h.b16 %v248
    %v1190 = vunpack.c.l.b16 %v249
    %v1191 = vunpack.c.h.b16 %v249
    %v1192 = vunpack.c.l.b16 %v250
    %v1193 = vunpack.c.h.b16 %v250
    %v1194 = vunpack.c.l.b16 %v251
    %v1195 = vunpack.c.h.b16 %v251
    %v1196 = vunpack.c.l.b16 %v252
    %v1197 = vunpack.c.h.b16 %v252
    %v1198 = vunpack.c.l.b16 %v253
    %v1199 = vunpack.c.h.b16 %v253
    %v1200 = vunpack.c.l.b16 %v254
    %v1201 = vunpack.c.h.b16 %v254
    %v1202 = vunpack.c.l.b16 %v255
    %v1203 = vunpack.c.h.b16 %v255
    %v1204 = vunpack.c.l.b16 %v256
    %v1205 = vunpack.c.h.b16 %v256
    %v1206 = vunpack.c.l.b16 %v257
    %v1207 = vunpack.c.h.b16 %v257
    %v1208 = vunpack.c.l.b16 %v258
    %v1209 = vunpack.c.h.b16 %v258
    %v1210 = vunpack.c.l.b16 %v259
    %v1211 = vunpack.c.h.b16 %v259
    %v1212 = vunpack.c.l.b16 %v260
    %v1213 = vunpack.c.h.b16 %v260
    %v1214 = vunpack.c.l.b16 %v261
    %v1215 = vunpack.c.h.b16 %v261
    %v1216 = vunpack.c.l.b16 %v262
    %v1217 = vunpack.c.h.b16 %v262
    %v1218 = vunpack.c.l.b16 %v263
    %v1219 = vunpack.c.h.b16 %v263
    %v1220 = vunpack.c.l.b16 %v264
    %v1221 = vunpack.c.h.b16 %v264
    %v1222 = vunpack.c.l.b16 %v265
    %v1223 = vunpack.c.h.b16 %v265
    %v1224 = vunpack.c.l.b16 %v266
    %v1225 = vunpack.c.h.b16 %v266
    %v1226 = vunpack.c.l.b16 %v267
    %v1227 = vunpack.c.h.b16 %v267
    %v1228 = vunpack.c.l.b16 %v268
    %v1229 = vunpack.c.h.b16 %v268
    %v1230 = vunpack.c.l.b16 %v269
    %v1231 = vunpack.c.h.b16 %v269
    %v1232 = vunpack.c.l.b16 %v270
    %v1233 = vunpack.c.h.b16 %v270
    %v1234 = vunpack.c.l.b16 %v271
    %v1235 = vunpack.c.h.b16 %v271
    %v1236 = vunpack.c.l.b16 %v272
    %v1237 = vunpack.c.h.b16 %v272
    %v1238 = vunpack.c.l.b16 %v273
    %v1239 = vunpack.c.h.b16 %v273
    %v1240 = vunpack.c.l.b16 %v274
    %v1241 = vunpack.c.h.b16 %v274
    %v1242 = vunpack.c.l.b16 %v275
    %v1243 = vunpack.c.h.b16 %v275
    %v1244 = vunpack.c.l.b16 %v276
    %v1245 = vunpack.c.h.b16 %v276
    %v1246 = vunpack.c.l.b16 %v277
    %v1247 = vunpack.c.h.b16 %v277
    %v1248 = vunpack.c.l.b16 %v278
    %v1249 = vunpack.c.h.b16 %v278
    %v1250 = vunpack.c.l.b16 %v279
    %v1251 = vunpack.c.h.b16 %v279
    %v1252 = vunpack.c.l.b16 %v280
    %v1253 = vunpack.c.h.b16 %v280
    %v1254 = vunpack.c.l.b16 %v281
    %v1255 = vunpack.c.h.b16 %v281
    %v1256 = vunpack.c.l.b16 %v282
    %v1257 = vunpack.c.h.b16 %v282
    %v1258 = vunpack.c.l.b16 %v283
    %v1259 = vunpack.c.h.b16 %v283
    %v1260 = vunpack.c.l.b16 %v284
    %v1261 = vunpack.c.h.b16 %v284
    %v1262 = vunpack.c.l.b16 %v285
    %v1263 = vunpack.c.h.b16 %v285
    %v1264 = vunpack.c.l.b16 %v286
    %v1265 = vunpack.c.h.b16 %v286
    %v1266 = vunpack.c.l.b16 %v287
    %v1267 = vunpack.c.h.b16 %v287
    %v1268 = vunpack.c.l.b16 %v288
    %v1269 = vunpack.c.h.b16 %v288
    %v1270 = vunpack.c.l.b16 %v289
    %v1271 = vunpack.c.h.b16 %v289
    %v1272 = vunpack.c.l.b16 %v290
    %v1273 = vunpack.c.h.b16 %v290
    %v1274 = vunpack.c.l.b16 %v291
    %v1275 = vunpack.c.h.b16 %v291
    %v1276 = vunpack.c.l.b16 %v292
    %v1277 = vunpack.c.h.b16 %v292
    %v1278 = vunpack.c.l.b16 %v293
    %v1279 = vunpack.c.h.b16 %v293
    %v1280 = vunpack.c.l.b16 %v294
    %v1281 = vunpack.c.h.b16 %v294
    %v1282 = vunpack.c.l.b16 %v295
    %v1283 = vunpack.c.h.b16 %v295
    %v1284 = vunpack.c.l.b16 %v296
    %v1285 = vunpack.c.h.b16 %v296
    %v1286 = vunpack.c.l.b16 %v297
    %v1287 = vunpack.c.h.b16 %v297
    %v1288 = vunpack.c.l.b16 %v298
    %v1289 = vunpack.c.h.b16 %v298
    %v1290 = vunpack.c.l.b16 %v299
    %v1291 = vunpack.c.h.b16 %v299
    %v1292 = vunpack.c.l.b16 %v300
    %v1293 = vunpack.c.h.b16 %v300
    %v1294 = vunpack.c.l.b16 %v301
    %v1295 = vunpack.c.h.b16 %v301
    %v1296 = vunpack.c.l.b16 %v302
    %v1297 = vunpack.c.h.b16 %v302
    %v1298 = vunpack.c.l.b16 %v303
    %v1299 = vunpack.c.h.b16 %v303
    %v1300 = vunpack.c.l.b16 %v304
    %v1301 = vunpack.c.h.b16 %v304
    %v1302 = vunpack.c.l.b16 %v305
    %v1303 = vunpack.c.h.b16 %v305
    %v1304 = vunpack.c.l.b16 %v306
    %v1305 = vunpack.c.h.b16 %v306
    %v1306 = vunpack.c.l.b16 %v307
    %v1307 = vunpack.c.h.b16 %v307
    %v1308 = vunpack.c.l.b16 %v308
    %v1309 = vunpack.c.h.b16 %v308
    %v1310 = vunpack.c.l.b16 %v309
    %v1311 = vunpack.c.h.b16 %v309
    %v1312 = vunpack.c.l.b16 %v310
    %v1313 = vunpack.c.h.b16 %v310
    %v1314 = vunpack.c.l.b16 %v311
    %v1315 = vunpack.c.h.b16 %v311
    %v1316 = vunpack.c.l.b16 %v312
    %v1317 = vunpack.c.h.b16 %v312
    %v1318 = vunpack.c.l.b16 %v313
    %v1319 = vunpack.c.h.b16 %v313
    %v1320 = vunpack.c.l.b16 %v314
    %v1321 = vunpack.c.h.b16 %v314
    %v1322 = vunpack.c.l.b16 %v315
    %v1323 = vunpack.c.h.b16 %v315
    %v1324 = vunpack.c.l.b16 %v316
    %v1325 = vunpack.c.h.b16 %v316
    %v1326 = vunpack.c.l.b16 %v317
    %v1327 = vunpack.c.h.b16 %v317
    %v1328 = vunpack.c.l.b16 %v318
    %v1329 = vunpack.c.h.b16 %v318
    %v1330 = vunpack.c.l.b16 %v319
    %v1331 = vunpack.c.h.b16 %v319
    %v1332 = vunpack.c.l.b16 %v320
    %v1333 = vunpack.c.h.b16 %v320
    %v1334 = vunpack.c.l.b16 %v321
    %v1335 = vunpack.c.h.b16 %v321
    %v1336 = vunpack.c.l.b16 %v322
    %v1337 = vunpack.c.h.b16 %v322
    %v1338 = vunpack.c.l.b16 %v323
    %v1339 = vunpack.c.h.b16 %v323
    %v1340 = vunpack.c.l.b16 %v324
    %v1341 = vunpack.c.h.b16 %v324
    %v1342 = vunpack.c.l.b16 %v325
    %v1343 = vunpack.c.h.b16 %v325
    %v1344 = vunpack.c.l.b16 %v326
    %v1345 = vunpack.c.h.b16 %v326
    %v1346 = vunpack.c.l.b16 %v327
    %v1347 = vunpack.c.h.b16 %v327
    %v1348 = vunpack.c.l.b16 %v328
    %v1349 = vunpack.c.h.b16 %v328
    %v1350 = vunpack.c.l.b16 %v329
    %v1351 = vunpack.c.h.b16 %v329
    %v1352 = vunpack.c.l.b16 %v330
    %v1353 = vunpack.c.h.b16 %v330
    %v1354 = vunpack.c.l.b16 %v331
    %v1355 = vunpack.c.h.b16 %v331
    %v1356 = vunpack.c.l.b16 %v332
    %v1357 = vunpack.c.h.b16 %v332
    %v1358 = vunpack.c.l.b16 %v333
    %v1359 = vunpack.c.h.b16 %v333
    %v1360 = vunpack.c.l.b16 %v334
    %v1361 = vunpack.c.h.b16 %v334
    %v1362 = vunpack.c.l.b16 %v335
    %v1363 = vunpack.c.h.b16 %v335
    %v1364 = vunpack.c.l.b16 %v336
    %v1365 = vunpack.c.h.b16 %v336
    %v1366 = vunpack.c.l.b16 %v337
    %v1367 = vunpack.c.h.b16 %v337
    %v1368 = vunpack.c.l.b16 %v338
    %v1369 = vunpack.c.h.b16 %v338
    %v1370 = vunpack.c.l.b16 %v339
    %v1371 = vunpack.c.h.b16 %v339
    %v1372 = vunpack.c.l.b16 %v340
    %v1373 = vunpack.c.h.b16 %v340
    %v1374 = vunpack.c.l.b16 %v341
    %v1375 = vunpack.c.h.b16 %v341
    %v1376 = vunpack.c.l.b16 %v342
    %v1377 = vunpack.c.h.b16 %v342
    %v1378 = vunpack.c.l.b16 %v343
    %v1379 = vunpack.c.h.b16 %v343
    %v1380 = vunpack.c.l.b16 %v344
    %v1381 = vunpack.c.h.b16 %v344
    %v1382 = vunpack.c.l.b16 %v345
    %v1383 = vunpack.c.h.b16 %v345
    %v1384 = vunpack.c.l.b16 %v346
    %v1385 = vunpack.c.h.b16 %v346
    %v1386 = vunpack.c.l.b16 %v347
    %v1387 = vunpack.c.h.b16 %v347
    %v1388 = vunpack.c.l.b16 %v348
    %v1389 = vunpack.c.h.b16 %v348
    %v1390 = vunpack.c.l.b16 %v349
    %v1391 = vunpack.c.h.b16 %v349
    %v1392 = vunpack.c.l.b16 %v350
    %v1393 = vunpack.c.h.b16 %v350
    %v1394 = vunpack.c.l.b16 %v351
    %v1395 = vunpack.c.h.b16 %v351
    %v1396 = vunpack.c.l.b16 %v352
    %v1397 = vunpack.c.h.b16 %v352
    %v1398 = vunpack.c.l.b16 %v353
    %v1399 = vunpack.c.h.b16 %v353
    %v1400 = vunpack.c.l.b16 %v354
    %v1401 = vunpack.c.h.b16 %v354
    %v1402 = vunpack.c.l.b16 %v355
    %v1403 = vunpack.c.h.b16 %v355
    %v1404 = vunpack.c.l.b16 %v356
    %v1405 = vunpack.c.h.b16 %v356
    %v1406 = vunpack.c.l.b16 %v357
    %v1407 = vunpack.c.h.b16 %v357
    %v1408 = vunpack.c.l.b16 %v358
    %v1409 = vunpack.c.h.b16 %v358
    %v1410 = vunpack.c.l.b16 %v359
    %v1411 = vunpack.c.h.b16 %v359
    %v1412 = vunpack.c.l.b16 %v360
    %v1413 = vunpack.c.h.b16 %v360
    %v1414 = vunpack.c.l.b16 %v361
    %v1415 = vunpack.c.h.b16 %v361
    %v1416 = vunpack.c.l.b16 %v362
    %v1417 = vunpack.c.h.b16 %v362
    %v1418 = vunpack.c.l.b16 %v363
    %v1419 = vunpack.c.h.b16 %v363
    %v1420 = vunpack.c.l.b16 %v364
    %v1421 = vunpack.c.h.b16 %v364
    %v1422 = vunpack.c.l.b16 %v365
    %v1423 = vunpack.c.h.b16 %v365
    %v1424 = vunpack.c.l.b16 %v366
    %v1425 = vunpack.c.h.b16 %v366
    %v1426 = vunpack.c.l.b16 %v367
    %v1427 = vunpack.c.h.b16 %v367
    %v1428 = vunpack.c.l.b16 %v368
    %v1429 = vunpack.c.h.b16 %v368
    %v1430 = vunpack.c.l.b16 %v369
    %v1431 = vunpack.c.h.b16 %v369
    %v1432 = vunpack.c.l.b16 %v370
    %v1433 = vunpack.c.h.b16 %v370
    %v1434 = vunpack.c.l.b16 %v371
    %v1435 = vunpack.c.h.b16 %v371
    %v1436 = vunpack.c.l.b16 %v372
    %v1437 = vunpack.c.h.b16 %v372
    %v1438 = vunpack.c.l.b16 %v373
    %v1439 = vunpack.c.h.b16 %v373
    %v1440 = vunpack.c.l.b16 %v374
    %v1441 = vunpack.c.h.b16 %v374
    %v1442 = vunpack.c.l.b16 %v375
    %v1443 = vunpack.c.h.b16 %v375
    %v1444 = vunpack.c.l.b16 %v376
    %v1445 = vunpack.c.h.b16 %v376
    %v1446 = vunpack.c.l.b16 %v377
    %v1447 = vunpack.c.h.b16 %v377
    %v1448 = vunpack.c.l.b16 %v378
    %v1449 = vunpack.c.h.b16 %v378
    %v1450 = vunpack.c.l.b16 %v379
    %v1451 = vunpack.c.h.b16 %v379
    %v1452 = vunpack.c.l.b16 %v380
    %v1453 = vunpack.c.h.b16 %v380
    %v1454 = vunpack.c.l.b16 %v381
    %v1455 = vunpack.c.h.b16 %v381
    %v1456 = vunpack.c.l.b16 %v382
    %v1457 = vunpack.c.h.b16 %v382
    %v1458 = vunpack.c.l.b16 %v383
    %v1459 = vunpack.c.h.b16 %v383
    %v1460 = vunpack.c.l.b16 %v384
    %v1461 = vunpack.c.h.b16 %v384
    %v1462 = vunpack.c.l.b16 %v385
    %v1463 = vunpack.c.h.b16 %v385
    %v1464 = vunpack.c.l.b16 %v386
    %v1465 = vunpack.c.h.b16 %v386
    %v1466 = vunpack.c.l.b16 %v387
    %v1467 = vunpack.c.h.b16 %v387
    %v1468 = vunpack.c.l.b16 %v388
    %v1469 = vunpack.c.h.b16 %v388
    %v1470 = vunpack.c.l.b16 %v389
    %v1471 = vunpack.c.h.b16 %v389
    %v1472 = vunpack.c.l.b16 %v390
    %v1473 = vunpack.c.h.b16 %v390
    %v1474 = vunpack.c.l.b16 %v391
    %v1475 = vunpack.c.h.b16 %v391
    %v1476 = vunpack.c.l.b16 %v392
    %v1477 = vunpack.c.h.b16 %v392
    %v1478 = vunpack.c.l.b16 %v393
    %v1479 = vunpack.c.h.b16 %v393
    %v1480 = vunpack.c.l.b16 %v394
    %v1481 = vunpack.c.h.b16 %v394
    %v1482 = vunpack.c.l.b16 %v395
    %v1483 = vunpack.c.h.b16 %v395
    %v1484 = vunpack.c.l.b16 %v396
    %v1485 = vunpack.c.h.b16 %v396
    %v1486 = vunpack.c.l.b16 %v397
    %v1487 = vunpack.c.h.b16 %v397
    %v1488 = vunpack.c.l.b16 %v398
    %v1489 = vunpack.c.h.b16 %v398
    %v1490 = vunpack.c.l.b16 %v399
    %v1491 = vunpack.c.h.b16 %v399
    %v1492 = vunpack.c.l.b16 %v400
    %v1493 = vunpack.c.h.b16 %v400
    %v1494 = vunpack.c.l.b16 %v401
    %v1495 = vunpack.c.h.b16 %v401
    %v1496 = vunpack.c.l.b16 %v402
    %v1497 = vunpack.c.h.b16 %v402
    %v1498 = vunpack.c.l.b16 %v403
    %v1499 = vunpack.c.h.b16 %v403
    %v1500 = vunpack.c.l.b16 %v404
    %v1501 = vunpack.c.h.b16 %v404
    %v1502 = vunpack.c.l.b16 %v405
    %v1503 = vunpack.c.h.b16 %v405
    %v1504 = vunpack.c.l.b16 %v406
    %v1505 = vunpack.c.h.b16 %v406
    %v1506 = vunpack.c.l.b16 %v407
    %v1507 = vunpack.c.h.b16 %v407
    %v1508 = vunpack.c.l.b16 %v408
    %v1509 = vunpack.c.h.b16 %v408
    %v1510 = vunpack.c.l.b16 %v409
    %v1511 = vunpack.c.h.b16 %v409
    %v1512 = vunpack.c.l.b16 %v410
    %v1513 = vunpack.c.h.b16 %v410
    %v1514 = vunpack.c.l.b16 %v411
    %v1515 = vunpack.c.h.b16 %v411
    %v1516 = vunpack.c.l.b16 %v412
    %v1517 = vunpack.c.h.b16 %v412
    %v1518 = vunpack.c.l.b16 %v413
    %v1519 = vunpack.c.h.b16 %v413
    %v1520 = vunpack.c.l.b16 %v414
    %v1521 = vunpack.c.h.b16 %v414
    %v1522 = vunpack.c.l.b16 %v415
    %v1523 = vunpack.c.h.b16 %v415
    %v1524 = vunpack.c.l.b16 %v416
    %v1525 = vunpack.c.h.b16 %v416
    %v1526 = vunpack.c.l.b16 %v417
    %v1527 = vunpack.c.h.b16 %v417
    %v1528 = vunpack.c.l.b16 %v418
    %v1529 = vunpack.c.h.b16 %v418
    %v1530 = vunpack.c.l.b16 %v419
    %v1531 = vunpack.c.h.b16 %v419
    %v1532 = vunpack.c.l.b16 %v420
    %v1533 = vunpack.c.h.b16 %v420
    %v1534 = vunpack.c.l.b16 %v421
    %v1535 = vunpack.c.h.b16 %v421
    %v1536 = vunpack.c.l.b16 %v422
    %v1537 = vunpack.c.h.b16 %v422
    %v1538 = vunpack.c.l.b16 %v423
    %v1539 = vunpack.c.h.b16 %v423
    %v1540 = vunpack.c.l.b16 %v424
    %v1541 = vunpack.c.h.b16 %v424
    %v1542 = vunpack.c.l.b16 %v425
    %v1543 = vunpack.c.h.b16 %v425
    %v1544 = vunpack.c.l.b16 %v426
    %v1545 = vunpack.c.h.b16 %v426
    %v1546 = vunpack.c.l.b16 %v427
    %v1547 = vunpack.c.h.b16 %v427
    %v1548 = vunpack.c.l.b16 %v428
    %v1549 = vunpack.c.h.b16 %v428
    %v1550 = vunpack.c.l.b16 %v429
    %v1551 = vunpack.c.h.b16 %v429
    %v1552 = vunpack.c.l.b16 %v430
    %v1553 = vunpack.c.h.b16 %v430
    %v1554 = vunpack.c.l.b16 %v431
    %v1555 = vunpack.c.h.b16 %v431
    %v1556 = vunpack.c.l.b16 %v432
    %v1557 = vunpack.c.h.b16 %v432
    %v1558 = vunpack.c.l.b16 %v433
    %v1559 = vunpack.c.h.b16 %v433
    %v1560 = vunpack.c.l.b16 %v434
    %v1561 = vunpack.c.h.b16 %v434
    %v1562 = vunpack.c.l.b16 %v435
    %v1563 = vunpack.c.h.b16 %v435
    %v1564 = vunpack.c.l.b16 %v436
    %v1565 = vunpack.c.h.b16 %v436
    %v1566 = vunpack.c.l.b16 %v437
    %v1567 = vunpack.c.h.b16 %v437
    %v1568 = vunpack.c.l.b16 %v438
    %v1569 = vunpack.c.h.b16 %v438
    %v1570 = vunpack.c.l.b16 %v439
    %v1571 = vunpack.c.h.b16 %v439
    %v1572 = vunpack.c.l.b16 %v440
    %v1573 = vunpack.c.h.b16 %v440
    %v1574 = vunpack.c.l.b16 %v441
    %v1575 = vunpack.c.h.b16 %v441
    %v1576 = vunpack.c.l.b16 %v442
    %v1577 = vunpack.c.h.b16 %v442
    %v1578 = vunpack.c.l.b16 %v443
    %v1579 = vunpack.c.h.b16 %v443
    %v1580 = vunpack.c.l.b16 %v444
    %v1581 = vunpack.c.h.b16 %v444
    %v1582 = vunpack.c.l.b16 %v445
    %v1583 = vunpack.c.h.b16 %v445
    %v1584 = vunpack.c.l.b16 %v446
    %v1585 = vunpack.c.h.b16 %v446
    %v1586 = vunpack.c.l.b16 %v447
    %v1587 = vunpack.c.h.b16 %v447
    %v1588 = vunpack.c.l.b16 %v448
    %v1589 = vunpack.c.h.b16 %v448
    %v1590 = vunpack.c.l.b16 %v449
    %v1591 = vunpack.c.h.b16 %v449
    %v1592 = vunpack.c.l.b16 %v450
    %v1593 = vunpack.c.h.b16 %v450
    %v1594 = vunpack.c.l.b16 %v451
    %v1595 = vunpack.c.h.b16 %v451
    %v1596 = vunpack.c.l.b16 %v452
    %v1597 = vunpack.c.h.b16 %v452
    %v1598 = vunpack.c.l.b16 %v453
    %v1599 = vunpack.c.h.b16 %v453
    %v1600 = vunpack.c.l.b16 %v454
    %v1601 = vunpack.c.h.b16 %v454
    %v1602 = vunpack.c.l.b16 %v455
    %v1603 = vunpack.c.h.b16 %v455
    %v1604 = vunpack.c.l.b16 %v456
    %v1605 = vunpack.c.h.b16 %v456
    %v1606 = vunpack.c.l.b16 %v457
    %v1607 = vunpack.c.h.b16 %v457
    %v1608 = vunpack.c.l.b16 %v458
    %v1609 = vunpack.c.h.b16 %v458
    %v1610 = vunpack.c.l.b16 %v459
    %v1611 = vunpack.c.h.b16 %v459
    %v1612 = vunpack.c.l.b16 %v460
    %v1613 = vunpack.c.h.b16 %v460
    %v1614 = vunpack.c.l.b16 %v461
    %v1615 = vunpack.c.h.b16 %v461
    %v1616 = vunpack.c.l.b16 %v462
    %v1617 = vunpack.c.h.b16 %v462
    %v1618 = vunpack.c.l.b16 %v463
    %v1619 = vunpack.c.h.b16 %v463
    %v1620 = vunpack.c.l.b16 %v464
    %v1621 = vunpack.c.h.b16 %v464
    %v1622 = vunpack.c.l.b16 %v465
    %v1623 = vunpack.c.h.b16 %v465
    %v1624 = vunpack.c.l.b16 %v466
    %v1625 = vunpack.c.h.b16 %v466
    %v1626 = vunpack.c.l.b16 %v467
    %v1627 = vunpack.c.h.b16 %v467
    %v1628 = vunpack.c.l.b16 %v468
    %v1629 = vunpack.c.h.b16 %v468
    %v1630 = vunpack.c.l.b16 %v469
    %v1631 = vunpack.c.h.b16 %v469
    %v1632 = vunpack.c.l.b16 %v470
    %v1633 = vunpack.c.h.b16 %v470
    %v1634 = vunpack.c.l.b16 %v471
    %v1635 = vunpack.c.h.b16 %v471
    %v1636 = vunpack.c.l.b16 %v472
    %v1637 = vunpack.c.h.b16 %v472
    %v1638 = vunpack.c.l.b16 %v473
    %v1639 = vunpack.c.h.b16 %v473
    %v1640 = vunpack.c.l.b16 %v474
    %v1641 = vunpack.c.h.b16 %v474
    %v1642 = vunpack.c.l.b16 %v475
    %v1643 = vunpack.c.h.b16 %v475
    %v1644 = vunpack.c.l.b16 %v476
    %v1645 = vunpack.c.h.b16 %v476
    %v1646 = vunpack.c.l.b16 %v477
    %v1647 = vunpack.c.h.b16 %v477
    %v1648 = vunpack.c.l.b16 %v478
    %v1649 = vunpack.c.h.b16 %v478
    %v1650 = vunpack.c.l.b16 %v479
    %v1651 = vunpack.c.h.b16 %v479
    %v1652 = vunpack.c.l.b16 %v480
    %v1653 = vunpack.c.h.b16 %v480
    %v1654 = vunpack.c.l.b16 %v481
    %v1655 = vunpack.c.h.b16 %v481
    %v1656 = vunpack.c.l.b16 %v482
    %v1657 = vunpack.c.h.b16 %v482
    %v1658 = vunpack.c.l.b16 %v483
    %v1659 = vunpack.c.h.b16 %v483
    %v1660 = vunpack.c.l.b16 %v484
    %v1661 = vunpack.c.h.b16 %v484
    %v1662 = vunpack.c.l.b16 %v485
    %v1663 = vunpack.c.h.b16 %v485
    %v1664 = vunpack.c.l.b16 %v486
    %v1665 = vunpack.c.h.b16 %v486
    %v1666 = vunpack.c.l.b16 %v487
    %v1667 = vunpack.c.h.b16 %v487
    %v1668 = vunpack.c.l.b16 %v488
    %v1669 = vunpack.c.h.b16 %v488
    %v1670 = vunpack.c.l.b16 %v489
    %v1671 = vunpack.c.h.b16 %v489
    %v1672 = vunpack.c.l.b16 %v490
    %v1673 = vunpack.c.h.b16 %v490
    %v1674 = vunpack.c.l.b16 %v491
    %v1675 = vunpack.c.h.b16 %v491
    %v1676 = vunpack.c.l.b16 %v492
    %v1677 = vunpack.c.h.b16 %v492
    %v1678 = vunpack.c.l.b16 %v493
    %v1679 = vunpack.c.h.b16 %v493
    %v1680 = vunpack.c.l.b16 %v494
    %v1681 = vunpack.c.h.b16 %v494
    %v1682 = vunpack.c.l.b16 %v495
    %v1683 = vunpack.c.h.b16 %v495
    %v1684 = vunpack.c.l.b16 %v496
    %v1685 = vunpack.c.h.b16 %v496
    %v1686 = vunpack.c.l.b16 %v497
    %v1687 = vunpack.c.h.b16 %v497
    %v1688 = vunpack.c.l.b16 %v498
    %v1689 = vunpack.c.h.b16 %v498
    %v1690 = vunpack.c.l.b16 %v499
    %v1691 = vunpack.c.h.b16 %v499
    %v1692 = vunpack.c.l.b16 %v500
    %v1693 = vunpack.c.h.b16 %v500
    %v1694 = vunpack.c.l.b16 %v501
    %v1695 = vunpack.c.h.b16 %v501
    %v1696 = vunpack.c.l.b16 %v502
    %v1697 = vunpack.c.h.b16 %v502
    %v1698 = vunpack.c.l.b16 %v503
    %v1699 = vunpack.c.h.b16 %v503
    %v1700 = vunpack.c.l.b16 %v504
    %v1701 = vunpack.c.h.b16 %v504
    %v1702 = vunpack.c.l.b16 %v505
    %v1703 = vunpack.c.h.b16 %v505
    %v1704 = vunpack.c.l.b16 %v506
    %v1705 = vunpack.c.h.b16 %v506
    %v1706 = vunpack.c.l.b16 %v507
    %v1707 = vunpack.c.h.b16 %v507
    %v1708 = vunpack.c.l.b16 %v508
    %v1709 = vunpack.c.h.b16 %v508
    %v1710 = vunpack.c.l.b16 %v509
    %v1711 = vunpack.c.h.b16 %v509
    %v1712 = vunpack.c.l.b16 %v510
    %v1713 = vunpack.c.h.b16 %v510
    %v1714 = vunpack.c.l.b16 %v511
    %v1715 = vunpack.c.h.b16 %v511
    %v1716 = vunpack.c.l.b16 %v512
    %v1717 = vunpack.c.h.b16 %v512
    %v1718 = vunpack.c.l.b16 %v513
    %v1719 = vunpack.c.h.b16 %v513
    %v1720 = vpack.c.b16 %v960, %v952
    %v1721 = vpack.c.b16 %v961, %v953
    %v1722 = vpack.c.b16 %v962, %v954
    %v1723 = vpack.c.b16 %v963, %v955
    %v1724 = vpack.c.b16 %v964, %v956
    %v1725 = vpack.c.b16 %v965, %v957
    %v1726 = vpack.c.b16 %v966, %v958
    %v1727 = vpack.c.b16 %v967, %v959
    %v1728 = vpack.c.b16 %v976, %v968
    %v1729 = vpack.c.b16 %v977, %v969
    %v1730 = vpack.c.b16 %v978, %v970
    %v1731 = vpack.c.b16 %v979, %v971
    %v1732 = vpack.c.b16 %v980, %v972
    %v1733 = vpack.c.b16 %v981, %v973
    %v1734 = vpack.c.b16 %v982, %v974
    %v1735 = vpack.c.b16 %v983, %v975
    %v1736 = vpack.c.b16 %v992, %v984
    %v1737 = vpack.c.b16 %v993, %v985
    %v1738 = vpack.c.b16 %v994, %v986
    %v1739 = vpack.c.b16 %v995, %v987
    %v1740 = vpack.c.b16 %v996, %v988
    %v1741 = vpack.c.b16 %v997, %v989
    %v1742 = vpack.c.b16 %v998, %v990
    %v1743 = vpack.c.b16 %v999, %v991
    %v1744 = vpack.c.b16 %v1008, %v1000
    %v1745 = vpack.c.b16 %v1009, %v1001
    %v1746 = vpack.c.b16 %v1010, %v1002
    %v1747 = vpack.c.b16 %v1011, %v1003
    %v1748 = vpack.c.b16 %v1012, %v1004
    %v1749 = vpack.c.b16 %v1013, %v1005
    %v1750 = vpack.c.b16 %v1014, %v1006
    %v1751 = vpack.c.b16 %v1015, %v1007
    %v1752 = vpack.c.b16 %v1024, %v1016
    %v1753 = vpack.c.b16 %v1025, %v1017
    %v1754 = vpack.c.b16 %v1026, %v1018
    %v1755 = vpack.c.b16 %v1027, %v1019
    %v1756 = vpack.c.b16 %v1028, %v1020
    %v1757 = vpack.c.b16 %v1029, %v1021
    %v1758 = vpack.c.b16 %v1030, %v1022
    %v1759 = vpack.c.b16 %v1031, %v1023
    %v1760 = vpack.c.b16 %v1040, %v1032
    %v1761 = vpack.c.b16 %v1041, %v1033
    %v1762 = vpack.c.b16 %v1042, %v1034
    %v1763 = vpack.c.b16 %v1043, %v1035
    %v1764 = vpack.c.b16 %v1044, %v1036
    %v1765 = vpack.c.b16 %v1045, %v1037
    %v1766 = vpack.c.b16 %v1046, %v1038
    %v1767 = vpack.c.b16 %v1047, %v1039
    %v1768 = vpack.c.b16 %v1056, %v1048
    %v1769 = vpack.c.b16 %v1057, %v1049
    %v1770 = vpack.c.b16 %v1058, %v1050
    %v1771 = vpack.c.b16 %v1059, %v1051
    %v1772 = vpack.c.b16 %v1060, %v1052
    %v1773 = vpack.c.b16 %v1061, %v1053
    %v1774 = vpack.c.b16 %v1062, %v1054
    %v1775 = vpack.c.b16 %v1063, %v1055
    %v1776 = vpack.c.b16 %v1072, %v1064
    %v1777 = vpack.c.b16 %v1073, %v1065
    %v1778 = vpack.c.b16 %v1074, %v1066
    %v1779 = vpack.c.b16 %v1075, %v1067
    %v1780 = vpack.c.b16 %v1076, %v1068
    %v1781 = vpack.c.b16 %v1077, %v1069
    %v1782 = vpack.c.b16 %v1078, %v1070
    %v1783 = vpack.c.b16 %v1079, %v1071
    %v1784 = vpack.c.b16 %v1088, %v1080
    %v1785 = vpack.c.b16 %v1089, %v1081
    %v1786 = vpack.c.b16 %v1090, %v1082
    %v1787 = vpack.c.b16 %v1091, %v1083
    %v1788 = vpack.c.b16 %v1092, %v1084
    %v1789 = vpack.c.b16 %v1093, %v1085
    %v1790 = vpack.c.b16 %v1094, %v1086
    %v1791 = vpack.c.b16 %v1095, %v1087
    %v1792 = vpack.c.b16 %v1104, %v1096
    %v1793 = vpack.c.b16 %v1105, %v1097
    %v1794 = vpack.c.b16 %v1106, %v1098
    %v1795 = vpack.c.b16 %v1107, %v1099
    %v1796 = vpack.c.b16 %v1108, %v1100
    %v1797 = vpack.c.b16 %v1109, %v1101
    %v1798 = vpack.c.b16 %v1110, %v1102
    %v1799 = vpack.c.b16 %v1111, %v1103
    %v1800 = vpack.c.b16 %v1120, %v1112
    %v1801 = vpack.c.b16 %v1121, %v1113
    %v1802 = vpack.c.b16 %v1122, %v1114
    %v1803 = vpack.c.b16 %v1123, %v1115
    %v1804 = vpack.c.b16 %v1124, %v1116
    %v1805 = vpack.c.b16 %v1125, %v1117
    %v1806 = vpack.c.b16 %v1126, %v1118
    %v1807 = vpack.c.b16 %v1127, %v1119
    %v1808 = vpack.c.b16 %v1136, %v1128
    %v1809 = vpack.c.b16 %v1137, %v1129
    %v1810 = vpack.c.b16 %v1138, %v1130
    %v1811 = vpack.c.b16 %v1139, %v1131
    %v1812 = vpack.c.b16 %v1140, %v1132
    %v1813 = vpack.c.b16 %v1141, %v1133
    %v1814 = vpack.c.b16 %v1142, %v1134
    %v1815 = vpack.c.b16 %v1143, %v1135
    %v1816 = vpack.c.b16 %v1152, %v1144
    %v1817 = vpack.c.b16 %v1153, %v1145
    %v1818 = vpack.c.b16 %v1154, %v1146
    %v1819 = vpack.c.b16 %v1155, %v1147
    %v1820 = vpack.c.b16 %v1156, %v1148
    %v1821 = vpack.c.b16 %v1157, %v1149
    %v1822 = vpack.c.b16 %v1158, %v1150
    %v1823 = vpack.c.b16 %v1159, %v1151
    %v1824 = vpack.c.b16 %v1168, %v1160
    %v1825 = vpack.c.b16 %v1169, %v1161
    %v1826 = vpack.c.b16 %v1170, %v1162
    %v1827 = vpack.c.b16 %v1171, %v1163
    %v1828 = vpack.c.b16 %v1172, %v1164
    %v1829 = vpack.c.b16 %v1173, %v1165
    %v1830 = vpack.c.b16 %v1174, %v1166
    %v1831 = vpack.c.b16 %v1175, %v1167
    %v1832 = vpack.c.b16 %v1184, %v1176
    %v1833 = vpack.c.b16 %v1185, %v1177
    %v1834 = vpack.c.b16 %v1186, %v1178
    %v1835 = vpack.c.b16 %v1187, %v1179
    %v1836 = vpack.c.b16 %v1188, %v1180
    %v1837 = vpack.c.b16 %v1189, %v1181
    %v1838 = vpack.c.b16 %v1190, %v1182
    %v1839 = vpack.c.b16 %v1191, %v1183
    %v1840 = vpack.c.b16 %v1200, %v1192
    %v1841 = vpack.c.b16 %v1201, %v1193
    %v1842 = vpack.c.b16 %v1202, %v1194
    %v1843 = vpack.c.b16 %v1203, %v1195
    %v1844 = vpack.c.b16 %v1204, %v1196
    %v1845 = vpack.c.b16 %v1205, %v1197
    %v1846 = vpack.c.b16 %v1206, %v1198
    %v1847 = vpack.c.b16 %v1207, %v1199
    %v1848 = vpack.c.b16 %v1216, %v1208
    %v1849 = vpack.c.b16 %v1217, %v1209
    %v1850 = vpack.c.b16 %v1218, %v1210
    %v1851 = vpack.c.b16 %v1219, %v1211
    %v1852 = vpack.c.b16 %v1220, %v1212
    %v1853 = vpack.c.b16 %v1221, %v1213
    %v1854 = vpack.c.b16 %v1222, %v1214
    %v1855 = vpack.c.b16 %v1223, %v1215
    %v1856 = vpack.c.b16 %v1232, %v1224
    %v1857 = vpack.c.b16 %v1233, %v1225
    %v1858 = vpack.c.b16 %v1234, %v1226
    %v1859 = vpack.c.b16 %v1235, %v1227
    %v1860 = vpack.c.b16 %v1236, %v1228
    %v1861 = vpack.c.b16 %v1237, %v1229
    %v1862 = vpack.c.b16 %v1238, %v1230
    %v1863 = vpack.c.b16 %v1239, %v1231
    %v1864 = vpack.c.b16 %v1248, %v1240
    %v1865 = vpack.c.b16 %v1249, %v1241
    %v1866 = vpack.c.b16 %v1250, %v1242
    %v1867 = vpack.c.b16 %v1251, %v1243
    %v1868 = vpack.c.b16 %v1252, %v1244
    %v1869 = vpack.c.b16 %v1253, %v1245
    %v1870 = vpack.c.b16 %v1254, %v1246
    %v1871 = vpack.c.b16 %v1255, %v1247
    %v1872 = vpack.c.b16 %v1264, %v1256
    %v1873 = vpack.c.b16 %v1265, %v1257
    %v1874 = vpack.c.b16 %v1266, %v1258
    %v1875 = vpack.c.b16 %v1267, %v1259
    %v1876 = vpack.c.b16 %v1268, %v1260
    %v1877 = vpack.c.b16 %v1269, %v1261
    %v1878 = vpack.c.b16 %v1270, %v1262
    %v1879 = vpack.c.b16 %v1271, %v1263
    %v1880 = vpack.c.b16 %v1280, %v1272
    %v1881 = vpack.c.b16 %v1281, %v1273
    %v1882 = vpack.c.b16 %v1282, %v1274
    %v1883 = vpack.c.b16 %v1283, %v1275
    %v1884 = vpack.c.b16 %v1284, %v1276
    %v1885 = vpack.c.b16 %v1285, %v1277
    %v1886 = vpack.c.b16 %v1286, %v1278
    %v1887 = vpack.c.b16 %v1287, %v1279
    %v1888 = vpack.c.b16 %v1296, %v1288
    %v1889 = vpack.c.b16 %v1297, %v1289
    %v1890 = vpack.c.b16 %v1298, %v1290
    %v1891 = vpack.c.b16 %v1299, %v1291
    %v1892 = vpack.c.b16 %v1300, %v1292
    %v1893 = vpack.c.b16 %v1301, %v1293
    %v1894 = vpack.c.b16 %v1302, %v1294
    %v1895 = vpack.c.b16 %v1303, %v1295
    %v1896 = vpack.c.b16 %v1312, %v1304
    %v1897 = vpack.c.b16 %v1313, %v1305
    %v1898 = vpack.c.b16 %v1314, %v1306
    %v1899 = vpack.c.b16 %v1315, %v1307
    %v1900 = vpack.c.b16 %v1316, %v1308
    %v1901 = vpack.c.b16 %v1317, %v1309
    %v1902 = vpack.c.b16 %v1318, %v1310
    %v1903 = vpack.c.b16 %v1319, %v1311
    %v1904 = vpack.c.b16 %v1328, %v1320
    %v1905 = vpack.c.b16 %v1329, %v1321
    %v1906 = vpack.c.b16 %v1330, %v1322
    %v1907 = vpack.c.b16 %v1331, %v1323
    %v1908 = vpack.c.b16 %v1332, %v1324
    %v1909 = vpack.c.b16 %v1333, %v1325
    %v1910 = vpack.c.b16 %v1334, %v1326
    %v1911 = vpack.c.b16 %v1335, %v1327
    %v1912 = vpack.c.b16 %v1344, %v1336
    %v1913 = vpack.c.b16 %v1345, %v1337
    %v1914 = vpack.c.b16 %v1346, %v1338
    %v1915 = vpack.c.b16 %v1347, %v1339
    %v1916 = vpack.c.b16 %v1348, %v1340
    %v1917 = vpack.c.b16 %v1349, %v1341
    %v1918 = vpack.c.b16 %v1350, %v1342
    %v1919 = vpack.c.b16 %v1351, %v1343
    %v1920 = vpack.c.b16 %v1360, %v1352
    %v1921 = vpack.c.b16 %v1361, %v1353
    %v1922 = vpack.c.b16 %v1362, %v1354
    %v1923 = vpack.c.b16 %v1363, %v1355
    %v1924 = vpack.c.b16 %v1364, %v1356
    %v1925 = vpack.c.b16 %v1365, %v1357
    %v1926 = vpack.c.b16 %v1366, %v1358
    %v1927 = vpack.c.b16 %v1367, %v1359
    %v1928 = vpack.c.b16 %v1376, %v1368
    %v1929 = vpack.c.b16 %v1377, %v1369
    %v1930 = vpack.c.b16 %v1378, %v1370
    %v1931 = vpack.c.b16 %v1379, %v1371
    %v1932 = vpack.c.b16 %v1380, %v1372
    %v1933 = vpack.c.b16 %v1381, %v1373
    %v1934 = vpack.c.b16 %v1382, %v1374
    %v1935 = vpack.c.b16 %v1383, %v1375
    %v1936 = vpack.c.b16 %v1392, %v1384
    %v1937 = vpack.c.b16 %v1393, %v1385
    %v1938 = vpack.c.b16 %v1394, %v1386
    %v1939 = vpack.c.b16 %v1395, %v1387
    %v1940 = vpack.c.b16 %v1396, %v1388
    %v1941 = vpack.c.b16 %v1397, %v1389
    %v1942 = vpack.c.b16 %v1398, %v1390
    %v1943 = vpack.c.b16 %v1399, %v1391
    %v1944 = vpack.c.b16 %v1408, %v1400
    %v1945 = vpack.c.b16 %v1409, %v1401
    %v1946 = vpack.c.b16 %v1410, %v1402
    %v1947 = vpack.c.b16 %v1411, %v1403
    %v1948 = vpack.c.b16 %v1412, %v1404
    %v1949 = vpack.c.b16 %v1413, %v1405
    %v1950 = vpack.c.b16 %v1414, %v1406
    %v1951 = vpack.c.b16 %v1415, %v1407
    %v1952 = vpack.c.b16 %v1424, %v1416
    %v1953 = vpack.c.b16 %v1425, %v1417
    %v1954 = vpack.c.b16 %v1426, %v1418
    %v1955 = vpack.c.b16 %v1427, %v1419
    %v1956 = vpack.c.b16 %v1428, %v1420
    %v1957 = vpack.c.b16 %v1429, %v1421
    %v1958 = vpack.c.b16 %v1430, %v1422
    %v1959 = vpack.c.b16 %v1431, %v1423
    %v1960 = vpack.c.b16 %v1440, %v1432
    %v1961 = vpack.c.b16 %v1441, %v1433
    %v1962 = vpack.c.b16 %v1442, %v1434
    %v1963 = vpack.c.b16 %v1443, %v1435
    %v1964 = vpack.c.b16 %v1444, %v1436
    %v1965 = vpack.c.b16 %v1445, %v1437
    %v1966 = vpack.c.b16 %v1446, %v1438
    %v1967 = vpack.c.b16 %v1447, %v1439
    %v1968 = vpack.c.b16 %v1456, %v1448
    %v1969 = vpack.c.b16 %v1457, %v1449
    %v1970 = vpack.c.b16 %v1458, %v1450
    %v1971 = vpack.c.b16 %v1459, %v1451
    %v1972 = vpack.c.b16 %v1460, %v1452
    %v1973 = vpack.c.b16 %v1461, %v1453
    %v1974 = vpack.c.b16 %v1462, %v1454
    %v1975 = vpack.c.b16 %v1463, %v1455
    %v1976 = vpack.c.b16 %v1472, %v1464
    %v1977 = vpack.c.b16 %v1473, %v1465
    %v1978 = vpack.c.b16 %v1474, %v1466
    %v1979 = vpack.c.b16 %v1475, %v1467
    %v1980 = vpack.c.b16 %v1476, %v1468
    %v1981 = vpack.c.b16 %v1477, %v1469
    %v1982 = vpack.c.b16 %v1478, %v1470
    %v1983 = vpack.c.b16 %v1479, %v1471
    %v1984 = vpack.c.b16 %v1488, %v1480
    %v1985 = vpack.c.b16 %v1489, %v1481
    %v1986 = vpack.c.b16 %v1490, %v1482
    %v1987 = vpack.c.b16 %v1491, %v1483
    %v1988 = vpack.c.b16 %v1492, %v1484
    %v1989 = vpack.c.b16 %v1493, %v1485
    %v1990 = vpack.c.b16 %v1494, %v1486
    %v1991 = vpack.c.b16 %v1495, %v1487
    %v1992 = vpack.c.b16 %v1504, %v1496
    %v1993 = vpack.c.b16 %v1505, %v1497
    %v1994 = vpack.c.b16 %v1506, %v1498
    %v1995 = vpack.c.b16 %v1507, %v1499
    %v1996 = vpack.c.b16 %v1508, %v1500
    %v1997 = vpack.c.b16 %v1509, %v1501
    %v1998 = vpack.c.b16 %v1510, %v1502
    %v1999 = vpack.c.b16 %v1511, %v1503
    %v2000 = vpack.c.b16 %v1520, %v1512
    %v2001 = vpack.c.b16 %v1521, %v1513
    %v2002 = vpack.c.b16 %v1522, %v1514
    %v2003 = vpack.c.b16 %v1523, %v1515
    %v2004 = vpack.c.b16 %v1524, %v1516
    %v2005 = vpack.c.b16 %v1525, %v1517
    %v2006 = vpack.c.b16 %v1526, %v1518
    %v2007 = vpack.c.b16 %v1527, %v1519
    %v2008 = vpack.c.b16 %v1536, %v1528
    %v2009 = vpack.c.b16 %v1537, %v1529
    %v2010 = vpack.c.b16 %v1538, %v1530
    %v2011 = vpack.c.b16 %v1539, %v1531
    %v2012 = vpack.c.b16 %v1540, %v1532
    %v2013 = vpack.c.b16 %v1541, %v1533
    %v2014 = vpack.c.b16 %v1542, %v1534
    %v2015 = vpack.c.b16 %v1543, %v1535
    %v2016 = vpack.c.b16 %v1552, %v1544
    %v2017 = vpack.c.b16 %v1553, %v1545
    %v2018 = vpack.c.b16 %v1554, %v1546
    %v2019 = vpack.c.b16 %v1555, %v1547
    %v2020 = vpack.c.b16 %v1556, %v1548
    %v2021 = vpack.c.b16 %v1557, %v1549
    %v2022 = vpack.c.b16 %v1558, %v1550
    %v2023 = vpack.c.b16 %v1559, %v1551
    %v2024 = vpack.c.b16 %v1568, %v1560
    %v2025 = vpack.c.b16 %v1569, %v1561
    %v2026 = vpack.c.b16 %v1570, %v1562
    %v2027 = vpack.c.b16 %v1571, %v1563
    %v2028 = vpack.c.b16 %v1572, %v1564
    %v2029 = vpack.c.b16 %v1573, %v1565
    %v2030 = vpack.c.b16 %v1574, %v1566
    %v2031 = vpack.c.b16 %v1575, %v1567
    %v2032 = vpack.c.b16 %v1584, %v1576
    %v2033 = vpack.c.b16 %v1585, %v1577
    %v2034 = vpack.c.b16 %v1586, %v1578
    %v2035 = vpack.c.b16 %v1587, %v1579
    %v2036 = vpack.c.b16 %v1588, %v1580
    %v2037 = vpack.c.b16 %v1589, %v1581
    %v2038 = vpack.c.b16 %v1590, %v1582
    %v2039 = vpack.c.b16 %v1591, %v1583
    %v2040 = vpack.c.b16 %v1600, %v1592
    %v2041 = vpack.c.b16 %v1601, %v1593
    %v2042 = vpack.c.b16 %v1602, %v1594
    %v2043 = vpack.c.b16 %v1603, %v1595
    %v2044 = vpack.c.b16 %v1604, %v1596
    %v2045 = vpack.c.b16 %v1605, %v1597
    %v2046 = vpack.c.b16 %v1606, %v1598
    %v2047 = vpack.c.b16 %v1607, %v1599
    %v2048 = vpack.c.b16 %v1616, %v1608
    %v2049 = vpack.c.b16 %v1617, %v1609
    %v2050 = vpack.c.b16 %v1618, %v1610
    %v2051 = vpack.c.b16 %v1619, %v1611
    %v2052 = vpack.c.b16 %v1620, %v1612
    %v2053 = vpack.c.b16 %v1621, %v1613
    %v2054 = vpack.c.b16 %v1622, %v1614
    %v2055 = vpack.c.b16 %v1623, %v1615
    %v2056 = vpack.c.b16 %v1632, %v1624
    %v2057 = vpack.c.b16 %v1633, %v1625
    %v2058 = vpack.c.b16 %v1634, %v1626
    %v2059 = vpack.c.b16 %v1635, %v1627
    %v2060 = vpack.c.b16 %v1636, %v1628
    %v2061 = vpack.c.b16 %v1637, %v1629
    %v2062 = vpack.c.b16 %v1638, %v1630
    %v2063 = vpack.c.b16 %v1639, %v1631
    %v2064 = vpack.c.b16 %v1648, %v1640
    %v2065 = vpack.c.b16 %v1649, %v1641
    %v2066 = vpack.c.b16 %v1650, %v1642
    %v2067 = vpack.c.b16 %v1651, %v1643
    %v2068 = vpack.c.b16 %v1652, %v1644
    %v2069 = vpack.c.b16 %v1653, %v1645
    %v2070 = vpack.c.b16 %v1654, %v1646
    %v2071 = vpack.c.b16 %v1655, %v1647
    %v2072 = vpack.c.b16 %v1664, %v1656
    %v2073 = vpack.c.b16 %v1665, %v1657
    %v2074 = vpack.c.b16 %v1666, %v1658
    %v2075 = vpack.c.b16 %v1667, %v1659
    %v2076 = vpack.c.b16 %v1668, %v1660
    %v2077 = vpack.c.b16 %v1669, %v1661
    %v2078 = vpack.c.b16 %v1670, %v1662
    %v2079 = vpack.c.b16 %v1671, %v1663
    %v2080 = vpack.c.b16 %v1680, %v1672
    %v2081 = vpack.c.b16 %v1681, %v1673
    %v2082 = vpack.c.b16 %v1682, %v1674
    %v2083 = vpack.c.b16 %v1683, %v1675
    %v2084 = vpack.c.b16 %v1684, %v1676
    %v2085 = vpack.c.b16 %v1685, %v1677
    %v2086 = vpack.c.b16 %v1686, %v1678
    %v2087 = vpack.c.b16 %v1687, %v1679
    %v2088 = vpack.c.b16 %v1696, %v1688
    %v2089 = vpack.c.b16 %v1697, %v1689
    %v2090 = vpack.c.b16 %v1698, %v1690
    %v2091 = vpack.c.b16 %v1699, %v1691
    %v2092 = vpack.c.b16 %v1700, %v1692
    %v2093 = vpack.c.b16 %v1701, %v1693
    %v2094 = vpack.c.b16 %v1702, %v1694
    %v2095 = vpack.c.b16 %v1703, %v1695
    %v2096 = vpack.c.b16 %v1712, %v1704
    %v2097 = vpack.c.b16 %v1713, %v1705
    %v2098 = vpack.c.b16 %v1714, %v1706
    %v2099 = vpack.c.b16 %v1715, %v1707
    %v2100 = vpack.c.b16 %v1716, %v1708
    %v2101 = vpack.c.b16 %v1717, %v1709
    %v2102 = vpack.c.b16 %v1718, %v1710
    %v2103 = vpack.c.b16 %v1719, %v1711
    %2488 = vmatprep.subr.bf16.mxu0 %v1721
    %2489 = vmatpush1.bf16.msra.mxu0 %v1720
    %2490 = vmatprep.subr.bf16.mxu0 %v1729
    %2491 = vmatpush1.bf16.msra.mxu0 %v1728
    %2492 = vmatprep.subr.bf16.mxu0 %v1737
    %2493 = vmatpush1.bf16.msra.mxu0 %v1736
    %2494 = vmatprep.subr.bf16.mxu0 %v1745
    %2495 = vmatpush1.bf16.msra.mxu0 %v1744
    %2496 = vmatprep.subr.bf16.mxu0 %v1753
    %2497 = vmatpush1.bf16.msra.mxu0 %v1752
    %2498 = vmatprep.subr.bf16.mxu0 %v1761
    %2499 = vmatpush1.bf16.msra.mxu0 %v1760
    %2500 = vmatprep.subr.bf16.mxu0 %v1769
    %2501 = vmatpush1.bf16.msra.mxu0 %v1768
    %2502 = vmatprep.subr.bf16.mxu0 %v1777
    %2503 = vmatpush1.bf16.msra.mxu0 %v1776
    %2504 = vmatprep.subr.bf16.mxu0 %v1785
    %2505 = vmatpush1.bf16.msra.mxu0 %v1784
    %2506 = vmatprep.subr.bf16.mxu0 %v1793
    %2507 = vmatpush1.bf16.msra.mxu0 %v1792
    %2508 = vmatprep.subr.bf16.mxu0 %v1801
    %2509 = vmatpush1.bf16.msra.mxu0 %v1800
    %2510 = vmatprep.subr.bf16.mxu0 %v1809
    %2511 = vmatpush1.bf16.msra.mxu0 %v1808
    %2512 = vmatprep.subr.bf16.mxu0 %v1817
    %2513 = vmatpush1.bf16.msra.mxu0 %v1816
    %2514 = vmatprep.subr.bf16.mxu0 %v1825
    %2515 = vmatpush1.bf16.msra.mxu0 %v1824
    %2516 = vmatprep.subr.bf16.mxu0 %v1833
    %2517 = vmatpush1.bf16.msra.mxu0 %v1832
    %2518 = vmatprep.subr.bf16.mxu0 %v1841
    %2519 = vmatpush1.bf16.msra.mxu0 %v1840
    %2520 = vmatprep.mubr.bf16.mxu0 %v552
    %2521 = vmatmul.mubr.bf16.gmra.mrb[0].mxu0 %v538
    %v2522 = vpop.f32.mrb[0].mxu0
    %v2523 = vadd.f32 0.0, %v2522
    %v2524 = vpop.f32.mrb[0].mxu0
    %v2525 = vadd.f32 0.0, %v2524
    %v2526 = vpop.f32.mrb[0].mxu0
    %v2527 = vpop.f32.mrb[0].mxu0
    %2528 = vdwg.mxu0
    %2529 = vmatprep.subr.bf16.mxu0 %v1849
    %2530 = vmatpush1.bf16.msra.mxu0 %v1848
    %2531 = vmatprep.subr.bf16.mxu0 %v1857
    %2532 = vmatpush1.bf16.msra.mxu0 %v1856
    %2533 = vmatprep.subr.bf16.mxu0 %v1865
    %2534 = vmatpush1.bf16.msra.mxu0 %v1864
    %2535 = vmatprep.subr.bf16.mxu0 %v1873
    %2536 = vmatpush1.bf16.msra.mxu0 %v1872
    %2537 = vmatprep.subr.bf16.mxu0 %v1881
    %2538 = vmatpush1.bf16.msra.mxu0 %v1880
    %2539 = vmatprep.subr.bf16.mxu0 %v1889
    %2540 = vmatpush1.bf16.msra.mxu0 %v1888
    %2541 = vmatprep.subr.bf16.mxu0 %v1897
    %2542 = vmatpush1.bf16.msra.mxu0 %v1896
    %2543 = vmatprep.subr.bf16.mxu0 %v1905
    %2544 = vmatpush1.bf16.msra.mxu0 %v1904
    %2545 = vmatprep.subr.bf16.mxu0 %v1913
    %2546 = vmatpush1.bf16.msra.mxu0 %v1912
    %2547 = vmatprep.subr.bf16.mxu0 %v1921
    %2548 = vmatpush1.bf16.msra.mxu0 %v1920
    %2549 = vmatprep.subr.bf16.mxu0 %v1929
    %2550 = vmatpush1.bf16.msra.mxu0 %v1928
    %2551 = vmatprep.subr.bf16.mxu0 %v1937
    %2552 = vmatpush1.bf16.msra.mxu0 %v1936
    %2553 = vmatprep.subr.bf16.mxu0 %v1945
    %2554 = vmatpush1.bf16.msra.mxu0 %v1944
    %2555 = vmatprep.subr.bf16.mxu0 %v1953
    %2556 = vmatpush1.bf16.msra.mxu0 %v1952
    %2557 = vmatprep.subr.bf16.mxu0 %v1961
    %2558 = vmatpush1.bf16.msra.mxu0 %v1960
    %2559 = vmatprep.subr.bf16.mxu0 %v1969
    %2560 = vmatpush1.bf16.msra.mxu0 %v1968
    %2561 = vmatprep.mubr.bf16.mxu0 %v561
    %2562 = vmatmul.mubr.bf16.gmra.mrb[0].mxu0 %v560
    %v2563 = vpop.f32.mrb[0].mxu0
    %v2564 = vadd.f32 %v2523, %v2563
    %v2565 = vpop.f32.mrb[0].mxu0
    %v2566 = vadd.f32 %v2525, %v2565
    %v2567 = vpop.f32.mrb[0].mxu0
    %v2568 = vpop.f32.mrb[0].mxu0
    %2569 = vdwg.mxu0
    %2570 = vmatprep.subr.bf16.mxu0 %v1977
    %2571 = vmatpush1.bf16.msra.mxu0 %v1976
    %2572 = vmatprep.subr.bf16.mxu0 %v1985
    %2573 = vmatpush1.bf16.msra.mxu0 %v1984
    %2574 = vmatprep.subr.bf16.mxu0 %v1993
    %2575 = vmatpush1.bf16.msra.mxu0 %v1992
    %2576 = vmatprep.subr.bf16.mxu0 %v2001
    %2577 = vmatpush1.bf16.msra.mxu0 %v2000
    %2578 = vmatprep.subr.bf16.mxu0 %v2009
    %2579 = vmatpush1.bf16.msra.mxu0 %v2008
    %2580 = vmatprep.subr.bf16.mxu0 %v2017
    %2581 = vmatpush1.bf16.msra.mxu0 %v2016
    %2582 = vmatprep.subr.bf16.mxu0 %v2025
    %2583 = vmatpush1.bf16.msra.mxu0 %v2024
    %2584 = vmatprep.subr.bf16.mxu0 %v2033
    %2585 = vmatpush1.bf16.msra.mxu0 %v2032
    %2586 = vmatprep.subr.bf16.mxu0 %v2041
    %2587 = vmatpush1.bf16.msra.mxu0 %v2040
    %2588 = vmatprep.subr.bf16.mxu0 %v2049
    %2589 = vmatpush1.bf16.msra.mxu0 %v2048
    %2590 = vmatprep.subr.bf16.mxu0 %v2057
    %2591 = vmatpush1.bf16.msra.mxu0 %v2056
    %2592 = vmatprep.subr.bf16.mxu0 %v2065
    %2593 = vmatpush1.bf16.msra.mxu0 %v2064
    %2594 = vmatprep.subr.bf16.mxu0 %v2073
    %2595 = vmatpush1.bf16.msra.mxu0 %v2072
    %2596 = vmatprep.subr.bf16.mxu0 %v2081
    %2597 = vmatpush1.bf16.msra.mxu0 %v2080
    %2598 = vmatprep.subr.bf16.mxu0 %v2089
    %2599 = vmatpush1.bf16.msra.mxu0 %v2088
    %2600 = vmatprep.subr.bf16.mxu0 %v2097
    %2601 = vmatpush1.bf16.msra.mxu0 %v2096
    %2602 = vmatprep.mubr.bf16.mxu0 %v559
    %2603 = vmatmul.mubr.bf16.gmra.mrb[0].mxu0 %v545
    %v2604 = vpop.f32.mrb[0].mxu0
    %v2605 = vadd.f32 %v2564, %v2604
    %v2606 = vpop.f32.mrb[0].mxu0
    %v2607 = vadd.f32 %v2566, %v2606
    %v2608 = vpop.f32.mrb[0].mxu0
    %v2609 = vpop.f32.mrb[0].mxu0
    %2610 = vdwg.mxu0
    %2611 = vmatprep.subr.bf16.mxu0 %v1723
    %2612 = vmatpush1.bf16.msra.mxu0 %v1722
    %2613 = vmatprep.subr.bf16.mxu0 %v1731
    %2614 = vmatpush1.bf16.msra.mxu0 %v1730
    %2615 = vmatprep.subr.bf16.mxu0 %v1739
    %2616 = vmatpush1.bf16.msra.mxu0 %v1738
    %2617 = vmatprep.subr.bf16.mxu0 %v1747
    %2618 = vmatpush1.bf16.msra.mxu0 %v1746
    %2619 = vmatprep.subr.bf16.mxu0 %v1755
    %2620 = vmatpush1.bf16.msra.mxu0 %v1754
    %2621 = vmatprep.subr.bf16.mxu0 %v1763
    %2622 = vmatpush1.bf16.msra.mxu0 %v1762
    %2623 = vmatprep.subr.bf16.mxu0 %v1771
    %2624 = vmatpush1.bf16.msra.mxu0 %v1770
    %2625 = vmatprep.subr.bf16.mxu0 %v1779
    %2626 = vmatpush1.bf16.msra.mxu0 %v1778
    %2627 = vmatprep.subr.bf16.mxu0 %v1787
    %2628 = vmatpush1.bf16.msra.mxu0 %v1786
    %2629 = vmatprep.subr.bf16.mxu0 %v1795
    %2630 = vmatpush1.bf16.msra.mxu0 %v1794
    %2631 = vmatprep.subr.bf16.mxu0 %v1803
    %2632 = vmatpush1.bf16.msra.mxu0 %v1802
    %2633 = vmatprep.subr.bf16.mxu0 %v1811
    %2634 = vmatpush1.bf16.msra.mxu0 %v1810
    %2635 = vmatprep.subr.bf16.mxu0 %v1819
    %2636 = vmatpush1.bf16.msra.mxu0 %v1818
    %2637 = vmatprep.subr.bf16.mxu0 %v1827
    %2638 = vmatpush1.bf16.msra.mxu0 %v1826
    %2639 = vmatprep.subr.bf16.mxu0 %v1835
    %2640 = vmatpush1.bf16.msra.mxu0 %v1834
    %2641 = vmatprep.subr.bf16.mxu0 %v1843
    %2642 = vmatpush1.bf16.msra.mxu0 %v1842
    %2643 = vmatprep.mubr.bf16.mxu0 %v552
    %2644 = vmatmul.mubr.bf16.gmra.mrb[0].mxu0 %v538
    %v2645 = vpop.f32.mrb[0].mxu0
    %v2646 = vadd.f32 0.0, %v2645
    %v2647 = vpop.f32.mrb[0].mxu0
    %v2648 = vadd.f32 0.0, %v2647
    %v2649 = vpop.f32.mrb[0].mxu0
    %v2650 = vpop.f32.mrb[0].mxu0
    %2651 = vdwg.mxu0
    %2652 = vmatprep.subr.bf16.mxu0 %v1851
    %2653 = vmatpush1.bf16.msra.mxu0 %v1850
    %2654 = vmatprep.subr.bf16.mxu0 %v1859
    %2655 = vmatpush1.bf16.msra.mxu0 %v1858
    %2656 = vmatprep.subr.bf16.mxu0 %v1867
    %2657 = vmatpush1.bf16.msra.mxu0 %v1866
    %2658 = vmatprep.subr.bf16.mxu0 %v1875
    %2659 = vmatpush1.bf16.msra.mxu0 %v1874
    %2660 = vmatprep.subr.bf16.mxu0 %v1883
    %2661 = vmatpush1.bf16.msra.mxu0 %v1882
    %2662 = vmatprep.subr.bf16.mxu0 %v1891
    %2663 = vmatpush1.bf16.msra.mxu0 %v1890
    %2664 = vmatprep.subr.bf16.mxu0 %v1899
    %2665 = vmatpush1.bf16.msra.mxu0 %v1898
    %2666 = vmatprep.subr.bf16.mxu0 %v1907
    %2667 = vmatpush1.bf16.msra.mxu0 %v1906
    %2668 = vmatprep.subr.bf16.mxu0 %v1915
    %2669 = vmatpush1.bf16.msra.mxu0 %v1914
    %2670 = vmatprep.subr.bf16.mxu0 %v1923
    %2671 = vmatpush1.bf16.msra.mxu0 %v1922
    %2672 = vmatprep.subr.bf16.mxu0 %v1931
    %2673 = vmatpush1.bf16.msra.mxu0 %v1930
    %2674 = vmatprep.subr.bf16.mxu0 %v1939
    %2675 = vmatpush1.bf16.msra.mxu0 %v1938
    %2676 = vmatprep.subr.bf16.mxu0 %v1947
    %2677 = vmatpush1.bf16.msra.mxu0 %v1946
    %2678 = vmatprep.subr.bf16.mxu0 %v1955
    %2679 = vmatpush1.bf16.msra.mxu0 %v1954
    %2680 = vmatprep.subr.bf16.mxu0 %v1963
    %2681 = vmatpush1.bf16.msra.mxu0 %v1962
    %2682 = vmatprep.subr.bf16.mxu0 %v1971
    %2683 = vmatpush1.bf16.msra.mxu0 %v1970
    %2684 = vmatprep.mubr.bf16.mxu0 %v561
    %2685 = vmatmul.mubr.bf16.gmra.mrb[0].mxu0 %v560
    %v2686 = vpop.f32.mrb[0].mxu0
    %v2687 = vadd.f32 %v2646, %v2686
    %v2688 = vpop.f32.mrb[0].mxu0
    %v2689 = vadd.f32 %v2648, %v2688
    %v2690 = vpop.f32.mrb[0].mxu0
    %v2691 = vpop.f32.mrb[0].mxu0
    %2692 = vdwg.mxu0
    %2693 = vmatprep.subr.bf16.mxu0 %v1979
    %2694 = vmatpush1.bf16.msra.mxu0 %v1978
    %2695 = vmatprep.subr.bf16.mxu0 %v1987
    %2696 = vmatpush1.bf16.msra.mxu0 %v1986
    %2697 = vmatprep.subr.bf16.mxu0 %v1995
    %2698 = vmatpush1.bf16.msra.mxu0 %v1994
    %2699 = vmatprep.subr.bf16.mxu0 %v2003
    %2700 = vmatpush1.bf16.msra.mxu0 %v2002
    %2701 = vmatprep.subr.bf16.mxu0 %v2011
    %2702 = vmatpush1.bf16.msra.mxu0 %v2010
    %2703 = vmatprep.subr.bf16.mxu0 %v2019
    %2704 = vmatpush1.bf16.msra.mxu0 %v2018
    %2705 = vmatprep.subr.bf16.mxu0 %v2027
    %2706 = vmatpush1.bf16.msra.mxu0 %v2026
    %2707 = vmatprep.subr.bf16.mxu0 %v2035
    %2708 = vmatpush1.bf16.msra.mxu0 %v2034
    %2709 = vmatprep.subr.bf16.mxu0 %v2043
    %2710 = vmatpush1.bf16.msra.mxu0 %v2042
    %2711 = vmatprep.subr.bf16.mxu0 %v2051
    %2712 = vmatpush1.bf16.msra.mxu0 %v2050
    %2713 = vmatprep.subr.bf16.mxu0 %v2059
    %2714 = vmatpush1.bf16.msra.mxu0 %v2058
    %2715 = vmatprep.subr.bf16.mxu0 %v2067
    %2716 = vmatpush1.bf16.msra.mxu0 %v2066
    %2717 = vmatprep.subr.bf16.mxu0 %v2075
    %2718 = vmatpush1.bf16.msra.mxu0 %v2074
    %2719 = vmatprep.subr.bf16.mxu0 %v2083
    %2720 = vmatpush1.bf16.msra.mxu0 %v2082
    %2721 = vmatprep.subr.bf16.mxu0 %v2091
    %2722 = vmatpush1.bf16.msra.mxu0 %v2090
    %2723 = vmatprep.subr.bf16.mxu0 %v2099
    %2724 = vmatpush1.bf16.msra.mxu0 %v2098
    %2725 = vmatprep.mubr.bf16.mxu0 %v559
    %2726 = vmatmul.mubr.bf16.gmra.mrb[0].mxu0 %v545
    %v2727 = vpop.f32.mrb[0].mxu0
    %v2728 = vadd.f32 %v2687, %v2727
    %v2729 = vpop.f32.mrb[0].mxu0
    %v2730 = vadd.f32 %v2689, %v2729
    %v2731 = vpop.f32.mrb[0].mxu0
    %v2732 = vpop.f32.mrb[0].mxu0
    %2733 = vdwg.mxu0
    %2734 = vmatprep.subr.bf16.mxu0 %v1725
    %2735 = vmatpush1.bf16.msra.mxu0 %v1724
    %2736 = vmatprep.subr.bf16.mxu0 %v1733
    %2737 = vmatpush1.bf16.msra.mxu0 %v1732
    %2738 = vmatprep.subr.bf16.mxu0 %v1741
    %2739 = vmatpush1.bf16.msra.mxu0 %v1740
    %2740 = vmatprep.subr.bf16.mxu0 %v1749
    %2741 = vmatpush1.bf16.msra.mxu0 %v1748
    %2742 = vmatprep.subr.bf16.mxu0 %v1757
    %2743 = vmatpush1.bf16.msra.mxu0 %v1756
    %2744 = vmatprep.subr.bf16.mxu0 %v1765
    %2745 = vmatpush1.bf16.msra.mxu0 %v1764
    %2746 = vmatprep.subr.bf16.mxu0 %v1773
    %2747 = vmatpush1.bf16.msra.mxu0 %v1772
    %2748 = vmatprep.subr.bf16.mxu0 %v1781
    %2749 = vmatpush1.bf16.msra.mxu0 %v1780
    %2750 = vmatprep.subr.bf16.mxu0 %v1789
    %2751 = vmatpush1.bf16.msra.mxu0 %v1788
    %2752 = vmatprep.subr.bf16.mxu0 %v1797
    %2753 = vmatpush1.bf16.msra.mxu0 %v1796
    %2754 = vmatprep.subr.bf16.mxu0 %v1805
    %2755 = vmatpush1.bf16.msra.mxu0 %v1804
    %2756 = vmatprep.subr.bf16.mxu0 %v1813
    %2757 = vmatpush1.bf16.msra.mxu0 %v1812
    %2758 = vmatprep.subr.bf16.mxu0 %v1821
    %2759 = vmatpush1.bf16.msra.mxu0 %v1820
    %2760 = vmatprep.subr.bf16.mxu0 %v1829
    %2761 = vmatpush1.bf16.msra.mxu0 %v1828
    %2762 = vmatprep.subr.bf16.mxu0 %v1837
    %2763 = vmatpush1.bf16.msra.mxu0 %v1836
    %2764 = vmatprep.subr.bf16.mxu0 %v1845
    %2765 = vmatpush1.bf16.msra.mxu0 %v1844
    %2766 = vmatprep.mubr.bf16.mxu0 %v552
    %2767 = vmatmul.mubr.bf16.gmra.mrb[0].mxu0 %v538
    %v2768 = vpop.f32.mrb[0].mxu0
    %v2769 = vadd.f32 0.0, %v2768
    %v2770 = vpop.f32.mrb[0].mxu0
    %v2771 = vadd.f32 0.0, %v2770
    %v2772 = vpop.f32.mrb[0].mxu0
    %v2773 = vpop.f32.mrb[0].mxu0
    %2774 = vdwg.mxu0
    %2775 = vmatprep.subr.bf16.mxu0 %v1853
    %2776 = vmatpush1.bf16.msra.mxu0 %v1852
    %2777 = vmatprep.subr.bf16.mxu0 %v1861
    %2778 = vmatpush1.bf16.msra.mxu0 %v1860
    %2779 = vmatprep.subr.bf16.mxu0 %v1869
    %2780 = vmatpush1.bf16.msra.mxu0 %v1868
    %2781 = vmatprep.subr.bf16.mxu0 %v1877
    %2782 = vmatpush1.bf16.msra.mxu0 %v1876
    %2783 = vmatprep.subr.bf16.mxu0 %v1885
    %2784 = vmatpush1.bf16.msra.mxu0 %v1884
    %2785 = vmatprep.subr.bf16.mxu0 %v1893
    %2786 = vmatpush1.bf16.msra.mxu0 %v1892
    %2787 = vmatprep.subr.bf16.mxu0 %v1901
    %2788 = vmatpush1.bf16.msra.mxu0 %v1900
    %2789 = vmatprep.subr.bf16.mxu0 %v1909
    %2790 = vmatpush1.bf16.msra.mxu0 %v1908
    %2791 = vmatprep.subr.bf16.mxu0 %v1917
    %2792 = vmatpush1.bf16.msra.mxu0 %v1916
    %2793 = vmatprep.subr.bf16.mxu0 %v1925
    %2794 = vmatpush1.bf16.msra.mxu0 %v1924
    %2795 = vmatprep.subr.bf16.mxu0 %v1933
    %2796 = vmatpush1.bf16.msra.mxu0 %v1932
    %2797 = vmatprep.subr.bf16.mxu0 %v1941
    %2798 = vmatpush1.bf16.msra.mxu0 %v1940
    %2799 = vmatprep.subr.bf16.mxu0 %v1949
    %2800 = vmatpush1.bf16.msra.mxu0 %v1948
    %2801 = vmatprep.subr.bf16.mxu0 %v1957
    %2802 = vmatpush1.bf16.msra.mxu0 %v1956
    %2803 = vmatprep.subr.bf16.mxu0 %v1965
    %2804 = vmatpush1.bf16.msra.mxu0 %v1964
    %2805 = vmatprep.subr.bf16.mxu0 %v1973
    %2806 = vmatpush1.bf16.msra.mxu0 %v1972
    %2807 = vmatprep.mubr.bf16.mxu0 %v561
    %2808 = vmatmul.mubr.bf16.gmra.mrb[0].mxu0 %v560
    %v2809 = vpop.f32.mrb[0].mxu0
    %v2810 = vadd.f32 %v2769, %v2809
    %v2811 = vpop.f32.mrb[0].mxu0
    %v2812 = vadd.f32 %v2771, %v2811
    %v2813 = vpop.f32.mrb[0].mxu0
    %v2814 = vpop.f32.mrb[0].mxu0
    %2815 = vdwg.mxu0
    %2816 = vmatprep.subr.bf16.mxu0 %v1981
    %2817 = vmatpush1.bf16.msra.mxu0 %v1980
    %2818 = vmatprep.subr.bf16.mxu0 %v1989
    %2819 = vmatpush1.bf16.msra.mxu0 %v1988
    %2820 = vmatprep.subr.bf16.mxu0 %v1997
    %2821 = vmatpush1.bf16.msra.mxu0 %v1996
    %2822 = vmatprep.subr.bf16.mxu0 %v2005
    %2823 = vmatpush1.bf16.msra.mxu0 %v2004
    %2824 = vmatprep.subr.bf16.mxu0 %v2013
    %2825 = vmatpush1.bf16.msra.mxu0 %v2012
    %2826 = vmatprep.subr.bf16.mxu0 %v2021
    %2827 = vmatpush1.bf16.msra.mxu0 %v2020
    %2828 = vmatprep.subr.bf16.mxu0 %v2029
    %2829 = vmatpush1.bf16.msra.mxu0 %v2028
    %2830 = vmatprep.subr.bf16.mxu0 %v2037
    %2831 = vmatpush1.bf16.msra.mxu0 %v2036
    %2832 = vmatprep.subr.bf16.mxu0 %v2045
    %2833 = vmatpush1.bf16.msra.mxu0 %v2044
    %2834 = vmatprep.subr.bf16.mxu0 %v2053
    %2835 = vmatpush1.bf16.msra.mxu0 %v2052
    %2836 = vmatprep.subr.bf16.mxu0 %v2061
    %2837 = vmatpush1.bf16.msra.mxu0 %v2060
    %2838 = vmatprep.subr.bf16.mxu0 %v2069
    %2839 = vmatpush1.bf16.msra.mxu0 %v2068
    %2840 = vmatprep.subr.bf16.mxu0 %v2077
    %2841 = vmatpush1.bf16.msra.mxu0 %v2076
    %2842 = vmatprep.subr.bf16.mxu0 %v2085
    %2843 = vmatpush1.bf16.msra.mxu0 %v2084
    %2844 = vmatprep.subr.bf16.mxu0 %v2093
    %2845 = vmatpush1.bf16.msra.mxu0 %v2092
    %2846 = vmatprep.subr.bf16.mxu0 %v2101
    %2847 = vmatpush1.bf16.msra.mxu0 %v2100
    %2848 = vmatprep.mubr.bf16.mxu0 %v559
    %2849 = vmatmul.mubr.bf16.gmra.mrb[0].mxu0 %v545
    %v2850 = vpop.f32.mrb[0].mxu0
    %v2851 = vadd.f32 %v2810, %v2850
    %v2852 = vpop.f32.mrb[0].mxu0
    %v2853 = vadd.f32 %v2812, %v2852
    %v2854 = vpop.f32.mrb[0].mxu0
    %v2855 = vpop.f32.mrb[0].mxu0
    %2856 = vdwg.mxu0
    %2857 = vmatprep.subr.bf16.mxu0 %v1727
    %2858 = vmatpush1.bf16.msra.mxu0 %v1726
    %2859 = vmatprep.subr.bf16.mxu0 %v1735
    %2860 = vmatpush1.bf16.msra.mxu0 %v1734
    %2861 = vmatprep.subr.bf16.mxu0 %v1743
    %2862 = vmatpush1.bf16.msra.mxu0 %v1742
    %2863 = vmatprep.subr.bf16.mxu0 %v1751
    %2864 = vmatpush1.bf16.msra.mxu0 %v1750
    %2865 = vmatprep.subr.bf16.mxu0 %v1759
    %2866 = vmatpush1.bf16.msra.mxu0 %v1758
    %2867 = vmatprep.subr.bf16.mxu0 %v1767
    %2868 = vmatpush1.bf16.msra.mxu0 %v1766
    %2869 = vmatprep.subr.bf16.mxu0 %v1775
    %2870 = vmatpush1.bf16.msra.mxu0 %v1774
    %2871 = vmatprep.subr.bf16.mxu0 %v1783
    %2872 = vmatpush1.bf16.msra.mxu0 %v1782
    %2873 = vmatprep.subr.bf16.mxu0 %v1791
    %2874 = vmatpush1.bf16.msra.mxu0 %v1790
    %2875 = vmatprep.subr.bf16.mxu0 %v1799
    %2876 = vmatpush1.bf16.msra.mxu0 %v1798
    %2877 = vmatprep.subr.bf16.mxu0 %v1807
    %2878 = vmatpush1.bf16.msra.mxu0 %v1806
    %2879 = vmatprep.subr.bf16.mxu0 %v1815
    %2880 = vmatpush1.bf16.msra.mxu0 %v1814
    %2881 = vmatprep.subr.bf16.mxu0 %v1823
    %2882 = vmatpush1.bf16.msra.mxu0 %v1822
    %2883 = vmatprep.subr.bf16.mxu0 %v1831
    %2884 = vmatpush1.bf16.msra.mxu0 %v1830
    %2885 = vmatprep.subr.bf16.mxu0 %v1839
    %2886 = vmatpush1.bf16.msra.mxu0 %v1838
    %2887 = vmatprep.subr.bf16.mxu0 %v1847
    %2888 = vmatpush1.bf16.msra.mxu0 %v1846
    %2889 = vmatprep.mubr.bf16.mxu0 %v552
    %2890 = vmatmul.mubr.bf16.gmra.mrb[0].mxu0 %v538
    %v2891 = vpop.f32.mrb[0].mxu0
    %v2892 = vadd.f32 0.0, %v2891
    %v2893 = vpop.f32.mrb[0].mxu0
    %v2894 = vadd.f32 0.0, %v2893
    %v2895 = vpop.f32.mrb[0].mxu0
    %v2896 = vpop.f32.mrb[0].mxu0
    %2897 = vdwg.mxu0
    %2898 = vmatprep.subr.bf16.mxu0 %v1855
    %2899 = vmatpush1.bf16.msra.mxu0 %v1854
    %2900 = vmatprep.subr.bf16.mxu0 %v1863
    %2901 = vmatpush1.bf16.msra.mxu0 %v1862
    %2902 = vmatprep.subr.bf16.mxu0 %v1871
    %2903 = vmatpush1.bf16.msra.mxu0 %v1870
    %2904 = vmatprep.subr.bf16.mxu0 %v1879
    %2905 = vmatpush1.bf16.msra.mxu0 %v1878
    %2906 = vmatprep.subr.bf16.mxu0 %v1887
    %2907 = vmatpush1.bf16.msra.mxu0 %v1886
    %2908 = vmatprep.subr.bf16.mxu0 %v1895
    %2909 = vmatpush1.bf16.msra.mxu0 %v1894
    %2910 = vmatprep.subr.bf16.mxu0 %v1903
    %2911 = vmatpush1.bf16.msra.mxu0 %v1902
    %2912 = vmatprep.subr.bf16.mxu0 %v1911
    %2913 = vmatpush1.bf16.msra.mxu0 %v1910
    %2914 = vmatprep.subr.bf16.mxu0 %v1919
    %2915 = vmatpush1.bf16.msra.mxu0 %v1918
    %2916 = vmatprep.subr.bf16.mxu0 %v1927
    %2917 = vmatpush1.bf16.msra.mxu0 %v1926
    %2918 = vmatprep.subr.bf16.mxu0 %v1935
    %2919 = vmatpush1.bf16.msra.mxu0 %v1934
    %2920 = vmatprep.subr.bf16.mxu0 %v1943
    %2921 = vmatpush1.bf16.msra.mxu0 %v1942
    %2922 = vmatprep.subr.bf16.mxu0 %v1951
    %2923 = vmatpush1.bf16.msra.mxu0 %v1950
    %2924 = vmatprep.subr.bf16.mxu0 %v1959
    %2925 = vmatpush1.bf16.msra.mxu0 %v1958
    %2926 = vmatprep.subr.bf16.mxu0 %v1967
    %2927 = vmatpush1.bf16.msra.mxu0 %v1966
    %2928 = vmatprep.subr.bf16.mxu0 %v1975
    %2929 = vmatpush1.bf16.msra.mxu0 %v1974
    %2930 = vmatprep.mubr.bf16.mxu0 %v561
    %2931 = vmatmul.mubr.bf16.gmra.mrb[0].mxu0 %v560
    %v2932 = vpop.f32.mrb[0].mxu0
    %v2933 = vadd.f32 %v2892, %v2932
    %v2934 = vpop.f32.mrb[0].mxu0
    %v2935 = vadd.f32 %v2894, %v2934
    %v2936 = vpop.f32.mrb[0].mxu0
    %v2937 = vpop.f32.mrb[0].mxu0
    %2938 = vdwg.mxu0
    %2939 = vmatprep.subr.bf16.mxu0 %v1983
    %2940 = vmatpush1.bf16.msra.mxu0 %v1982
    %2941 = vmatprep.subr.bf16.mxu0 %v1991
    %2942 = vmatpush1.bf16.msra.mxu0 %v1990
    %2943 = vmatprep.subr.bf16.mxu0 %v1999
    %2944 = vmatpush1.bf16.msra.mxu0 %v1998
    %2945 = vmatprep.subr.bf16.mxu0 %v2007
    %2946 = vmatpush1.bf16.msra.mxu0 %v2006
    %2947 = vmatprep.subr.bf16.mxu0 %v2015
    %2948 = vmatpush1.bf16.msra.mxu0 %v2014
    %2949 = vmatprep.subr.bf16.mxu0 %v2023
    %2950 = vmatpush1.bf16.msra.mxu0 %v2022
    %2951 = vmatprep.subr.bf16.mxu0 %v2031
    %2952 = vmatpush1.bf16.msra.mxu0 %v2030
    %2953 = vmatprep.subr.bf16.mxu0 %v2039
    %2954 = vmatpush1.bf16.msra.mxu0 %v2038
    %2955 = vmatprep.subr.bf16.mxu0 %v2047
    %2956 = vmatpush1.bf16.msra.mxu0 %v2046
    %2957 = vmatprep.subr.bf16.mxu0 %v2055
    %2958 = vmatpush1.bf16.msra.mxu0 %v2054
    %2959 = vmatprep.subr.bf16.mxu0 %v2063
    %2960 = vmatpush1.bf16.msra.mxu0 %v2062
    %2961 = vmatprep.subr.bf16.mxu0 %v2071
    %2962 = vmatpush1.bf16.msra.mxu0 %v2070
    %2963 = vmatprep.subr.bf16.mxu0 %v2079
    %2964 = vmatpush1.bf16.msra.mxu0 %v2078
    %2965 = vmatprep.subr.bf16.mxu0 %v2087
    %2966 = vmatpush1.bf16.msra.mxu0 %v2086
    %2967 = vmatprep.subr.bf16.mxu0 %v2095
    %2968 = vmatpush1.bf16.msra.mxu0 %v2094
    %2969 = vmatprep.subr.bf16.mxu0 %v2103
    %2970 = vmatpush1.bf16.msra.mxu0 %v2102
    %2971 = vmatprep.mubr.bf16.mxu0 %v559
    %2972 = vmatmul.mubr.bf16.gmra.mrb[0].mxu0 %v545
    %v2973 = vpop.f32.mrb[0].mxu0
    %v2974 = vadd.f32 %v2933, %v2973
    %v2975 = vpop.f32.mrb[0].mxu0
    %v2976 = vadd.f32 %v2935, %v2975
    %v2977 = vpop.f32.mrb[0].mxu0
    %v2978 = vpop.f32.mrb[0].mxu0
    %2979 = vdwg.mxu0
    %v2980 = vpack.c.bf16 %v2605, %v2605
    %v2981 = vpack.c.bf16 %v2607, %v2607
    %v2982 = vpack.c.bf16 %v2728, %v2728
    %v2983 = vpack.c.bf16 %v2730, %v2730
    %v2984 = vpack.c.bf16 %v2851, %v2851
    %v2985 = vpack.c.bf16 %v2853, %v2853
    %v2986 = vpack.c.bf16 %v2974, %v2974
    %v2987 = vpack.c.bf16 %v2976, %v2976
    %v2988 = vld [vmem:[#allocation7] sm:$0xff]
    %v2989 = vld [vmem:[#allocation7 + $0x8] sm:$0xff]
    %v2990 = vld [vmem:[#allocation7 + $0x10] sm:$0xff]
    %v2991 = vld [vmem:[#allocation7 + $0x18] sm:$0xff]
    %v2992 = vld [vmem:[#allocation7 + $0x20] sm:$0xff]
    %v2993 = vld [vmem:[#allocation7 + $0x28] sm:$0xff]
    %v2994 = vld [vmem:[#allocation7 + $0x30] sm:$0xff]
    %v2995 = vld [vmem:[#allocation7 + $0x38] sm:$0xff]
    %v2996 = vld [vmem:[#allocation7 + $0x40] sm:$0xff]
    %v2997 = vld [vmem:[#allocation7 + $0x48] sm:$0xff]
    %v2998 = vld [vmem:[#allocation7 + $0x50] sm:$0xff]
    %v2999 = vld [vmem:[#allocation7 + $0x58] sm:$0xff]
    %v3000 = vld [vmem:[#allocation7 + $0x60] sm:$0xff]
    %v3001 = vld [vmem:[#allocation7 + $0x68] sm:$0xff]
    %v3002 = vld [vmem:[#allocation7 + $0x70] sm:$0xff]
    %v3003 = vld [vmem:[#allocation7 + $0x78] sm:$0xff]
    %v3004 = vld [vmem:[#allocation7 + $0x80] sm:$0xff]
    %v3005 = vld [vmem:[#allocation7 + $0x88] sm:$0xff]
    %v3006 = vld [vmem:[#allocation7 + $0x90] sm:$0xff]
    %v3007 = vld [vmem:[#allocation7 + $0x98] sm:$0xff]
    %v3008 = vld [vmem:[#allocation7 + $0xa0] sm:$0xff]
    %v3009 = vld [vmem:[#allocation7 + $0xa8] sm:$0xff]
    %v3010 = vld [vmem:[#allocation7 + $0xb0] sm:$0xff]
    %v3011 = vld [vmem:[#allocation7 + $0xb8] sm:$0xff]
    %v3012 = vld [vmem:[#allocation7 + $0xc0] sm:$0xff]
    %v3013 = vld [vmem:[#allocation7 + $0xc8] sm:$0xff]
    %v3014 = vld [vmem:[#allocation7 + $0xd0] sm:$0xff]
    %v3015 = vld [vmem:[#allocation7 + $0xd8] sm:$0xff]
    %v3016 = vld [vmem:[#allocation7 + $0xe0] sm:$0xff]
    %v3017 = vld [vmem:[#allocation7 + $0xe8] sm:$0xff]
    %v3018 = vld [vmem:[#allocation7 + $0xf0] sm:$0xff]
    %v3019 = vld [vmem:[#allocation7 + $0xf8] sm:$0xff]
    %v3020 = vld [vmem:[#allocation7 + $0x100] sm:$0xff]
    %v3021 = vld [vmem:[#allocation7 + $0x108] sm:$0xff]
    %v3022 = vld [vmem:[#allocation7 + $0x110] sm:$0xff]
    %v3023 = vld [vmem:[#allocation7 + $0x118] sm:$0xff]
    %v3024 = vld [vmem:[#allocation7 + $0x120] sm:$0xff]
    %v3025 = vld [vmem:[#allocation7 + $0x128] sm:$0xff]
    %v3026 = vld [vmem:[#allocation7 + $0x130] sm:$0xff]
    %v3027 = vld [vmem:[#allocation7 + $0x138] sm:$0xff]
    %v3028 = vld [vmem:[#allocation7 + $0x140] sm:$0xff]
    %v3029 = vld [vmem:[#allocation7 + $0x148] sm:$0xff]
    %v3030 = vld [vmem:[#allocation7 + $0x150] sm:$0xff]
    %v3031 = vld [vmem:[#allocation7 + $0x158] sm:$0xff]
    %v3032 = vld [vmem:[#allocation7 + $0x160] sm:$0xff]
    %v3033 = vld [vmem:[#allocation7 + $0x168] sm:$0xff]
    %v3034 = vld [vmem:[#allocation7 + $0x170] sm:$0xff]
    %v3035 = vld [vmem:[#allocation7 + $0x178] sm:$0xff]
    %v3036 = vld [vmem:[#allocation7 + $0x180] sm:$0xff]
    %v3037 = vld [vmem:[#allocation7 + $0x188] sm:$0xff]
    %v3038 = vld [vmem:[#allocation7 + $0x190] sm:$0xff]
    %v3039 = vld [vmem:[#allocation7 + $0x198] sm:$0xff]
    %v3040 = vld [vmem:[#allocation7 + $0x1a0] sm:$0xff]
    %v3041 = vld [vmem:[#allocation7 + $0x1a8] sm:$0xff]
    %v3042 = vld [vmem:[#allocation7 + $0x1b0] sm:$0xff]
    %v3043 = vld [vmem:[#allocation7 + $0x1b8] sm:$0xff]
    %v3044 = vld [vmem:[#allocation7 + $0x1c0] sm:$0xff]
    %v3045 = vld [vmem:[#allocation7 + $0x1c8] sm:$0xff]
    %v3046 = vld [vmem:[#allocation7 + $0x1d0] sm:$0xff]
    %v3047 = vld [vmem:[#allocation7 + $0x1d8] sm:$0xff]
    %v3048 = vld [vmem:[#allocation7 + $0x1e0] sm:$0xff]
    %v3049 = vld [vmem:[#allocation7 + $0x1e8] sm:$0xff]
    %v3050 = vld [vmem:[#allocation7 + $0x1f0] sm:$0xff]
    %v3051 = vld [vmem:[#allocation7 + $0x1f8] sm:$0xff]
    %v3052 = vld [vmem:[#allocation7 + $0x200] sm:$0xff]
    %v3053 = vld [vmem:[#allocation7 + $0x208] sm:$0xff]
    %v3054 = vld [vmem:[#allocation7 + $0x210] sm:$0xff]
    %v3055 = vld [vmem:[#allocation7 + $0x218] sm:$0xff]
    %v3056 = vld [vmem:[#allocation7 + $0x220] sm:$0xff]
    %v3057 = vld [vmem:[#allocation7 + $0x228] sm:$0xff]
    %v3058 = vld [vmem:[#allocation7 + $0x230] sm:$0xff]
    %v3059 = vld [vmem:[#allocation7 + $0x238] sm:$0xff]
    %v3060 = vld [vmem:[#allocation7 + $0x240] sm:$0xff]
    %v3061 = vld [vmem:[#allocation7 + $0x248] sm:$0xff]
    %v3062 = vld [vmem:[#allocation7 + $0x250] sm:$0xff]
    %v3063 = vld [vmem:[#allocation7 + $0x258] sm:$0xff]
    %v3064 = vld [vmem:[#allocation7 + $0x260] sm:$0xff]
    %v3065 = vld [vmem:[#allocation7 + $0x268] sm:$0xff]
    %v3066 = vld [vmem:[#allocation7 + $0x270] sm:$0xff]
    %v3067 = vld [vmem:[#allocation7 + $0x278] sm:$0xff]
    %v3068 = vld [vmem:[#allocation7 + $0x280] sm:$0xff]
    %v3069 = vld [vmem:[#allocation7 + $0x288] sm:$0xff]
    %v3070 = vld [vmem:[#allocation7 + $0x290] sm:$0xff]
    %v3071 = vld [vmem:[#allocation7 + $0x298] sm:$0xff]
    %v3072 = vld [vmem:[#allocation7 + $0x2a0] sm:$0xff]
    %v3073 = vld [vmem:[#allocation7 + $0x2a8] sm:$0xff]
    %v3074 = vld [vmem:[#allocation7 + $0x2b0] sm:$0xff]
    %v3075 = vld [vmem:[#allocation7 + $0x2b8] sm:$0xff]
    %v3076 = vld [vmem:[#allocation7 + $0x2c0] sm:$0xff]
    %v3077 = vld [vmem:[#allocation7 + $0x2c8] sm:$0xff]
    %v3078 = vld [vmem:[#allocation7 + $0x2d0] sm:$0xff]
    %v3079 = vld [vmem:[#allocation7 + $0x2d8] sm:$0xff]
    %v3080 = vld [vmem:[#allocation7 + $0x2e0] sm:$0xff]
    %v3081 = vld [vmem:[#allocation7 + $0x2e8] sm:$0xff]
    %v3082 = vld [vmem:[#allocation7 + $0x2f0] sm:$0xff]
    %v3083 = vld [vmem:[#allocation7 + $0x2f8] sm:$0xff]
    %v3084 = vld [vmem:[#allocation7 + $0x300] sm:$0xff]
    %v3085 = vld [vmem:[#allocation7 + $0x308] sm:$0xff]
    %v3086 = vld [vmem:[#allocation7 + $0x310] sm:$0xff]
    %v3087 = vld [vmem:[#allocation7 + $0x318] sm:$0xff]
    %v3088 = vld [vmem:[#allocation7 + $0x320] sm:$0xff]
    %v3089 = vld [vmem:[#allocation7 + $0x328] sm:$0xff]
    %v3090 = vld [vmem:[#allocation7 + $0x330] sm:$0xff]
    %v3091 = vld [vmem:[#allocation7 + $0x338] sm:$0xff]
    %v3092 = vld [vmem:[#allocation7 + $0x340] sm:$0xff]
    %v3093 = vld [vmem:[#allocation7 + $0x348] sm:$0xff]
    %v3094 = vld [vmem:[#allocation7 + $0x350] sm:$0xff]
    %v3095 = vld [vmem:[#allocation7 + $0x358] sm:$0xff]
    %v3096 = vld [vmem:[#allocation7 + $0x360] sm:$0xff]
    %v3097 = vld [vmem:[#allocation7 + $0x368] sm:$0xff]
    %v3098 = vld [vmem:[#allocation7 + $0x370] sm:$0xff]
    %v3099 = vld [vmem:[#allocation7 + $0x378] sm:$0xff]
    %v3100 = vld [vmem:[#allocation7 + $0x380] sm:$0xff]
    %v3101 = vld [vmem:[#allocation7 + $0x388] sm:$0xff]
    %v3102 = vld [vmem:[#allocation7 + $0x390] sm:$0xff]
    %v3103 = vld [vmem:[#allocation7 + $0x398] sm:$0xff]
    %v3104 = vld [vmem:[#allocation7 + $0x3a0] sm:$0xff]
    %v3105 = vld [vmem:[#allocation7 + $0x3a8] sm:$0xff]
    %v3106 = vld [vmem:[#allocation7 + $0x3b0] sm:$0xff]
    %v3107 = vld [vmem:[#allocation7 + $0x3b8] sm:$0xff]
    %v3108 = vld [vmem:[#allocation7 + $0x3c0] sm:$0xff]
    %v3109 = vld [vmem:[#allocation7 + $0x3c8] sm:$0xff]
    %v3110 = vld [vmem:[#allocation7 + $0x3d0] sm:$0xff]
    %v3111 = vld [vmem:[#allocation7 + $0x3d8] sm:$0xff]
    %v3112 = vld [vmem:[#allocation7 + $0x3e0] sm:$0xff]
    %v3113 = vld [vmem:[#allocation7 + $0x3e8] sm:$0xff]
    %v3114 = vld [vmem:[#allocation7 + $0x3f0] sm:$0xff]
    %v3115 = vld [vmem:[#allocation7 + $0x3f8] sm:$0xff]
    %v3116 = vld [vmem:[#allocation8] sm:$0x3]
    %v3118 = vlaneseq
    %v3119 = vshrl.u32 %v3118, 7
    %v3120 = vsub.s32 0, %v3119
    %v3121 = vrot.slane %v3116, %v3120
    %v3122 = vlaneseq
    %v3123 = vshrl.u32 %v3122, 7
    %v3124 = vsub.s32 1, %v3123
    %v3125 = vrot.slane %v3116, %v3124
    %v3256 = vunpack.c.l.b16 %v2988
    %v3257 = vunpack.c.h.b16 %v2988
    %v3258 = vunpack.c.l.b16 %v2989
    %v3259 = vunpack.c.h.b16 %v2989
    %v3260 = vunpack.c.l.b16 %v2990
    %v3261 = vunpack.c.h.b16 %v2990
    %v3262 = vunpack.c.l.b16 %v2991
    %v3263 = vunpack.c.h.b16 %v2991
    %v3264 = vunpack.c.l.b16 %v2992
    %v3265 = vunpack.c.h.b16 %v2992
    %v3266 = vunpack.c.l.b16 %v2993
    %v3267 = vunpack.c.h.b16 %v2993
    %v3268 = vunpack.c.l.b16 %v2994
    %v3269 = vunpack.c.h.b16 %v2994
    %v3270 = vunpack.c.l.b16 %v2995
    %v3271 = vunpack.c.h.b16 %v2995
    %v3272 = vunpack.c.l.b16 %v2996
    %v3273 = vunpack.c.h.b16 %v2996
    %v3274 = vunpack.c.l.b16 %v2997
    %v3275 = vunpack.c.h.b16 %v2997
    %v3276 = vunpack.c.l.b16 %v2998
    %v3277 = vunpack.c.h.b16 %v2998
    %v3278 = vunpack.c.l.b16 %v2999
    %v3279 = vunpack.c.h.b16 %v2999
    %v3280 = vunpack.c.l.b16 %v3000
    %v3281 = vunpack.c.h.b16 %v3000
    %v3282 = vunpack.c.l.b16 %v3001
    %v3283 = vunpack.c.h.b16 %v3001
    %v3284 = vunpack.c.l.b16 %v3002
    %v3285 = vunpack.c.h.b16 %v3002
    %v3286 = vunpack.c.l.b16 %v3003
    %v3287 = vunpack.c.h.b16 %v3003
    %v3288 = vunpack.c.l.b16 %v3004
    %v3289 = vunpack.c.h.b16 %v3004
    %v3290 = vunpack.c.l.b16 %v3005
    %v3291 = vunpack.c.h.b16 %v3005
    %v3292 = vunpack.c.l.b16 %v3006
    %v3293 = vunpack.c.h.b16 %v3006
    %v3294 = vunpack.c.l.b16 %v3007
    %v3295 = vunpack.c.h.b16 %v3007
    %v3296 = vunpack.c.l.b16 %v3008
    %v3297 = vunpack.c.h.b16 %v3008
    %v3298 = vunpack.c.l.b16 %v3009
    %v3299 = vunpack.c.h.b16 %v3009
    %v3300 = vunpack.c.l.b16 %v3010
    %v3301 = vunpack.c.h.b16 %v3010
    %v3302 = vunpack.c.l.b16 %v3011
    %v3303 = vunpack.c.h.b16 %v3011
    %v3304 = vunpack.c.l.b16 %v3012
    %v3305 = vunpack.c.h.b16 %v3012
    %v3306 = vunpack.c.l.b16 %v3013
    %v3307 = vunpack.c.h.b16 %v3013
    %v3308 = vunpack.c.l.b16 %v3014
    %v3309 = vunpack.c.h.b16 %v3014
    %v3310 = vunpack.c.l.b16 %v3015
    %v3311 = vunpack.c.h.b16 %v3015
    %v3312 = vunpack.c.l.b16 %v3016
    %v3313 = vunpack.c.h.b16 %v3016
    %v3314 = vunpack.c.l.b16 %v3017
    %v3315 = vunpack.c.h.b16 %v3017
    %v3316 = vunpack.c.l.b16 %v3018
    %v3317 = vunpack.c.h.b16 %v3018
    %v3318 = vunpack.c.l.b16 %v3019
    %v3319 = vunpack.c.h.b16 %v3019
    %v3320 = vunpack.c.l.b16 %v3020
    %v3321 = vunpack.c.h.b16 %v3020
    %v3322 = vunpack.c.l.b16 %v3021
    %v3323 = vunpack.c.h.b16 %v3021
    %v3324 = vunpack.c.l.b16 %v3022
    %v3325 = vunpack.c.h.b16 %v3022
    %v3326 = vunpack.c.l.b16 %v3023
    %v3327 = vunpack.c.h.b16 %v3023
    %v3328 = vunpack.c.l.b16 %v3024
    %v3329 = vunpack.c.h.b16 %v3024
    %v3330 = vunpack.c.l.b16 %v3025
    %v3331 = vunpack.c.h.b16 %v3025
    %v3332 = vunpack.c.l.b16 %v3026
    %v3333 = vunpack.c.h.b16 %v3026
    %v3334 = vunpack.c.l.b16 %v3027
    %v3335 = vunpack.c.h.b16 %v3027
    %v3336 = vunpack.c.l.b16 %v3028
    %v3337 = vunpack.c.h.b16 %v3028
    %v3338 = vunpack.c.l.b16 %v3029
    %v3339 = vunpack.c.h.b16 %v3029
    %v3340 = vunpack.c.l.b16 %v3030
    %v3341 = vunpack.c.h.b16 %v3030
    %v3342 = vunpack.c.l.b16 %v3031
    %v3343 = vunpack.c.h.b16 %v3031
    %v3344 = vunpack.c.l.b16 %v3032
    %v3345 = vunpack.c.h.b16 %v3032
    %v3346 = vunpack.c.l.b16 %v3033
    %v3347 = vunpack.c.h.b16 %v3033
    %v3348 = vunpack.c.l.b16 %v3034
    %v3349 = vunpack.c.h.b16 %v3034
    %v3350 = vunpack.c.l.b16 %v3035
    %v3351 = vunpack.c.h.b16 %v3035
    %v3352 = vunpack.c.l.b16 %v3036
    %v3353 = vunpack.c.h.b16 %v3036
    %v3354 = vunpack.c.l.b16 %v3037
    %v3355 = vunpack.c.h.b16 %v3037
    %v3356 = vunpack.c.l.b16 %v3038
    %v3357 = vunpack.c.h.b16 %v3038
    %v3358 = vunpack.c.l.b16 %v3039
    %v3359 = vunpack.c.h.b16 %v3039
    %v3360 = vunpack.c.l.b16 %v3040
    %v3361 = vunpack.c.h.b16 %v3040
    %v3362 = vunpack.c.l.b16 %v3041
    %v3363 = vunpack.c.h.b16 %v3041
    %v3364 = vunpack.c.l.b16 %v3042
    %v3365 = vunpack.c.h.b16 %v3042
    %v3366 = vunpack.c.l.b16 %v3043
    %v3367 = vunpack.c.h.b16 %v3043
    %v3368 = vunpack.c.l.b16 %v3044
    %v3369 = vunpack.c.h.b16 %v3044
    %v3370 = vunpack.c.l.b16 %v3045
    %v3371 = vunpack.c.h.b16 %v3045
    %v3372 = vunpack.c.l.b16 %v3046
    %v3373 = vunpack.c.h.b16 %v3046
    %v3374 = vunpack.c.l.b16 %v3047
    %v3375 = vunpack.c.h.b16 %v3047
    %v3376 = vunpack.c.l.b16 %v3048
    %v3377 = vunpack.c.h.b16 %v3048
    %v3378 = vunpack.c.l.b16 %v3049
    %v3379 = vunpack.c.h.b16 %v3049
    %v3380 = vunpack.c.l.b16 %v3050
    %v3381 = vunpack.c.h.b16 %v3050
    %v3382 = vunpack.c.l.b16 %v3051
    %v3383 = vunpack.c.h.b16 %v3051
    %v3384 = vunpack.c.l.b16 %v3052
    %v3385 = vunpack.c.h.b16 %v3052
    %v3386 = vunpack.c.l.b16 %v3053
    %v3387 = vunpack.c.h.b16 %v3053
    %v3388 = vunpack.c.l.b16 %v3054
    %v3389 = vunpack.c.h.b16 %v3054
    %v3390 = vunpack.c.l.b16 %v3055
    %v3391 = vunpack.c.h.b16 %v3055
    %v3392 = vunpack.c.l.b16 %v3056
    %v3393 = vunpack.c.h.b16 %v3056
    %v3394 = vunpack.c.l.b16 %v3057
    %v3395 = vunpack.c.h.b16 %v3057
    %v3396 = vunpack.c.l.b16 %v3058
    %v3397 = vunpack.c.h.b16 %v3058
    %v3398 = vunpack.c.l.b16 %v3059
    %v3399 = vunpack.c.h.b16 %v3059
    %v3400 = vunpack.c.l.b16 %v3060
    %v3401 = vunpack.c.h.b16 %v3060
    %v3402 = vunpack.c.l.b16 %v3061
    %v3403 = vunpack.c.h.b16 %v3061
    %v3404 = vunpack.c.l.b16 %v3062
    %v3405 = vunpack.c.h.b16 %v3062
    %v3406 = vunpack.c.l.b16 %v3063
    %v3407 = vunpack.c.h.b16 %v3063
    %v3408 = vunpack.c.l.b16 %v3064
    %v3409 = vunpack.c.h.b16 %v3064
    %v3410 = vunpack.c.l.b16 %v3065
    %v3411 = vunpack.c.h.b16 %v3065
    %v3412 = vunpack.c.l.b16 %v3066
    %v3413 = vunpack.c.h.b16 %v3066
    %v3414 = vunpack.c.l.b16 %v3067
    %v3415 = vunpack.c.h.b16 %v3067
    %v3416 = vunpack.c.l.b16 %v3068
    %v3417 = vunpack.c.h.b16 %v3068
    %v3418 = vunpack.c.l.b16 %v3069
    %v3419 = vunpack.c.h.b16 %v3069
    %v3420 = vunpack.c.l.b16 %v3070
    %v3421 = vunpack.c.h.b16 %v3070
    %v3422 = vunpack.c.l.b16 %v3071
    %v3423 = vunpack.c.h.b16 %v3071
    %v3424 = vunpack.c.l.b16 %v3072
    %v3425 = vunpack.c.h.b16 %v3072
    %v3426 = vunpack.c.l.b16 %v3073
    %v3427 = vunpack.c.h.b16 %v3073
    %v3428 = vunpack.c.l.b16 %v3074
    %v3429 = vunpack.c.h.b16 %v3074
    %v3430 = vunpack.c.l.b16 %v3075
    %v3431 = vunpack.c.h.b16 %v3075
    %v3432 = vunpack.c.l.b16 %v3076
    %v3433 = vunpack.c.h.b16 %v3076
    %v3434 = vunpack.c.l.b16 %v3077
    %v3435 = vunpack.c.h.b16 %v3077
    %v3436 = vunpack.c.l.b16 %v3078
    %v3437 = vunpack.c.h.b16 %v3078
    %v3438 = vunpack.c.l.b16 %v3079
    %v3439 = vunpack.c.h.b16 %v3079
    %v3440 = vunpack.c.l.b16 %v3080
    %v3441 = vunpack.c.h.b16 %v3080
    %v3442 = vunpack.c.l.b16 %v3081
    %v3443 = vunpack.c.h.b16 %v3081
    %v3444 = vunpack.c.l.b16 %v3082
    %v3445 = vunpack.c.h.b16 %v3082
    %v3446 = vunpack.c.l.b16 %v3083
    %v3447 = vunpack.c.h.b16 %v3083
    %v3448 = vunpack.c.l.b16 %v3084
    %v3449 = vunpack.c.h.b16 %v3084
    %v3450 = vunpack.c.l.b16 %v3085
    %v3451 = vunpack.c.h.b16 %v3085
    %v3452 = vunpack.c.l.b16 %v3086
    %v3453 = vunpack.c.h.b16 %v3086
    %v3454 = vunpack.c.l.b16 %v3087
    %v3455 = vunpack.c.h.b16 %v3087
    %v3456 = vunpack.c.l.b16 %v3088
    %v3457 = vunpack.c.h.b16 %v3088
    %v3458 = vunpack.c.l.b16 %v3089
    %v3459 = vunpack.c.h.b16 %v3089
    %v3460 = vunpack.c.l.b16 %v3090
    %v3461 = vunpack.c.h.b16 %v3090
    %v3462 = vunpack.c.l.b16 %v3091
    %v3463 = vunpack.c.h.b16 %v3091
    %v3464 = vunpack.c.l.b16 %v3092
    %v3465 = vunpack.c.h.b16 %v3092
    %v3466 = vunpack.c.l.b16 %v3093
    %v3467 = vunpack.c.h.b16 %v3093
    %v3468 = vunpack.c.l.b16 %v3094
    %v3469 = vunpack.c.h.b16 %v3094
    %v3470 = vunpack.c.l.b16 %v3095
    %v3471 = vunpack.c.h.b16 %v3095
    %v3472 = vunpack.c.l.b16 %v3096
    %v3473 = vunpack.c.h.b16 %v3096
    %v3474 = vunpack.c.l.b16 %v3097
    %v3475 = vunpack.c.h.b16 %v3097
    %v3476 = vunpack.c.l.b16 %v3098
    %v3477 = vunpack.c.h.b16 %v3098
    %v3478 = vunpack.c.l.b16 %v3099
    %v3479 = vunpack.c.h.b16 %v3099
    %v3480 = vunpack.c.l.b16 %v3100
    %v3481 = vunpack.c.h.b16 %v3100
    %v3482 = vunpack.c.l.b16 %v3101
    %v3483 = vunpack.c.h.b16 %v3101
    %v3484 = vunpack.c.l.b16 %v3102
    %v3485 = vunpack.c.h.b16 %v3102
    %v3486 = vunpack.c.l.b16 %v3103
    %v3487 = vunpack.c.h.b16 %v3103
    %v3488 = vunpack.c.l.b16 %v3104
    %v3489 = vunpack.c.h.b16 %v3104
    %v3490 = vunpack.c.l.b16 %v3105
    %v3491 = vunpack.c.h.b16 %v3105
    %v3492 = vunpack.c.l.b16 %v3106
    %v3493 = vunpack.c.h.b16 %v3106
    %v3494 = vunpack.c.l.b16 %v3107
    %v3495 = vunpack.c.h.b16 %v3107
    %v3496 = vunpack.c.l.b16 %v3108
    %v3497 = vunpack.c.h.b16 %v3108
    %v3498 = vunpack.c.l.b16 %v3109
    %v3499 = vunpack.c.h.b16 %v3109
    %v3500 = vunpack.c.l.b16 %v3110
    %v3501 = vunpack.c.h.b16 %v3110
    %v3502 = vunpack.c.l.b16 %v3111
    %v3503 = vunpack.c.h.b16 %v3111
    %v3504 = vunpack.c.l.b16 %v3112
    %v3505 = vunpack.c.h.b16 %v3112
    %v3506 = vunpack.c.l.b16 %v3113
    %v3507 = vunpack.c.h.b16 %v3113
    %v3508 = vunpack.c.l.b16 %v3114
    %v3509 = vunpack.c.h.b16 %v3114
    %v3510 = vunpack.c.l.b16 %v3115
    %v3511 = vunpack.c.h.b16 %v3115
    %v3512 = vpack.c.b16 %v3258, %v3256
    %v3513 = vpack.c.b16 %v3259, %v3257
    %v3514 = vpack.c.b16 %v3262, %v3260
    %v3515 = vpack.c.b16 %v3263, %v3261
    %v3516 = vpack.c.b16 %v3266, %v3264
    %v3517 = vpack.c.b16 %v3267, %v3265
    %v3518 = vpack.c.b16 %v3270, %v3268
    %v3519 = vpack.c.b16 %v3271, %v3269
    %v3520 = vpack.c.b16 %v3274, %v3272
    %v3521 = vpack.c.b16 %v3275, %v3273
    %v3522 = vpack.c.b16 %v3278, %v3276
    %v3523 = vpack.c.b16 %v3279, %v3277
    %v3524 = vpack.c.b16 %v3282, %v3280
    %v3525 = vpack.c.b16 %v3283, %v3281
    %v3526 = vpack.c.b16 %v3286, %v3284
    %v3527 = vpack.c.b16 %v3287, %v3285
    %v3528 = vpack.c.b16 %v3290, %v3288
    %v3529 = vpack.c.b16 %v3291, %v3289
    %v3530 = vpack.c.b16 %v3294, %v3292
    %v3531 = vpack.c.b16 %v3295, %v3293
    %v3532 = vpack.c.b16 %v3298, %v3296
    %v3533 = vpack.c.b16 %v3299, %v3297
    %v3534 = vpack.c.b16 %v3302, %v3300
    %v3535 = vpack.c.b16 %v3303, %v3301
    %v3536 = vpack.c.b16 %v3306, %v3304
    %v3537 = vpack.c.b16 %v3307, %v3305
    %v3538 = vpack.c.b16 %v3310, %v3308
    %v3539 = vpack.c.b16 %v3311, %v3309
    %v3540 = vpack.c.b16 %v3314, %v3312
    %v3541 = vpack.c.b16 %v3315, %v3313
    %v3542 = vpack.c.b16 %v3318, %v3316
    %v3543 = vpack.c.b16 %v3319, %v3317
    %v3544 = vpack.c.b16 %v3322, %v3320
    %v3545 = vpack.c.b16 %v3323, %v3321
    %v3546 = vpack.c.b16 %v3326, %v3324
    %v3547 = vpack.c.b16 %v3327, %v3325
    %v3548 = vpack.c.b16 %v3330, %v3328
    %v3549 = vpack.c.b16 %v3331, %v3329
    %v3550 = vpack.c.b16 %v3334, %v3332
    %v3551 = vpack.c.b16 %v3335, %v3333
    %v3552 = vpack.c.b16 %v3338, %v3336
    %v3553 = vpack.c.b16 %v3339, %v3337
    %v3554 = vpack.c.b16 %v3342, %v3340
    %v3555 = vpack.c.b16 %v3343, %v3341
    %v3556 = vpack.c.b16 %v3346, %v3344
    %v3557 = vpack.c.b16 %v3347, %v3345
    %v3558 = vpack.c.b16 %v3350, %v3348
    %v3559 = vpack.c.b16 %v3351, %v3349
    %v3560 = vpack.c.b16 %v3354, %v3352
    %v3561 = vpack.c.b16 %v3355, %v3353
    %v3562 = vpack.c.b16 %v3358, %v3356
    %v3563 = vpack.c.b16 %v3359, %v3357
    %v3564 = vpack.c.b16 %v3362, %v3360
    %v3565 = vpack.c.b16 %v3363, %v3361
    %v3566 = vpack.c.b16 %v3366, %v3364
    %v3567 = vpack.c.b16 %v3367, %v3365
    %v3568 = vpack.c.b16 %v3370, %v3368
    %v3569 = vpack.c.b16 %v3371, %v3369
    %v3570 = vpack.c.b16 %v3374, %v3372
    %v3571 = vpack.c.b16 %v3375, %v3373
    %v3572 = vpack.c.b16 %v3378, %v3376
    %v3573 = vpack.c.b16 %v3379, %v3377
    %v3574 = vpack.c.b16 %v3382, %v3380
    %v3575 = vpack.c.b16 %v3383, %v3381
    %v3576 = vpack.c.b16 %v3386, %v3384
    %v3577 = vpack.c.b16 %v3387, %v3385
    %v3578 = vpack.c.b16 %v3390, %v3388
    %v3579 = vpack.c.b16 %v3391, %v3389
    %v3580 = vpack.c.b16 %v3394, %v3392
    %v3581 = vpack.c.b16 %v3395, %v3393
    %v3582 = vpack.c.b16 %v3398, %v3396
    %v3583 = vpack.c.b16 %v3399, %v3397
    %v3584 = vpack.c.b16 %v3402, %v3400
    %v3585 = vpack.c.b16 %v3403, %v3401
    %v3586 = vpack.c.b16 %v3406, %v3404
    %v3587 = vpack.c.b16 %v3407, %v3405
    %v3588 = vpack.c.b16 %v3410, %v3408
    %v3589 = vpack.c.b16 %v3411, %v3409
    %v3590 = vpack.c.b16 %v3414, %v3412
    %v3591 = vpack.c.b16 %v3415, %v3413
    %v3592 = vpack.c.b16 %v3418, %v3416
    %v3593 = vpack.c.b16 %v3419, %v3417
    %v3594 = vpack.c.b16 %v3422, %v3420
    %v3595 = vpack.c.b16 %v3423, %v3421
    %v3596 = vpack.c.b16 %v3426, %v3424
    %v3597 = vpack.c.b16 %v3427, %v3425
    %v3598 = vpack.c.b16 %v3430, %v3428
    %v3599 = vpack.c.b16 %v3431, %v3429
    %v3600 = vpack.c.b16 %v3434, %v3432
    %v3601 = vpack.c.b16 %v3435, %v3433
    %v3602 = vpack.c.b16 %v3438, %v3436
    %v3603 = vpack.c.b16 %v3439, %v3437
    %v3604 = vpack.c.b16 %v3442, %v3440
    %v3605 = vpack.c.b16 %v3443, %v3441
    %v3606 = vpack.c.b16 %v3446, %v3444
    %v3607 = vpack.c.b16 %v3447, %v3445
    %v3608 = vpack.c.b16 %v3450, %v3448
    %v3609 = vpack.c.b16 %v3451, %v3449
    %v3610 = vpack.c.b16 %v3454, %v3452
    %v3611 = vpack.c.b16 %v3455, %v3453
    %v3612 = vpack.c.b16 %v3458, %v3456
    %v3613 = vpack.c.b16 %v3459, %v3457
    %v3614 = vpack.c.b16 %v3462, %v3460
    %v3615 = vpack.c.b16 %v3463, %v3461
    %v3616 = vpack.c.b16 %v3466, %v3464
    %v3617 = vpack.c.b16 %v3467, %v3465
    %v3618 = vpack.c.b16 %v3470, %v3468
    %v3619 = vpack.c.b16 %v3471, %v3469
    %v3620 = vpack.c.b16 %v3474, %v3472
    %v3621 = vpack.c.b16 %v3475, %v3473
    %v3622 = vpack.c.b16 %v3478, %v3476
    %v3623 = vpack.c.b16 %v3479, %v3477
    %v3624 = vpack.c.b16 %v3482, %v3480
    %v3625 = vpack.c.b16 %v3483, %v3481
    %v3626 = vpack.c.b16 %v3486, %v3484
    %v3627 = vpack.c.b16 %v3487, %v3485
    %v3628 = vpack.c.b16 %v3490, %v3488
    %v3629 = vpack.c.b16 %v3491, %v3489
    %v3630 = vpack.c.b16 %v3494, %v3492
    %v3631 = vpack.c.b16 %v3495, %v3493
    %v3632 = vpack.c.b16 %v3498, %v3496
    %v3633 = vpack.c.b16 %v3499, %v3497
    %v3634 = vpack.c.b16 %v3502, %v3500
    %v3635 = vpack.c.b16 %v3503, %v3501
    %v3636 = vpack.c.b16 %v3506, %v3504
    %v3637 = vpack.c.b16 %v3507, %v3505
    %v3638 = vpack.c.b16 %v3510, %v3508
    %v3639 = vpack.c.b16 %v3511, %v3509
    %3768 = vmatprep.subr.bf16.mxu0 %v3513
    %3769 = vmatpush1.bf16.msra.mxu0 %v3512
    %3770 = vmatprep.subr.bf16.mxu0 %v3515
    %3771 = vmatpush1.bf16.msra.mxu0 %v3514
    %3772 = vmatprep.subr.bf16.mxu0 %v3517
    %3773 = vmatpush1.bf16.msra.mxu0 %v3516
    %3774 = vmatprep.subr.bf16.mxu0 %v3519
    %3775 = vmatpush1.bf16.msra.mxu0 %v3518
    %3776 = vmatprep.subr.bf16.mxu0 %v3521
    %3777 = vmatpush1.bf16.msra.mxu0 %v3520
    %3778 = vmatprep.subr.bf16.mxu0 %v3523
    %3779 = vmatpush1.bf16.msra.mxu0 %v3522
    %3780 = vmatprep.subr.bf16.mxu0 %v3525
    %3781 = vmatpush1.bf16.msra.mxu0 %v3524
    %3782 = vmatprep.subr.bf16.mxu0 %v3527
    %3783 = vmatpush1.bf16.msra.mxu0 %v3526
    %3784 = vmatprep.subr.bf16.mxu0 %v3529
    %3785 = vmatpush1.bf16.msra.mxu0 %v3528
    %3786 = vmatprep.subr.bf16.mxu0 %v3531
    %3787 = vmatpush1.bf16.msra.mxu0 %v3530
    %3788 = vmatprep.subr.bf16.mxu0 %v3533
    %3789 = vmatpush1.bf16.msra.mxu0 %v3532
    %3790 = vmatprep.subr.bf16.mxu0 %v3535
    %3791 = vmatpush1.bf16.msra.mxu0 %v3534
    %3792 = vmatprep.subr.bf16.mxu0 %v3537
    %3793 = vmatpush1.bf16.msra.mxu0 %v3536
    %3794 = vmatprep.subr.bf16.mxu0 %v3539
    %3795 = vmatpush1.bf16.msra.mxu0 %v3538
    %3796 = vmatprep.subr.bf16.mxu0 %v3541
    %3797 = vmatpush1.bf16.msra.mxu0 %v3540
    %3798 = vmatprep.subr.bf16.mxu0 %v3543
    %3799 = vmatpush1.bf16.msra.mxu0 %v3542
    %3800 = vmatprep.mubr.bf16.mxu0 %v2981
    %3801 = vmatmul.mubr.bf16.gmra.mrb[0].mxu0 %v2980
    %v3802 = vpop.f32.mrb[0].mxu0
    %v3803 = vadd.f32 %v3121, %v3802
    %v3804 = vpop.f32.mrb[0].mxu0
    %v3805 = vadd.f32 %v3125, %v3804
    %v3806 = vpop.f32.mrb[0].mxu0
    %v3807 = vpop.f32.mrb[0].mxu0
    %3808 = vdwg.mxu0
    %3809 = vmatprep.subr.bf16.mxu0 %v3545
    %3810 = vmatpush1.bf16.msra.mxu0 %v3544
    %3811 = vmatprep.subr.bf16.mxu0 %v3547
    %3812 = vmatpush1.bf16.msra.mxu0 %v3546
    %3813 = vmatprep.subr.bf16.mxu0 %v3549
    %3814 = vmatpush1.bf16.msra.mxu0 %v3548
    %3815 = vmatprep.subr.bf16.mxu0 %v3551
    %3816 = vmatpush1.bf16.msra.mxu0 %v3550
    %3817 = vmatprep.subr.bf16.mxu0 %v3553
    %3818 = vmatpush1.bf16.msra.mxu0 %v3552
    %3819 = vmatprep.subr.bf16.mxu0 %v3555
    %3820 = vmatpush1.bf16.msra.mxu0 %v3554
    %3821 = vmatprep.subr.bf16.mxu0 %v3557
    %3822 = vmatpush1.bf16.msra.mxu0 %v3556
    %3823 = vmatprep.subr.bf16.mxu0 %v3559
    %3824 = vmatpush1.bf16.msra.mxu0 %v3558
    %3825 = vmatprep.subr.bf16.mxu0 %v3561
    %3826 = vmatpush1.bf16.msra.mxu0 %v3560
    %3827 = vmatprep.subr.bf16.mxu0 %v3563
    %3828 = vmatpush1.bf16.msra.mxu0 %v3562
    %3829 = vmatprep.subr.bf16.mxu0 %v3565
    %3830 = vmatpush1.bf16.msra.mxu0 %v3564
    %3831 = vmatprep.subr.bf16.mxu0 %v3567
    %3832 = vmatpush1.bf16.msra.mxu0 %v3566
    %3833 = vmatprep.subr.bf16.mxu0 %v3569
    %3834 = vmatpush1.bf16.msra.mxu0 %v3568
    %3835 = vmatprep.subr.bf16.mxu0 %v3571
    %3836 = vmatpush1.bf16.msra.mxu0 %v3570
    %3837 = vmatprep.subr.bf16.mxu0 %v3573
    %3838 = vmatpush1.bf16.msra.mxu0 %v3572
    %3839 = vmatprep.subr.bf16.mxu0 %v3575
    %3840 = vmatpush1.bf16.msra.mxu0 %v3574
    %3841 = vmatprep.mubr.bf16.mxu0 %v2983
    %3842 = vmatmul.mubr.bf16.gmra.mrb[0].mxu0 %v2982
    %v3843 = vpop.f32.mrb[0].mxu0
    %v3844 = vadd.f32 %v3803, %v3843
    %v3845 = vpop.f32.mrb[0].mxu0
    %v3846 = vadd.f32 %v3805, %v3845
    %v3847 = vpop.f32.mrb[0].mxu0
    %v3848 = vpop.f32.mrb[0].mxu0
    %3849 = vdwg.mxu0
    %3850 = vmatprep.subr.bf16.mxu0 %v3577
    %3851 = vmatpush1.bf16.msra.mxu0 %v3576
    %3852 = vmatprep.subr.bf16.mxu0 %v3579
    %3853 = vmatpush1.bf16.msra.mxu0 %v3578
    %3854 = vmatprep.subr.bf16.mxu0 %v3581
    %3855 = vmatpush1.bf16.msra.mxu0 %v3580
    %3856 = vmatprep.subr.bf16.mxu0 %v3583
    %3857 = vmatpush1.bf16.msra.mxu0 %v3582
    %3858 = vmatprep.subr.bf16.mxu0 %v3585
    %3859 = vmatpush1.bf16.msra.mxu0 %v3584
    %3860 = vmatprep.subr.bf16.mxu0 %v3587
    %3861 = vmatpush1.bf16.msra.mxu0 %v3586
    %3862 = vmatprep.subr.bf16.mxu0 %v3589
    %3863 = vmatpush1.bf16.msra.mxu0 %v3588
    %3864 = vmatprep.subr.bf16.mxu0 %v3591
    %3865 = vmatpush1.bf16.msra.mxu0 %v3590
    %3866 = vmatprep.subr.bf16.mxu0 %v3593
    %3867 = vmatpush1.bf16.msra.mxu0 %v3592
    %3868 = vmatprep.subr.bf16.mxu0 %v3595
    %3869 = vmatpush1.bf16.msra.mxu0 %v3594
    %3870 = vmatprep.subr.bf16.mxu0 %v3597
    %3871 = vmatpush1.bf16.msra.mxu0 %v3596
    %3872 = vmatprep.subr.bf16.mxu0 %v3599
    %3873 = vmatpush1.bf16.msra.mxu0 %v3598
    %3874 = vmatprep.subr.bf16.mxu0 %v3601
    %3875 = vmatpush1.bf16.msra.mxu0 %v3600
    %3876 = vmatprep.subr.bf16.mxu0 %v3603
    %3877 = vmatpush1.bf16.msra.mxu0 %v3602
    %3878 = vmatprep.subr.bf16.mxu0 %v3605
    %3879 = vmatpush1.bf16.msra.mxu0 %v3604
    %3880 = vmatprep.subr.bf16.mxu0 %v3607
    %3881 = vmatpush1.bf16.msra.mxu0 %v3606
    %3882 = vmatprep.mubr.bf16.mxu0 %v2985
    %3883 = vmatmul.mubr.bf16.gmra.mrb[0].mxu0 %v2984
    %v3884 = vpop.f32.mrb[0].mxu0
    %v3885 = vadd.f32 %v3844, %v3884
    %v3886 = vpop.f32.mrb[0].mxu0
    %v3887 = vadd.f32 %v3846, %v3886
    %v3888 = vpop.f32.mrb[0].mxu0
    %v3889 = vpop.f32.mrb[0].mxu0
    %3890 = vdwg.mxu0
    %3891 = vmatprep.subr.bf16.mxu0 %v3609
    %3892 = vmatpush1.bf16.msra.mxu0 %v3608
    %3893 = vmatprep.subr.bf16.mxu0 %v3611
    %3894 = vmatpush1.bf16.msra.mxu0 %v3610
    %3895 = vmatprep.subr.bf16.mxu0 %v3613
    %3896 = vmatpush1.bf16.msra.mxu0 %v3612
    %3897 = vmatprep.subr.bf16.mxu0 %v3615
    %3898 = vmatpush1.bf16.msra.mxu0 %v3614
    %3899 = vmatprep.subr.bf16.mxu0 %v3617
    %3900 = vmatpush1.bf16.msra.mxu0 %v3616
    %3901 = vmatprep.subr.bf16.mxu0 %v3619
    %3902 = vmatpush1.bf16.msra.mxu0 %v3618
    %3903 = vmatprep.subr.bf16.mxu0 %v3621
    %3904 = vmatpush1.bf16.msra.mxu0 %v3620
    %3905 = vmatprep.subr.bf16.mxu0 %v3623
    %3906 = vmatpush1.bf16.msra.mxu0 %v3622
    %3907 = vmatprep.subr.bf16.mxu0 %v3625
    %3908 = vmatpush1.bf16.msra.mxu0 %v3624
    %3909 = vmatprep.subr.bf16.mxu0 %v3627
    %3910 = vmatpush1.bf16.msra.mxu0 %v3626
    %3911 = vmatprep.subr.bf16.mxu0 %v3629
    %3912 = vmatpush1.bf16.msra.mxu0 %v3628
    %3913 = vmatprep.subr.bf16.mxu0 %v3631
    %3914 = vmatpush1.bf16.msra.mxu0 %v3630
    %3915 = vmatprep.subr.bf16.mxu0 %v3633
    %3916 = vmatpush1.bf16.msra.mxu0 %v3632
    %3917 = vmatprep.subr.bf16.mxu0 %v3635
    %3918 = vmatpush1.bf16.msra.mxu0 %v3634
    %3919 = vmatprep.subr.bf16.mxu0 %v3637
    %3920 = vmatpush1.bf16.msra.mxu0 %v3636
    %3921 = vmatprep.subr.bf16.mxu0 %v3639
    %3922 = vmatpush1.bf16.msra.mxu0 %v3638
    %3923 = vmatprep.mubr.bf16.mxu0 %v2987
    %3924 = vmatmul.mubr.bf16.gmra.mrb[0].mxu0 %v2986
    %v3925 = vpop.f32.mrb[0].mxu0
    %v3926 = vadd.f32 %v3885, %v3925
    %v3927 = vpop.f32.mrb[0].mxu0
    %v3928 = vadd.f32 %v3887, %v3927
    %v3929 = vpop.f32.mrb[0].mxu0
    %v3930 = vpop.f32.mrb[0].mxu0
    %3931 = vdwg.mxu0
    %vm3932 = vcmp.gt.f32.partialorder %v3926, 0.0
    %vm3933 = vcmp.gt.f32.partialorder %v3928, 0.0
    %v3934 = vmul.f32 %v3926, 0.1
    %v3935 = vmul.f32 %v3928, 0.1
    %v3936 = vsel %vm3932, %v3926, %v3934
    %v3937 = vsel %vm3933, %v3928, %v3935
    %vm3938 = vcmask 1041408
    %v3939 = vsel %vm3938, %v3936, 0.0
    %v3940 = vrot.slane %v3939, 4
    %v3941 = vadd.f32 %v3939, %v3940
    %v3942 = vrot.slane %v3941, 2
    %v3943 = vadd.f32 %v3941, %v3942
    %v3944 = vrot.slane %v3943, 1
    %v3945 = vadd.f32 %v3943, %v3944
    %v3946 = vsel %vm3938, %v3937, 0.0
    %v3947 = vrot.slane %v3946, 4
    %v3948 = vadd.f32 %v3946, %v3947
    %v3949 = vrot.slane %v3948, 2
    %v3950 = vadd.f32 %v3948, %v3949
    %v3951 = vrot.slane %v3950, 1
    %v3952 = vadd.f32 %v3950, %v3951
    %v3953 = vmul.f32 %v3936, %v3936
    %v3954 = vmul.f32 %v3937, %v3937
    %v3955 = vsel %vm3938, %v3953, 0.0
    %v3956 = vrot.slane %v3955, 4
    %v3957 = vadd.f32 %v3955, %v3956
    %v3958 = vrot.slane %v3957, 2
    %v3959 = vadd.f32 %v3957, %v3958
    %v3960 = vrot.slane %v3959, 1
    %v3961 = vadd.f32 %v3959, %v3960
    %v3962 = vsel %vm3938, %v3954, 0.0
    %v3963 = vrot.slane %v3962, 4
    %v3964 = vadd.f32 %v3962, %v3963
    %v3965 = vrot.slane %v3964, 2
    %v3966 = vadd.f32 %v3964, %v3965
    %v3967 = vrot.slane %v3966, 1
    %v3968 = vadd.f32 %v3966, %v3967
    %v3969 = vmul.f32 %v3945, 0.5
    %v3970 = vmul.f32 %v3952, 0.5
    %v3971 = vmul.f32 %v3961, 0.5
    %v3972 = vmul.f32 %v3968, 0.5
    %v3973 = vmul.f32 %v3969, %v3969
    %v3974 = vmul.f32 %v3970, %v3970
    %v3975 = vsub.f32 %v3971, %v3973
    %v3976 = vsub.f32 %v3972, %v3974
    %v3977 = vsub.f32 %v3936, %v3969
    %v3978 = vsub.f32 %v3937, %v3970
    %v3979 = vadd.f32 %v3975, 1e-05
    %v3980 = vadd.f32 %v3976, 1e-05
    %v3981 = vrsqrt.pop %v3979
    %v3982 = vrsqrt.pop %v3980
    %v3983 = vmul.f32 %v3977, %v3981
    %v3984 = vmul.f32 %v3978, %v3982
    %v3985 = vld [vmem:[#allocation10] sm:$0x3]
    %v3987 = vlaneseq
    %v3988 = vshrl.u32 %v3987, 7
    %v3989 = vsub.s32 0, %v3988
    %v3990 = vrot.slane %v3985, %v3989
    %v3991 = vlaneseq
    %v3992 = vshrl.u32 %v3991, 7
    %v3993 = vsub.s32 1, %v3992
    %v3994 = vrot.slane %v3985, %v3993
    %v3997 = vmul.f32 %v3983, %v3990
    %v3998 = vmul.f32 %v3984, %v3994
    %v3999 = vld [vmem:[#allocation11] sm:$0x3]
    %v4001 = vlaneseq
    %v4002 = vshrl.u32 %v4001, 7
    %v4003 = vsub.s32 0, %v4002
    %v4004 = vrot.slane %v3999, %v4003
    %v4005 = vlaneseq
    %v4006 = vshrl.u32 %v4005, 7
    %v4007 = vsub.s32 1, %v4006
    %v4008 = vrot.slane %v3999, %v4007
    %v4011 = vadd.f32 %v3997, %v4004
    %v4012 = vadd.f32 %v3998, %v4008
    %v4013 = vld [vmem:[#allocation13] sm:$0xff]
    %v4014 = vld [vmem:[#allocation13 + $0x8] sm:$0xff]
    %v4015 = vld [vmem:[#allocation13 + $0x10] sm:$0xff]
    %v4016 = vld [vmem:[#allocation13 + $0x18] sm:$0xff]
    %v4017 = vld [vmem:[#allocation13 + $0x20] sm:$0xff]
    %v4018 = vld [vmem:[#allocation13 + $0x28] sm:$0xff]
    %v4019 = vld [vmem:[#allocation13 + $0x30] sm:$0xff]
    %v4020 = vld [vmem:[#allocation13 + $0x38] sm:$0xff]
    %v4021 = vld [vmem:[#allocation13 + $0x40] sm:$0xff]
    %v4022 = vld [vmem:[#allocation13 + $0x48] sm:$0xff]
    %v4023 = vld [vmem:[#allocation13 + $0x50] sm:$0xff]
    %v4024 = vld [vmem:[#allocation13 + $0x58] sm:$0xff]
    %v4025 = vld [vmem:[#allocation13 + $0x60] sm:$0xff]
    %v4026 = vld [vmem:[#allocation13 + $0x68] sm:$0xff]
    %v4027 = vld [vmem:[#allocation13 + $0x70] sm:$0xff]
    %v4028 = vld [vmem:[#allocation13 + $0x78] sm:$0xff]
    %v4029 = vld [vmem:[#allocation13 + $0x80] sm:$0xff]
    %v4030 = vld [vmem:[#allocation13 + $0x88] sm:$0xff]
    %v4031 = vld [vmem:[#allocation13 + $0x90] sm:$0xff]
    %v4032 = vld [vmem:[#allocation13 + $0x98] sm:$0xff]
    %v4033 = vld [vmem:[#allocation13 + $0xa0] sm:$0xff]
    %v4034 = vld [vmem:[#allocation13 + $0xa8] sm:$0xff]
    %v4035 = vld [vmem:[#allocation13 + $0xb0] sm:$0xff]
    %v4036 = vld [vmem:[#allocation13 + $0xb8] sm:$0xff]
    %v4037 = vld [vmem:[#allocation13 + $0xc0] sm:$0xff]
    %v4038 = vld [vmem:[#allocation13 + $0xc8] sm:$0xff]
    %v4039 = vld [vmem:[#allocation13 + $0xd0] sm:$0xff]
    %v4040 = vld [vmem:[#allocation13 + $0xd8] sm:$0xff]
    %v4041 = vld [vmem:[#allocation13 + $0xe0] sm:$0xff]
    %v4042 = vld [vmem:[#allocation13 + $0xe8] sm:$0xff]
    %v4043 = vld [vmem:[#allocation13 + $0xf0] sm:$0xff]
    %v4044 = vld [vmem:[#allocation13 + $0xf8] sm:$0xff]
    %v4045 = vld [vmem:[#allocation14] sm:$0x1]
    %v4047 = vlaneseq
    %v4048 = vshrl.u32 %v4047, 7
    %v4049 = vsub.s32 0, %v4048
    %v4050 = vrot.slane %v4045, %v4049
    %4052 = vmatprep.subr.mxu0 0.0
    %4053 = vmatpush1.msra.mxu0 %v4013
    %4054 = vmatprep.subr.mxu0 0.0
    %4055 = vmatpush1.msra.mxu0 %v4014
    %4056 = vmatprep.subr.mxu0 0.0
    %4057 = vmatpush1.msra.mxu0 %v4015
    %4058 = vmatprep.subr.mxu0 0.0
    %4059 = vmatpush1.msra.mxu0 %v4016
    %4060 = vmatprep.subr.mxu0 0.0
    %4061 = vmatpush1.msra.mxu0 %v4017
    %4062 = vmatprep.subr.mxu0 0.0
    %4063 = vmatpush1.msra.mxu0 %v4018
    %4064 = vmatprep.subr.mxu0 0.0
    %4065 = vmatpush1.msra.mxu0 %v4019
    %4066 = vmatprep.subr.mxu0 0.0
    %4067 = vmatpush1.msra.mxu0 %v4020
    %4068 = vmatprep.subr.mxu0 0.0
    %4069 = vmatpush1.msra.mxu0 %v4021
    %4070 = vmatprep.subr.mxu0 0.0
    %4071 = vmatpush1.msra.mxu0 %v4022
    %4072 = vmatprep.subr.mxu0 0.0
    %4073 = vmatpush1.msra.mxu0 %v4023
    %4074 = vmatprep.subr.mxu0 0.0
    %4075 = vmatpush1.msra.mxu0 %v4024
    %4076 = vmatprep.subr.mxu0 0.0
    %4077 = vmatpush1.msra.mxu0 %v4025
    %4078 = vmatprep.subr.mxu0 0.0
    %4079 = vmatpush1.msra.mxu0 %v4026
    %4080 = vmatprep.subr.mxu0 0.0
    %4081 = vmatpush1.msra.mxu0 %v4027
    %4082 = vmatprep.subr.mxu0 0.0
    %4083 = vmatpush1.msra.mxu0 %v4028
    %4084 = vmatprep.subr.mxu0 0.0
    %4085 = vmatpush1.msra.mxu0 %v4029
    %4086 = vmatprep.subr.mxu0 0.0
    %4087 = vmatpush1.msra.mxu0 %v4030
    %4088 = vmatprep.subr.mxu0 0.0
    %4089 = vmatpush1.msra.mxu0 %v4031
    %4090 = vmatprep.subr.mxu0 0.0
    %4091 = vmatpush1.msra.mxu0 %v4032
    %4092 = vmatprep.subr.mxu0 0.0
    %4093 = vmatpush1.msra.mxu0 %v4033
    %4094 = vmatprep.subr.mxu0 0.0
    %4095 = vmatpush1.msra.mxu0 %v4034
    %4096 = vmatprep.subr.mxu0 0.0
    %4097 = vmatpush1.msra.mxu0 %v4035
    %4098 = vmatprep.subr.mxu0 0.0
    %4099 = vmatpush1.msra.mxu0 %v4036
    %4100 = vmatprep.subr.mxu0 0.0
    %4101 = vmatpush1.msra.mxu0 %v4037
    %4102 = vmatprep.subr.mxu0 0.0
    %4103 = vmatpush1.msra.mxu0 %v4038
    %4104 = vmatprep.subr.mxu0 0.0
    %4105 = vmatpush1.msra.mxu0 %v4039
    %4106 = vmatprep.subr.mxu0 0.0
    %4107 = vmatpush1.msra.mxu0 %v4040
    %4108 = vmatprep.subr.mxu0 0.0
    %4109 = vmatpush1.msra.mxu0 %v4041
    %4110 = vmatprep.subr.mxu0 0.0
    %4111 = vmatpush1.msra.mxu0 %v4042
    %4112 = vmatprep.subr.mxu0 0.0
    %4113 = vmatpush1.msra.mxu0 %v4043
    %4114 = vmatprep.subr.mxu0 0.0
    %4115 = vmatpush1.msra.mxu0 %v4044
    %4116 = vmatprep.mubr.f32.mxu0 %v4012
    %4117 = vmatmul.mubr.f32.gmra.mrb[0].mxu0 %v4011
    %v4118 = vpop.f32.mrb[0].mxu0
    %v4119 = vadd.f32 %v4050, %v4118
    %v4120 = vpop.f32.mrb[0].mxu0
    %4121 = vdwg.mxu0
    %4122 = vst [vmem:[#allocation16] sm:$0x3] %v4119
    // Predicated region
    $region66: #{tpu_custom_call.1} parent=1 // pred_check
      _
    $region67: #{tpu_custom_call.1} parent=1 // pred_check_branch
      %4124 = sbr.rel (0) target = $region69
    $region68: #{tpu_custom_call.1} parent=1 // pred_region
      %s4126 = ssub.s32 32, 32
      %4127 = vsyncadd [#allocation4], %s4126
      %s4129 = sshll.u32 [#allocation16], 4
      %s4130 = int_to_ptr.vmem [resolvable:$true] %s4129
      %4132 = dma.vmem_to_hbm [thread:$0]  %s4130, 32, %s8, [#allocation4]
    $region69: #{tpu_custom_call.1} parent=1 // pred_fallthru
      _
    // Predicated region
    $region70: #{tpu_custom_call.1} parent=1 // pred_check
      _
    $region71: #{tpu_custom_call.1} parent=1 // pred_check_branch
      %4134 = sbr.rel (0) target = $region73
    $region72: #{tpu_custom_call.1} parent=1 // pred_region
      %4135 = dma.done [#allocation4], 32
    $region73: #{tpu_custom_call.1} parent=1 // pred_fallthru
      _
    %4136 = vsyncpa [#allocation3], 1
    %4137 = vsyncpa [#allocation6], 1
    %4138 = vsyncpa [#allocation9], 1
    %4139 = vsyncpa [#allocation12], 1
    %4140 = vsyncpa [#allocation15], 1
    %4141 = vsyncpa [#allocation4], 1

</llo_original>
